<compile_context>
chip_gen: v7x
topology: tpu7x:2x2x1
jax: 0.10.0
libtpu: 0.0.40
codegen_flags: <defaults>
</compile_context>

<pallas_src>
import math
import functools

import jax
import jax.numpy as jnp
from jax.experimental import pallas as pl
from jax.experimental.pallas import tpu as pltpu


# ----------------------------------------------------------------------------
# In-kernel helpers
# ----------------------------------------------------------------------------
def _layernorm(x, w, b, eps=1e-6):
    # x: (T, C); w, b: (1, C).  Matches torch.nn.LayerNorm(eps=1e-6).
    mu = jnp.mean(x, axis=-1, keepdims=True)
    xc = x - mu
    var = jnp.mean(xc * xc, axis=-1, keepdims=True)
    return xc * jax.lax.rsqrt(var + eps) * w + b


# ----------------------------------------------------------------------------
# Fused GPT kernel.  Grid = (L, B): layer outer, batch inner, so per-layer
# weights are fetched once per layer (block index constant over inner b).
# The whole (B, Tp, C) activation stays resident in a VMEM scratch.
# ----------------------------------------------------------------------------
def _gpt_kernel(tok_ref,
                ln1w_ref, ln1b_ref,
                wq_ref, bq_ref, wk_ref, bk_ref, wv_ref, bv_ref,
                wo_ref, bo_ref,
                ln2w_ref, ln2b_ref,
                w1_ref, b1_ref, w2_ref, b2_ref,
                lnfw_ref, lnfb_ref,
                out_ref,
                acc_ref, *, n_head, t_valid):
    l = pl.program_id(0)
    b = pl.program_id(1)
    n_layer = pl.num_programs(0)

    # First layer for this batch element: load tokens (+pos, added in wrapper;
    # embedding dropout = identity in eval).
    @pl.when(l == 0)
    def _():
        acc_ref[b] = tok_ref[b]

    x = acc_ref[b]                                # (Tp, C) f32, VMEM-resident
    Tp, C = x.shape
    hd = C // n_head
    scale = 1.0 / math.sqrt(hd)

    # ---- attention branch: x + proj(attn(ln1(x))) ----
    h = _layernorm(x, ln1w_ref[0], ln1b_ref[0])   # (Tp, C) f32
    hT = h.T.astype(jnp.bfloat16)                 # (C, Tp) bf16 for MXU

    # Projections in the transposed (C, Tp) domain (weights stored in torch
    # (out, in) layout, bf16) so the head split is a sublane-aligned leading
    # reshape rather than a per-head lane slice.
    qT = jnp.dot(wq_ref[0], hT, preferred_element_type=jnp.float32) + bq_ref[0]
    kT = jnp.dot(wk_ref[0], hT, preferred_element_type=jnp.float32) + bk_ref[0]
    vT = jnp.dot(wv_ref[0], hT, preferred_element_type=jnp.float32) + bv_ref[0]

    q3 = qT.reshape(n_head, hd, Tp).astype(jnp.bfloat16)   # (H, hd, Tp)
    k3 = kT.reshape(n_head, hd, Tp).astype(jnp.bfloat16)
    v3 = vT.reshape(n_head, hd, Tp).astype(jnp.bfloat16)

    # Scores for all heads in one batched contraction (no per-head loop).
    # TODO(synk): at production, ensure head_dim >= 128 or merge heads so the
    # MXU contraction dim is not tiny.
    att = jnp.einsum('hdq,hdk->hqk', q3, k3,
                     preferred_element_type=jnp.float32) * scale   # (H, Tp, Tp)
    if t_valid < Tp:
        # Padded key columns must not receive attention mass.
        kmask = jnp.where(
            jax.lax.broadcasted_iota(jnp.int32, (1, Tp), 1) < t_valid,
            0.0, -1e30).reshape(1, 1, Tp)
        att = att + kmask
    att = att - jnp.max(att, axis=-1, keepdims=True)        # stable softmax
    e = jnp.exp(att)
    p = (e * pl.reciprocal(jnp.sum(e, axis=-1, keepdims=True), approx=True)
         ).astype(jnp.bfloat16)
    # attn dropout = identity (eval)

    # y^T for all heads, recombine heads, ONE (C, C) projection.
    yT = jnp.einsum('hdk,hqk->hdq', v3, p,
                    preferred_element_type=jnp.float32
                    ).reshape(C, Tp).astype(jnp.bfloat16)
    oT = jnp.dot(wo_ref[0], yT, preferred_element_type=jnp.float32) + bo_ref[0]
    x = x + oT.T                                  # resid dropout = identity

    # ---- MLP branch: x + fc2(relu(fc1(ln2(x)))) ----
    h2 = _layernorm(x, ln2w_ref[0], ln2b_ref[0]).astype(jnp.bfloat16)
    m = jnp.dot(h2, w1_ref[0], preferred_element_type=jnp.float32) + b1_ref[0]
    m = jnp.maximum(m, 0.0).astype(jnp.bfloat16)
    x = x + jnp.dot(m, w2_ref[0], preferred_element_type=jnp.float32) + b2_ref[0]

    acc_ref[b] = x

    # Last layer: apply ln_f and emit this batch element's output rows.
    @pl.when(l == n_layer - 1)
    def _():
        out_ref[b] = _layernorm(x, lnfw_ref[...], lnfb_ref[...]).astype(out_ref.dtype)


# ----------------------------------------------------------------------------
# pallas_call wrapper
# ----------------------------------------------------------------------------
def gpt_fused(tok, params, *, n_head):
    B, T, C = tok.shape
    L, _, Hm = params["w1"].shape
    Tp = ((T + 127) // 128) * 128                 # lane-dense token axis
    tok_p = jnp.pad(tok, ((0, 0), (0, Tp - T), (0, 0)))

    kernel = functools.partial(_gpt_kernel, n_head=n_head, t_valid=T)

    def layer_spec(shape):        # per-layer stacked weight, indexed by l only
        blk = (1,) + tuple(shape[1:])
        nz = len(shape) - 1
        return pl.BlockSpec(blk, lambda l, b, _nz=nz: (l,) + (0,) * _nz)

    def const_spec(shape):        # constant block across the whole grid
        nd = len(shape)
        return pl.BlockSpec(tuple(shape), lambda l, b, _nd=nd: (0,) * _nd)

    in_specs = [
        const_spec((B, Tp, C)),                                 # tokens (+pos_emb)
        layer_spec((L, 1, C)), layer_spec((L, 1, C)),           # ln1 w, b
        layer_spec((L, C, C)), layer_spec((L, C, 1)),           # query W (out,in), b
        layer_spec((L, C, C)), layer_spec((L, C, 1)),           # key
        layer_spec((L, C, C)), layer_spec((L, C, 1)),           # value
        layer_spec((L, C, C)), layer_spec((L, C, 1)),           # proj
        layer_spec((L, 1, C)), layer_spec((L, 1, C)),           # ln2 w, b
        layer_spec((L, C, Hm)), layer_spec((L, 1, Hm)),         # mlp fc1 (in,out), b
        layer_spec((L, Hm, C)), layer_spec((L, 1, C)),          # mlp fc2 (in,out), b
        const_spec((1, C)), const_spec((1, C)),                 # ln_f w, b
    ]

    # VMEM budget: double-buffered bf16 per-layer weights + resident f32
    # activations (tok in, out, scratch) + largest in-kernel temporaries,
    # with 2x headroom; capped at 64 MiB (v7x physical).
    w_bytes = (4 * C * C + 2 * C * Hm) * 2 * 2
    act_bytes = 4 * B * Tp * C * 4
    tmp_bytes = (n_head * Tp * Tp + 2 * Tp * Hm + 8 * Tp * C) * 4
    vmem_limit = int(min(64 * 1024 * 1024,
                         max(32 * 1024 * 1024,
                             2 * (w_bytes + act_bytes + tmp_bytes))))

    out = pl.pallas_call(
        kernel,
        out_shape=jax.ShapeDtypeStruct((B, Tp, C), tok.dtype),
        grid=(L, B),
        in_specs=in_specs,
        out_specs=const_spec((B, Tp, C)),
        scratch_shapes=[pltpu.VMEM((B, Tp, C), jnp.float32)],
        compiler_params=pltpu.CompilerParams(
            dimension_semantics=("arbitrary", "arbitrary"),
            vmem_limit_bytes=vmem_limit),
    )(tok_p,
      params["ln1_w"], params["ln1_b"],
      params["wq"], params["bq"], params["wk"], params["bk"],
      params["wv"], params["bv"], params["wo"], params["bo"],
      params["ln2_w"], params["ln2_b"],
      params["w1"], params["b1"], params["w2"], params["b2"],
      params["lnf_w"], params["lnf_b"])
    return out[:, :T, :]


# ----------------------------------------------------------------------------
# Parameters (deterministic, matching GPT.__init__ / _init_weights), stacked
# over layers; matmul weights stored in bf16 (f32 accumulation in-kernel).
# ----------------------------------------------------------------------------
def init_params(key, n_embd, n_head, block_exp, n_layer, n_views,
                seq_len, vert_anchors, horz_anchors):
    C = n_embd
    Hm = block_exp * n_embd
    L = n_layer
    T = (n_views + 1) * seq_len * vert_anchors * horz_anchors + 1
    ks = jax.random.split(key, 6)

    def lin(k, shape):
        return (jax.random.normal(k, shape, jnp.float32) * 0.02).astype(jnp.bfloat16)

    return dict(
        pos_emb=jnp.zeros((1, T, C), jnp.float32),     # torch.zeros in __init__
        cls_token=jnp.zeros((1, 1, C), jnp.float32),   # torch.zeros in __init__
        ln1_w=jnp.ones((L, 1, C), jnp.float32), ln1_b=jnp.zeros((L, 1, C), jnp.float32),
        wq=lin(ks[0], (L, C, C)), bq=jnp.zeros((L, C, 1), jnp.float32),
        wk=lin(ks[1], (L, C, C)), bk=jnp.zeros((L, C, 1), jnp.float32),
        wv=lin(ks[2], (L, C, C)), bv=jnp.zeros((L, C, 1), jnp.float32),
        wo=lin(ks[3], (L, C, C)), bo=jnp.zeros((L, C, 1), jnp.float32),
        ln2_w=jnp.ones((L, 1, C), jnp.float32), ln2_b=jnp.zeros((L, 1, C), jnp.float32),
        w1=lin(ks[4], (L, C, Hm)), b1=jnp.zeros((L, 1, Hm), jnp.float32),
        w2=lin(ks[5], (L, Hm, C)), b2=jnp.zeros((L, 1, C), jnp.float32),
        lnf_w=jnp.ones((1, C), jnp.float32), lnf_b=jnp.zeros((1, C), jnp.float32),
    )


# ----------------------------------------------------------------------------
# GPT forward (token assembly + pos_emb add are JAX glue; pos_emb add + all
# Blocks + ln_f semantics preserved — the fused Pallas kernel runs the Blocks
# and ln_f on the pre-added tokens).
# ----------------------------------------------------------------------------
def gpt_forward(cxr, enh, params, *, n_embd, n_head, n_views, seq_len):
    bz = cxr.shape[0]
    h, w = cxr.shape[2], cxr.shape[3]
    image = cxr.reshape(bz, n_views * seq_len, n_embd, h, w)
    lidar = enh.reshape(bz, seq_len, n_embd, h, w)
    tok = jnp.concatenate([image, lidar], axis=1)                # (B, S, C, H, W)
    tok = jnp.transpose(tok, (0, 1, 3, 4, 2)).reshape(bz, -1, n_embd)
    cls = jnp.broadcast_to(params["cls_token"], (bz, 1, n_embd))
    tok = jnp.concatenate([cls, tok], axis=1)                    # (B, T, C)
    tok = tok + params["pos_emb"]          # embedding dropout = identity (eval)
    return gpt_fused(tok, params, n_head=n_head)


if __name__ == "__main__":
    # small config
    n_embd, n_head, block_exp, n_layer = 32, 4, 4, 2
    vert_anchors, horz_anchors, seq_len, n_views = 4, 4, 1, 1
    bz = 2
    h, w = vert_anchors, horz_anchors

    key = jax.random.PRNGKey(0)
    kp, kc, ke = jax.random.split(key, 3)
    params = init_params(kp, n_embd, n_head, block_exp, n_layer,
                         n_views, seq_len, vert_anchors, horz_anchors)

    cxr = jax.random.normal(kc, (bz, n_views * seq_len * n_embd, h, w), jnp.float32)
    enh = jax.random.normal(ke, (bz, seq_len * n_embd, h, w), jnp.float32)

    out = gpt_forward(cxr, enh, params,
                      n_embd=n_embd, n_head=n_head,
                      n_views=n_views, seq_len=seq_len)
    out = jax.block_until_ready(out)

    T_expected = (n_views + 1) * seq_len * vert_anchors * horz_anchors + 1
    assert out.shape == (bz, T_expected, n_embd), out.shape
    assert jnp.all(jnp.isfinite(out))
    print("KERNEL_OK")
</pallas_src>

<mosaic_0001>
module attributes {stable_mosaic.version = 11 : i64} {
  func.func @_gpt_kernel(%arg0: i32, %arg1: i32, %arg2: memref<2x128x32xf32, #tpu.memory_space<vmem>>, %arg3: memref<1x1x32xf32, #tpu.memory_space<vmem>>, %arg4: memref<1x1x32xf32, #tpu.memory_space<vmem>>, %arg5: memref<1x32x32xbf16, #tpu.memory_space<vmem>>, %arg6: memref<1x32x1xf32, #tpu.memory_space<vmem>>, %arg7: memref<1x32x32xbf16, #tpu.memory_space<vmem>>, %arg8: memref<1x32x1xf32, #tpu.memory_space<vmem>>, %arg9: memref<1x32x32xbf16, #tpu.memory_space<vmem>>, %arg10: memref<1x32x1xf32, #tpu.memory_space<vmem>>, %arg11: memref<1x32x32xbf16, #tpu.memory_space<vmem>>, %arg12: memref<1x32x1xf32, #tpu.memory_space<vmem>>, %arg13: memref<1x1x32xf32, #tpu.memory_space<vmem>>, %arg14: memref<1x1x32xf32, #tpu.memory_space<vmem>>, %arg15: memref<1x32x128xbf16, #tpu.memory_space<vmem>>, %arg16: memref<1x1x128xf32, #tpu.memory_space<vmem>>, %arg17: memref<1x128x32xbf16, #tpu.memory_space<vmem>>, %arg18: memref<1x1x32xf32, #tpu.memory_space<vmem>>, %arg19: memref<1x32xf32, #tpu.memory_space<vmem>>, %arg20: memref<1x32xf32, #tpu.memory_space<vmem>>, %arg21: memref<2x128x32xf32, #tpu.memory_space<vmem>>, %arg22: memref<2x128x32xf32, #tpu.memory_space<vmem>>) attributes {dimension_semantics = [#tpu.dimension_semantics<arbitrary>, #tpu.dimension_semantics<arbitrary>], iteration_bounds = array<i64: 2, 2>, scalar_prefetch = 0 : i64, scratch_operands = 1 : i64, tpu.core_type = #tpu.core_type<tc>, window_params = [{pipeline_mode = #tpu.pipeline_mode<synchronous>, transform_indices = @transform_0, window_bounds = array<i64: 2, 128, 32>}, {transform_indices = @transform_1, window_bounds = array<i64: 1, 1, 32>}, {transform_indices = @transform_2, window_bounds = array<i64: 1, 1, 32>}, {transform_indices = @transform_3, window_bounds = array<i64: 1, 32, 32>}, {transform_indices = @transform_4, window_bounds = array<i64: 1, 32, 1>}, {transform_indices = @transform_5, window_bounds = array<i64: 1, 32, 32>}, {transform_indices = @transform_6, window_bounds = array<i64: 1, 32, 1>}, {transform_indices = @transform_7, window_bounds = array<i64: 1, 32, 32>}, {transform_indices = @transform_8, window_bounds = array<i64: 1, 32, 1>}, {transform_indices = @transform_9, window_bounds = array<i64: 1, 32, 32>}, {transform_indices = @transform_10, window_bounds = array<i64: 1, 32, 1>}, {transform_indices = @transform_11, window_bounds = array<i64: 1, 1, 32>}, {transform_indices = @transform_12, window_bounds = array<i64: 1, 1, 32>}, {transform_indices = @transform_13, window_bounds = array<i64: 1, 32, 128>}, {transform_indices = @transform_14, window_bounds = array<i64: 1, 1, 128>}, {transform_indices = @transform_15, window_bounds = array<i64: 1, 128, 32>}, {transform_indices = @transform_16, window_bounds = array<i64: 1, 1, 32>}, {pipeline_mode = #tpu.pipeline_mode<synchronous>, transform_indices = @transform_17, window_bounds = array<i64: 1, 32>}, {pipeline_mode = #tpu.pipeline_mode<synchronous>, transform_indices = @transform_18, window_bounds = array<i64: 1, 32>}, {pipeline_mode = #tpu.pipeline_mode<synchronous>, transform_indices = @transform_19, window_bounds = array<i64: 2, 128, 32>}]} {
    %c0_i32 = arith.constant 0 : i32
    %0 = arith.cmpi eq, %arg0, %c0_i32 : i32
    %1 = arith.extui %0 : i1 to i32
    %c0_i32_0 = arith.constant 0 : i32
    %2 = arith.cmpi ne, %1, %c0_i32_0 : i32
    scf.if %2 {
      %144 = arith.index_cast %arg1 : i32 to index
      %c0_76 = arith.constant 0 : index
      %c0_77 = arith.constant 0 : index
      %145 = vector.load %arg2[%144, %c0_76, %c0_77] : memref<2x128x32xf32, #tpu.memory_space<vmem>>, vector<1x128x32xf32>
      %146 = vector.shape_cast %145 : vector<1x128x32xf32> to vector<128x32xf32>
      %147 = arith.index_cast %arg1 : i32 to index
      %c0_78 = arith.constant 0 : index
      %c0_79 = arith.constant 0 : index
      %148 = vector.load %arg22[%147, %c0_78, %c0_79] : memref<2x128x32xf32, #tpu.memory_space<vmem>>, vector<1x128x32xf32>
      %149 = vector.shape_cast %148 : vector<1x128x32xf32> to vector<128x32xf32>
      %150 = vector.shape_cast %146 : vector<128x32xf32> to vector<1x128x32xf32>
      tpu.vector_store %arg22[%147, %c0_78, %c0_79], %150 {strides = array<i32>} : memref<2x128x32xf32, #tpu.memory_space<vmem>>, vector<1x128x32xf32>,
    } else {
    }
    %3 = arith.index_cast %arg1 : i32 to index
    %c0 = arith.constant 0 : index
    %c0_1 = arith.constant 0 : index
    %4 = vector.load %arg22[%3, %c0, %c0_1] : memref<2x128x32xf32, #tpu.memory_space<vmem>>, vector<1x128x32xf32>
    %5 = vector.shape_cast %4 : vector<1x128x32xf32> to vector<128x32xf32>
    %c0_2 = arith.constant 0 : index
    %c0_3 = arith.constant 0 : index
    %c0_4 = arith.constant 0 : index
    %6 = vector.load %arg3[%c0_2, %c0_3, %c0_4] : memref<1x1x32xf32, #tpu.memory_space<vmem>>, vector<1x1x32xf32>
    %7 = vector.shape_cast %6 : vector<1x1x32xf32> to vector<1x32xf32>
    %c0_5 = arith.constant 0 : index
    %c0_6 = arith.constant 0 : index
    %c0_7 = arith.constant 0 : index
    %8 = vector.load %arg4[%c0_5, %c0_6, %c0_7] : memref<1x1x32xf32, #tpu.memory_space<vmem>>, vector<1x1x32xf32>
    %9 = vector.shape_cast %8 : vector<1x1x32xf32> to vector<1x32xf32>
    %cst = arith.constant dense<0.000000e+00> : vector<128xf32>
    %10 = vector.multi_reduction <add>, %5, %cst [1] : vector<128x32xf32> to vector<128xf32>
    %11 = vector.shape_cast %10 : vector<128xf32> to vector<128x1xf32>
    %cst_8 = arith.constant 3.200000e+01 : f32
    %12 = vector.broadcast %cst_8 : f32 to vector<128x1xf32>
    %13 = arith.divf %11, %12 : vector<128x1xf32>
    %14 = vector.broadcast %13 : vector<128x1xf32> to vector<128x32xf32>
    %15 = arith.subf %5, %14 : vector<128x32xf32>
    %16 = arith.mulf %15, %15 : vector<128x32xf32>
    %cst_9 = arith.constant dense<0.000000e+00> : vector<128xf32>
    %17 = vector.multi_reduction <add>, %16, %cst_9 [1] : vector<128x32xf32> to vector<128xf32>
    %18 = vector.shape_cast %17 : vector<128xf32> to vector<128x1xf32>
    %cst_10 = arith.constant 3.200000e+01 : f32
    %19 = vector.broadcast %cst_10 : f32 to vector<128x1xf32>
    %20 = arith.divf %18, %19 : vector<128x1xf32>
    %cst_11 = arith.constant 9.99999997E-7 : f32
    %21 = vector.broadcast %cst_11 : f32 to vector<128x1xf32>
    %22 = arith.addf %20, %21 : vector<128x1xf32>
    %23 = math.rsqrt %22 : vector<128x1xf32>
    %24 = vector.broadcast %23 : vector<128x1xf32> to vector<128x32xf32>
    %25 = arith.mulf %15, %24 : vector<128x32xf32>
    %26 = vector.broadcast %7 : vector<1x32xf32> to vector<128x32xf32>
    %27 = arith.mulf %25, %26 : vector<128x32xf32>
    %28 = vector.broadcast %9 : vector<1x32xf32> to vector<128x32xf32>
    %29 = arith.addf %27, %28 : vector<128x32xf32>
    %30 = tpu.transpose %29, [1, 0] : vector<128x32xf32> -> vector<32x128xf32>
    %31 = arith.truncf %30 : vector<32x128xf32> to vector<32x128xbf16>
    %c0_12 = arith.constant 0 : index
    %c0_13 = arith.constant 0 : index
    %c0_14 = arith.constant 0 : index
    %32 = vector.load %arg5[%c0_12, %c0_13, %c0_14] : memref<1x32x32xbf16, #tpu.memory_space<vmem>>, vector<1x32x32xbf16>
    %33 = vector.shape_cast %32 : vector<1x32x32xbf16> to vector<32x32xbf16>
    %cst_15 = arith.constant dense<0.000000e+00> : vector<32x128xf32>
    %34 = tpu.matmul %33, %31, %cst_15 {dimension_numbers = #tpu.dot_dimension_numbers<[1], [0], [0], [1], [0, 0, 1, 1], [], []>} : vector<32x32xbf16>, vector<32x128xbf16>, vector<32x128xf32> -> vector<32x128xf32>
    %c0_16 = arith.constant 0 : index
    %c0_17 = arith.constant 0 : index
    %c0_18 = arith.constant 0 : index
    %35 = vector.load %arg6[%c0_16, %c0_17, %c0_18] : memref<1x32x1xf32, #tpu.memory_space<vmem>>, vector<1x32x1xf32>
    %36 = vector.shape_cast %35 : vector<1x32x1xf32> to vector<32x1xf32>
    %37 = vector.broadcast %36 : vector<32x1xf32> to vector<32x128xf32>
    %38 = arith.addf %34, %37 : vector<32x128xf32>
    %c0_19 = arith.constant 0 : index
    %c0_20 = arith.constant 0 : index
    %c0_21 = arith.constant 0 : index
    %39 = vector.load %arg7[%c0_19, %c0_20, %c0_21] : memref<1x32x32xbf16, #tpu.memory_space<vmem>>, vector<1x32x32xbf16>
    %40 = vector.shape_cast %39 : vector<1x32x32xbf16> to vector<32x32xbf16>
    %cst_22 = arith.constant dense<0.000000e+00> : vector<32x128xf32>
    %41 = tpu.matmul %40, %31, %cst_22 {dimension_numbers = #tpu.dot_dimension_numbers<[1], [0], [0], [1], [0, 0, 1, 1], [], []>} : vector<32x32xbf16>, vector<32x128xbf16>, vector<32x128xf32> -> vector<32x128xf32>
    %c0_23 = arith.constant 0 : index
    %c0_24 = arith.constant 0 : index
    %c0_25 = arith.constant 0 : index
    %42 = vector.load %arg8[%c0_23, %c0_24, %c0_25] : memref<1x32x1xf32, #tpu.memory_space<vmem>>, vector<1x32x1xf32>
    %43 = vector.shape_cast %42 : vector<1x32x1xf32> to vector<32x1xf32>
    %44 = vector.broadcast %43 : vector<32x1xf32> to vector<32x128xf32>
    %45 = arith.addf %41, %44 : vector<32x128xf32>
    %c0_26 = arith.constant 0 : index
    %c0_27 = arith.constant 0 : index
    %c0_28 = arith.constant 0 : index
    %46 = vector.load %arg9[%c0_26, %c0_27, %c0_28] : memref<1x32x32xbf16, #tpu.memory_space<vmem>>, vector<1x32x32xbf16>
    %47 = vector.shape_cast %46 : vector<1x32x32xbf16> to vector<32x32xbf16>
    %cst_29 = arith.constant dense<0.000000e+00> : vector<32x128xf32>
    %48 = tpu.matmul %47, %31, %cst_29 {dimension_numbers = #tpu.dot_dimension_numbers<[1], [0], [0], [1], [0, 0, 1, 1], [], []>} : vector<32x32xbf16>, vector<32x128xbf16>, vector<32x128xf32> -> vector<32x128xf32>
    %c0_30 = arith.constant 0 : index
    %c0_31 = arith.constant 0 : index
    %c0_32 = arith.constant 0 : index
    %49 = vector.load %arg10[%c0_30, %c0_31, %c0_32] : memref<1x32x1xf32, #tpu.memory_space<vmem>>, vector<1x32x1xf32>
    %50 = vector.shape_cast %49 : vector<1x32x1xf32> to vector<32x1xf32>
    %51 = vector.broadcast %50 : vector<32x1xf32> to vector<32x128xf32>
    %52 = arith.addf %48, %51 : vector<32x128xf32>
    %53 = vector.shape_cast %38 : vector<32x128xf32> to vector<4x8x128xf32>
    %54 = arith.truncf %53 : vector<4x8x128xf32> to vector<4x8x128xbf16>
    %55 = vector.shape_cast %45 : vector<32x128xf32> to vector<4x8x128xf32>
    %56 = arith.truncf %55 : vector<4x8x128xf32> to vector<4x8x128xbf16>
    %57 = vector.shape_cast %52 : vector<32x128xf32> to vector<4x8x128xf32>
    %58 = arith.truncf %57 : vector<4x8x128xf32> to vector<4x8x128xbf16>
    "tpu.trace_start"() <{level = 10 : i32, message = "hdq,hdk->hqk"}> : () -> ()
    %cst_33 = arith.constant dense<0.000000e+00> : vector<4x128x128xf32>
    %59 = tpu.matmul %54, %56, %cst_33 {dimension_numbers = #tpu.dot_dimension_numbers<[1], [1], [2], [2], [0, 0, 0, 2, 1, 2], [0], [0]>} : vector<4x8x128xbf16>, vector<4x8x128xbf16>, vector<4x128x128xf32> -> vector<4x128x128xf32>
    "tpu.trace_stop"() : () -> ()
    %cst_34 = arith.constant 0.353553385 : f32
    %60 = vector.broadcast %cst_34 : f32 to vector<4x128x128xf32>
    %61 = arith.mulf %59, %60 : vector<4x128x128xf32>
    %62 = tpu.iota {dimensions = array<i32: 1>} : vector<1x128xi32>
    %c33_i32 = arith.constant 33 : i32
    %63 = vector.broadcast %c33_i32 : i32 to vector<1x128xi32>
    %64 = arith.cmpi slt, %62, %63 : vector<1x128xi32>
    %cst_35 = arith.constant 0.000000e+00 : f32
    %cst_36 = arith.constant -1.000000e+30 : f32
    %65 = vector.broadcast %cst_35 : f32 to vector<1x128xf32>
    %66 = vector.broadcast %cst_36 : f32 to vector<1x128xf32>
    %67 = arith.select %64, %65, %66 : vector<1x128xi1>, vector<1x128xf32>
    %68 = vector.shape_cast %67 : vector<1x128xf32> to vector<1x1x128xf32>
    %69 = vector.broadcast %68 : vector<1x1x128xf32> to vector<4x128x128xf32>
    %70 = arith.addf %61, %69 : vector<4x128x128xf32>
    %cst_37 = arith.constant dense<0xFF800000> : vector<4x128xf32>
    %71 = vector.multi_reduction <maximumf>, %70, %cst_37 [2] : vector<4x128x128xf32> to vector<4x128xf32>
    %72 = vector.shape_cast %71 : vector<4x128xf32> to vector<4x128x1xf32>
    %73 = vector.broadcast %72 : vector<4x128x1xf32> to vector<4x128x128xf32>
    %74 = arith.subf %70, %73 : vector<4x128x128xf32>
    %75 = math.exp %74 : vector<4x128x128xf32>
    %cst_38 = arith.constant dense<0.000000e+00> : vector<4x128xf32>
    %76 = vector.multi_reduction <add>, %75, %cst_38 [2] : vector<4x128x128xf32> to vector<4x128xf32>
    %77 = vector.shape_cast %76 : vector<4x128xf32> to vector<4x128x1xf32>
    %78 = tpu.reciprocal %77 {approx = true} : vector<4x128x1xf32> -> vector<4x128x1xf32>
    %79 = vector.broadcast %78 : vector<4x128x1xf32> to vector<4x128x128xf32>
    %80 = arith.mulf %75, %79 : vector<4x128x128xf32>
    %81 = arith.truncf %80 : vector<4x128x128xf32> to vector<4x128x128xbf16>
    "tpu.trace_start"() <{level = 10 : i32, message = "hdk,hqk->hdq"}> : () -> ()
    %cst_39 = arith.constant dense<0.000000e+00> : vector<4x8x128xf32>
    %82 = tpu.matmul %58, %81, %cst_39 {dimension_numbers = #tpu.dot_dimension_numbers<[2], [2], [1], [1], [0, 0, 0, 1, 1, 1], [0], [0]>} : vector<4x8x128xbf16>, vector<4x128x128xbf16>, vector<4x8x128xf32> -> vector<4x8x128xf32>
    "tpu.trace_stop"() : () -> ()
    %83 = vector.shape_cast %82 : vector<4x8x128xf32> to vector<32x128xf32>
    %84 = arith.truncf %83 : vector<32x128xf32> to vector<32x128xbf16>
    %c0_40 = arith.constant 0 : index
    %c0_41 = arith.constant 0 : index
    %c0_42 = arith.constant 0 : index
    %85 = vector.load %arg11[%c0_40, %c0_41, %c0_42] : memref<1x32x32xbf16, #tpu.memory_space<vmem>>, vector<1x32x32xbf16>
    %86 = vector.shape_cast %85 : vector<1x32x32xbf16> to vector<32x32xbf16>
    %cst_43 = arith.constant dense<0.000000e+00> : vector<32x128xf32>
    %87 = tpu.matmul %86, %84, %cst_43 {dimension_numbers = #tpu.dot_dimension_numbers<[1], [0], [0], [1], [0, 0, 1, 1], [], []>} : vector<32x32xbf16>, vector<32x128xbf16>, vector<32x128xf32> -> vector<32x128xf32>
    %c0_44 = arith.constant 0 : index
    %c0_45 = arith.constant 0 : index
    %c0_46 = arith.constant 0 : index
    %88 = vector.load %arg12[%c0_44, %c0_45, %c0_46] : memref<1x32x1xf32, #tpu.memory_space<vmem>>, vector<1x32x1xf32>
    %89 = vector.shape_cast %88 : vector<1x32x1xf32> to vector<32x1xf32>
    %90 = vector.broadcast %89 : vector<32x1xf32> to vector<32x128xf32>
    %91 = arith.addf %87, %90 : vector<32x128xf32>
    %92 = tpu.transpose %91, [1, 0] : vector<32x128xf32> -> vector<128x32xf32>
    %93 = arith.addf %5, %92 : vector<128x32xf32>
    %c0_47 = arith.constant 0 : index
    %c0_48 = arith.constant 0 : index
    %c0_49 = arith.constant 0 : index
    %94 = vector.load %arg13[%c0_47, %c0_48, %c0_49] : memref<1x1x32xf32, #tpu.memory_space<vmem>>, vector<1x1x32xf32>
    %95 = vector.shape_cast %94 : vector<1x1x32xf32> to vector<1x32xf32>
    %c0_50 = arith.constant 0 : index
    %c0_51 = arith.constant 0 : index
    %c0_52 = arith.constant 0 : index
    %96 = vector.load %arg14[%c0_50, %c0_51, %c0_52] : memref<1x1x32xf32, #tpu.memory_space<vmem>>, vector<1x1x32xf32>
    %97 = vector.shape_cast %96 : vector<1x1x32xf32> to vector<1x32xf32>
    %cst_53 = arith.constant dense<0.000000e+00> : vector<128xf32>
    %98 = vector.multi_reduction <add>, %93, %cst_53 [1] : vector<128x32xf32> to vector<128xf32>
    %99 = vector.shape_cast %98 : vector<128xf32> to vector<128x1xf32>
    %cst_54 = arith.constant 3.200000e+01 : f32
    %100 = vector.broadcast %cst_54 : f32 to vector<128x1xf32>
    %101 = arith.divf %99, %100 : vector<128x1xf32>
    %102 = vector.broadcast %101 : vector<128x1xf32> to vector<128x32xf32>
    %103 = arith.subf %93, %102 : vector<128x32xf32>
    %104 = arith.mulf %103, %103 : vector<128x32xf32>
    %cst_55 = arith.constant dense<0.000000e+00> : vector<128xf32>
    %105 = vector.multi_reduction <add>, %104, %cst_55 [1] : vector<128x32xf32> to vector<128xf32>
    %106 = vector.shape_cast %105 : vector<128xf32> to vector<128x1xf32>
    %cst_56 = arith.constant 3.200000e+01 : f32
    %107 = vector.broadcast %cst_56 : f32 to vector<128x1xf32>
    %108 = arith.divf %106, %107 : vector<128x1xf32>
    %cst_57 = arith.constant 9.99999997E-7 : f32
    %109 = vector.broadcast %cst_57 : f32 to vector<128x1xf32>
    %110 = arith.addf %108, %109 : vector<128x1xf32>
    %111 = math.rsqrt %110 : vector<128x1xf32>
    %112 = vector.broadcast %111 : vector<128x1xf32> to vector<128x32xf32>
    %113 = arith.mulf %103, %112 : vector<128x32xf32>
    %114 = vector.broadcast %95 : vector<1x32xf32> to vector<128x32xf32>
    %115 = arith.mulf %113, %114 : vector<128x32xf32>
    %116 = vector.broadcast %97 : vector<1x32xf32> to vector<128x32xf32>
    %117 = arith.addf %115, %116 : vector<128x32xf32>
    %118 = arith.truncf %117 : vector<128x32xf32> to vector<128x32xbf16>
    %c0_58 = arith.constant 0 : index
    %c0_59 = arith.constant 0 : index
    %c0_60 = arith.constant 0 : index
    %119 = vector.load %arg15[%c0_58, %c0_59, %c0_60] : memref<1x32x128xbf16, #tpu.memory_space<vmem>>, vector<1x32x128xbf16>
    %120 = vector.shape_cast %119 : vector<1x32x128xbf16> to vector<32x128xbf16>
    %cst_61 = arith.constant dense<0.000000e+00> : vector<128x128xf32>
    %121 = tpu.matmul %118, %120, %cst_61 {dimension_numbers = #tpu.dot_dimension_numbers<[1], [0], [0], [1], [0, 0, 1, 1], [], []>} : vector<128x32xbf16>, vector<32x128xbf16>, vector<128x128xf32> -> vector<128x128xf32>
    %c0_62 = arith.constant 0 : index
    %c0_63 = arith.constant 0 : index
    %c0_64 = arith.constant 0 : index
    %122 = vector.load %arg16[%c0_62, %c0_63, %c0_64] : memref<1x1x128xf32, #tpu.memory_space<vmem>>, vector<1x1x128xf32>
    %123 = vector.shape_cast %122 : vector<1x1x128xf32> to vector<1x128xf32>
    %124 = vector.broadcast %123 : vector<1x128xf32> to vector<128x128xf32>
    %125 = arith.addf %121, %124 : vector<128x128xf32>
    %cst_65 = arith.constant 0.000000e+00 : f32
    %126 = vector.broadcast %cst_65 : f32 to vector<128x128xf32>
    %127 = arith.maximumf %125, %126 : vector<128x128xf32>
    %128 = arith.truncf %127 : vector<128x128xf32> to vector<128x128xbf16>
    %c0_66 = arith.constant 0 : index
    %c0_67 = arith.constant 0 : index
    %c0_68 = arith.constant 0 : index
    %129 = vector.load %arg17[%c0_66, %c0_67, %c0_68] : memref<1x128x32xbf16, #tpu.memory_space<vmem>>, vector<1x128x32xbf16>
    %130 = vector.shape_cast %129 : vector<1x128x32xbf16> to vector<128x32xbf16>
    %cst_69 = arith.constant dense<0.000000e+00> : vector<128x32xf32>
    %131 = tpu.matmul %128, %130, %cst_69 {dimension_numbers = #tpu.dot_dimension_numbers<[1], [0], [0], [1], [0, 0, 1, 1], [], []>} : vector<128x128xbf16>, vector<128x32xbf16>, vector<128x32xf32> -> vector<128x32xf32>
    %132 = arith.addf %93, %131 : vector<128x32xf32>
    %c0_70 = arith.constant 0 : index
    %c0_71 = arith.constant 0 : index
    %c0_72 = arith.constant 0 : index
    %133 = vector.load %arg18[%c0_70, %c0_71, %c0_72] : memref<1x1x32xf32, #tpu.memory_space<vmem>>, vector<1x1x32xf32>
    %134 = vector.shape_cast %133 : vector<1x1x32xf32> to vector<1x32xf32>
    %135 = vector.broadcast %134 : vector<1x32xf32> to vector<128x32xf32>
    %136 = arith.addf %132, %135 : vector<128x32xf32>
    %137 = arith.index_cast %arg1 : i32 to index
    %c0_73 = arith.constant 0 : index
    %c0_74 = arith.constant 0 : index
    %138 = vector.load %arg22[%137, %c0_73, %c0_74] : memref<2x128x32xf32, #tpu.memory_space<vmem>>, vector<1x128x32xf32>
    %139 = vector.shape_cast %138 : vector<1x128x32xf32> to vector<128x32xf32>
    %140 = vector.shape_cast %136 : vector<128x32xf32> to vector<1x128x32xf32>
    tpu.vector_store %arg22[%137, %c0_73, %c0_74], %140 {strides = array<i32>} : memref<2x128x32xf32, #tpu.memory_space<vmem>>, vector<1x128x32xf32>,
    %c1_i32 = arith.constant 1 : i32
    %141 = arith.cmpi eq, %arg0, %c1_i32 : i32
    %142 = arith.extui %141 : i1 to i32
    %c0_i32_75 = arith.constant 0 : i32
    %143 = arith.cmpi ne, %142, %c0_i32_75 : i32
    scf.if %143 {
      %c0_76 = arith.constant 0 : index
      %c0_77 = arith.constant 0 : index
      %144 = vector.load %arg19[%c0_76, %c0_77] : memref<1x32xf32, #tpu.memory_space<vmem>>, vector<1x32xf32>
      %c0_78 = arith.constant 0 : index
      %c0_79 = arith.constant 0 : index
      %145 = vector.load %arg20[%c0_78, %c0_79] : memref<1x32xf32, #tpu.memory_space<vmem>>, vector<1x32xf32>
      %cst_80 = arith.constant dense<0.000000e+00> : vector<128xf32>
      %146 = vector.multi_reduction <add>, %136, %cst_80 [1] : vector<128x32xf32> to vector<128xf32>
      %147 = vector.shape_cast %146 : vector<128xf32> to vector<128x1xf32>
      %cst_81 = arith.constant 3.200000e+01 : f32
      %148 = vector.broadcast %cst_81 : f32 to vector<128x1xf32>
      %149 = arith.divf %147, %148 : vector<128x1xf32>
      %150 = vector.broadcast %149 : vector<128x1xf32> to vector<128x32xf32>
      %151 = arith.subf %136, %150 : vector<128x32xf32>
      %152 = arith.mulf %151, %151 : vector<128x32xf32>
      %cst_82 = arith.constant dense<0.000000e+00> : vector<128xf32>
      %153 = vector.multi_reduction <add>, %152, %cst_82 [1] : vector<128x32xf32> to vector<128xf32>
      %154 = vector.shape_cast %153 : vector<128xf32> to vector<128x1xf32>
      %cst_83 = arith.constant 3.200000e+01 : f32
      %155 = vector.broadcast %cst_83 : f32 to vector<128x1xf32>
      %156 = arith.divf %154, %155 : vector<128x1xf32>
      %cst_84 = arith.constant 9.99999997E-7 : f32
      %157 = vector.broadcast %cst_84 : f32 to vector<128x1xf32>
      %158 = arith.addf %156, %157 : vector<128x1xf32>
      %159 = math.rsqrt %158 : vector<128x1xf32>
      %160 = vector.broadcast %159 : vector<128x1xf32> to vector<128x32xf32>
      %161 = arith.mulf %151, %160 : vector<128x32xf32>
      %162 = vector.broadcast %144 : vector<1x32xf32> to vector<128x32xf32>
      %163 = arith.mulf %161, %162 : vector<128x32xf32>
      %164 = vector.broadcast %145 : vector<1x32xf32> to vector<128x32xf32>
      %165 = arith.addf %163, %164 : vector<128x32xf32>
      %166 = arith.index_cast %arg1 : i32 to index
      %c0_85 = arith.constant 0 : index
      %c0_86 = arith.constant 0 : index
      %167 = vector.load %arg21[%166, %c0_85, %c0_86] : memref<2x128x32xf32, #tpu.memory_space<vmem>>, vector<1x128x32xf32>
      %168 = vector.shape_cast %167 : vector<1x128x32xf32> to vector<128x32xf32>
      %169 = vector.shape_cast %165 : vector<128x32xf32> to vector<1x128x32xf32>
      tpu.vector_store %arg21[%166, %c0_85, %c0_86], %169 {strides = array<i32>} : memref<2x128x32xf32, #tpu.memory_space<vmem>>, vector<1x128x32xf32>,
    } else {
    }
    return
  }
  func.func @transform_0(%arg0: i32, %arg1: i32) -> (i32, i32, i32) {
    %c0_i32 = arith.constant 0 : i32
    %c0_i32_0 = arith.constant 0 : i32
    %c0_i32_1 = arith.constant 0 : i32
    %c0_i32_2 = arith.constant 0 : i32
    return %c0_i32, %c0_i32_0, %c0_i32_1 : i32, i32, i32
  }
  func.func @transform_1(%arg0: i32, %arg1: i32) -> (i32, i32, i32) {
    %c0_i32 = arith.constant 0 : i32
    %c0_i32_0 = arith.constant 0 : i32
    %c0_i32_1 = arith.constant 0 : i32
    return %arg0, %c0_i32, %c0_i32_0 : i32, i32, i32
  }
  func.func @transform_2(%arg0: i32, %arg1: i32) -> (i32, i32, i32) {
    %c0_i32 = arith.constant 0 : i32
    %c0_i32_0 = arith.constant 0 : i32
    %c0_i32_1 = arith.constant 0 : i32
    return %arg0, %c0_i32, %c0_i32_0 : i32, i32, i32
  }
  func.func @transform_3(%arg0: i32, %arg1: i32) -> (i32, i32, i32) {
    %c0_i32 = arith.constant 0 : i32
    %c0_i32_0 = arith.constant 0 : i32
    %c0_i32_1 = arith.constant 0 : i32
    return %arg0, %c0_i32, %c0_i32_0 : i32, i32, i32
  }
  func.func @transform_4(%arg0: i32, %arg1: i32) -> (i32, i32, i32) {
    %c0_i32 = arith.constant 0 : i32
    %c0_i32_0 = arith.constant 0 : i32
    %c0_i32_1 = arith.constant 0 : i32
    return %arg0, %c0_i32, %c0_i32_0 : i32, i32, i32
  }
  func.func @transform_5(%arg0: i32, %arg1: i32) -> (i32, i32, i32) {
    %c0_i32 = arith.constant 0 : i32
    %c0_i32_0 = arith.constant 0 : i32
    %c0_i32_1 = arith.constant 0 : i32
    return %arg0, %c0_i32, %c0_i32_0 : i32, i32, i32
  }
  func.func @transform_6(%arg0: i32, %arg1: i32) -> (i32, i32, i32) {
    %c0_i32 = arith.constant 0 : i32
    %c0_i32_0 = arith.constant 0 : i32
    %c0_i32_1 = arith.constant 0 : i32
    return %arg0, %c0_i32, %c0_i32_0 : i32, i32, i32
  }
  func.func @transform_7(%arg0: i32, %arg1: i32) -> (i32, i32, i32) {
    %c0_i32 = arith.constant 0 : i32
    %c0_i32_0 = arith.constant 0 : i32
    %c0_i32_1 = arith.constant 0 : i32
    return %arg0, %c0_i32, %c0_i32_0 : i32, i32, i32
  }
  func.func @transform_8(%arg0: i32, %arg1: i32) -> (i32, i32, i32) {
    %c0_i32 = arith.constant 0 : i32
    %c0_i32_0 = arith.constant 0 : i32
    %c0_i32_1 = arith.constant 0 : i32
    return %arg0, %c0_i32, %c0_i32_0 : i32, i32, i32
  }
  func.func @transform_9(%arg0: i32, %arg1: i32) -> (i32, i32, i32) {
    %c0_i32 = arith.constant 0 : i32
    %c0_i32_0 = arith.constant 0 : i32
    %c0_i32_1 = arith.constant 0 : i32
    return %arg0, %c0_i32, %c0_i32_0 : i32, i32, i32
  }
  func.func @transform_10(%arg0: i32, %arg1: i32) -> (i32, i32, i32) {
    %c0_i32 = arith.constant 0 : i32
    %c0_i32_0 = arith.constant 0 : i32
    %c0_i32_1 = arith.constant 0 : i32
    return %arg0, %c0_i32, %c0_i32_0 : i32, i32, i32
  }
  func.func @transform_11(%arg0: i32, %arg1: i32) -> (i32, i32, i32) {
    %c0_i32 = arith.constant 0 : i32
    %c0_i32_0 = arith.constant 0 : i32
    %c0_i32_1 = arith.constant 0 : i32
    return %arg0, %c0_i32, %c0_i32_0 : i32, i32, i32
  }
  func.func @transform_12(%arg0: i32, %arg1: i32) -> (i32, i32, i32) {
    %c0_i32 = arith.constant 0 : i32
    %c0_i32_0 = arith.constant 0 : i32
    %c0_i32_1 = arith.constant 0 : i32
    return %arg0, %c0_i32, %c0_i32_0 : i32, i32, i32
  }
  func.func @transform_13(%arg0: i32, %arg1: i32) -> (i32, i32, i32) {
    %c0_i32 = arith.constant 0 : i32
    %c0_i32_0 = arith.constant 0 : i32
    %c0_i32_1 = arith.constant 0 : i32
    return %arg0, %c0_i32, %c0_i32_0 : i32, i32, i32
  }
  func.func @transform_14(%arg0: i32, %arg1: i32) -> (i32, i32, i32) {
    %c0_i32 = arith.constant 0 : i32
    %c0_i32_0 = arith.constant 0 : i32
    %c0_i32_1 = arith.constant 0 : i32
    return %arg0, %c0_i32, %c0_i32_0 : i32, i32, i32
  }
  func.func @transform_15(%arg0: i32, %arg1: i32) -> (i32, i32, i32) {
    %c0_i32 = arith.constant 0 : i32
    %c0_i32_0 = arith.constant 0 : i32
    %c0_i32_1 = arith.constant 0 : i32
    return %arg0, %c0_i32, %c0_i32_0 : i32, i32, i32
  }
  func.func @transform_16(%arg0: i32, %arg1: i32) -> (i32, i32, i32) {
    %c0_i32 = arith.constant 0 : i32
    %c0_i32_0 = arith.constant 0 : i32
    %c0_i32_1 = arith.constant 0 : i32
    return %arg0, %c0_i32, %c0_i32_0 : i32, i32, i32
  }
  func.func @transform_17(%arg0: i32, %arg1: i32) -> (i32, i32) {
    %c0_i32 = arith.constant 0 : i32
    %c0_i32_0 = arith.constant 0 : i32
    %c0_i32_1 = arith.constant 0 : i32
    return %c0_i32, %c0_i32_0 : i32, i32
  }
  func.func @transform_18(%arg0: i32, %arg1: i32) -> (i32, i32) {
    %c0_i32 = arith.constant 0 : i32
    %c0_i32_0 = arith.constant 0 : i32
    %c0_i32_1 = arith.constant 0 : i32
    return %c0_i32, %c0_i32_0 : i32, i32
  }
  func.func @transform_19(%arg0: i32, %arg1: i32) -> (i32, i32, i32) {
    %c0_i32 = arith.constant 0 : i32
    %c0_i32_0 = arith.constant 0 : i32
    %c0_i32_1 = arith.constant 0 : i32
    %c0_i32_2 = arith.constant 0 : i32
    return %c0_i32, %c0_i32_0, %c0_i32_1 : i32, i32, i32
  }
}

</mosaic_0001>

<llo_original>
// kernel: tpu_custom_call.1
$region0: #{tpu_custom_call.1}
  #allocation0 [shape = 'u32[]', space=smem, size = 0x4, offset = 0x4, fixed_abs, tag = 'smem constant byte address 0x4 - core index']
  #allocation1 [shape = 'u32[144,128]{1,0:T(1,128)}', space=vmem, size = 0x12000, scoped, tag = 'internal scratch']
  #allocation2 [shape = 'f32[2,128,32]{2,1,0:T(8,128)}', space=vmem, size = 0x20000, scoped, tag = 'scratch operand']
  %s0 = inlined_call_operand.vmem [shape: f32[2,128,32], index: 0, kind: input, shape index: {}]
  %s1 = inlined_call_operand.vmem [shape: f32[2,1,32], index: 1, kind: input, shape index: {}]
  %s2 = inlined_call_operand.vmem [shape: f32[2,1,32], index: 2, kind: input, shape index: {}]
  %s3 = inlined_call_operand.vmem [shape: bf16[2,32,32], index: 3, kind: input, shape index: {}]
  %s4 = inlined_call_operand.vmem [shape: f32[2,32,1], index: 4, kind: input, shape index: {}]
  %s5 = inlined_call_operand.vmem [shape: bf16[2,32,32], index: 5, kind: input, shape index: {}]
  %s6 = inlined_call_operand.vmem [shape: f32[2,32,1], index: 6, kind: input, shape index: {}]
  %s7 = inlined_call_operand.vmem [shape: bf16[2,32,32], index: 7, kind: input, shape index: {}]
  %s8 = inlined_call_operand.vmem [shape: f32[2,32,1], index: 8, kind: input, shape index: {}]
  %s9 = inlined_call_operand.vmem [shape: bf16[2,32,32], index: 9, kind: input, shape index: {}]
  %s10 = inlined_call_operand.vmem [shape: f32[2,32,1], index: 10, kind: input, shape index: {}]
  %s11 = inlined_call_operand.vmem [shape: f32[2,1,32], index: 11, kind: input, shape index: {}]
  %s12 = inlined_call_operand.vmem [shape: f32[2,1,32], index: 12, kind: input, shape index: {}]
  %s13 = inlined_call_operand.vmem [shape: bf16[2,32,128], index: 13, kind: input, shape index: {}]
  %s14 = inlined_call_operand.vmem [shape: f32[2,1,128], index: 14, kind: input, shape index: {}]
  %s15 = inlined_call_operand.vmem [shape: bf16[2,128,32], index: 15, kind: input, shape index: {}]
  %s16 = inlined_call_operand.vmem [shape: f32[2,1,32], index: 16, kind: input, shape index: {}]
  %s17 = inlined_call_operand.vmem [shape: f32[1,32], index: 17, kind: input, shape index: {}]
  %s18 = inlined_call_operand.vmem [shape: f32[1,32], index: 18, kind: input, shape index: {}]
  %s19 = inlined_call_operand.vmem [shape: f32[2,128,32], index: 19, kind: output, shape index: {}]
  %s20 = sld [smem:[#allocation0]]
  $region117: #{tpu_custom_call.1} parent=0
    _
  %s22 = ssub.s32 1, %s20
  %s23 = scalar_select 0, %s22, %s20
  loop: start=0, step=1, limit=6
  $region2: #{tpu_custom_call.1} parent=0 // loop_pre_header
    _
  $region3: #{tpu_custom_call.1} parent=0 // loop_header
    %s25 = sphi 0, %s29
    %p26 = scmp.ge.s32.totalorder %s25, 6
    %s32 = sphi 0, %s44
    %s33 = sphi 0, %s40
    %s34 = sphi 0, %s32
    %s35 = sphi 0, %s33
    %s36 = sphi 0, %s34
    %s37 = sphi 0, %s35
    %s45 = sphi 0, %s45
    %s47 = sphi 0, %s45
    %s48 = sphi 0, %s47
    %s62 = sphi 0, %s48
    %s68 = sphi 0, %s70
    %s71 = sphi 0, %s68
    %s72 = sphi 0, %s71
    %s88 = sphi 0, %s72
    %s94 = sphi 0, %s96
    %s97 = sphi 0, %s94
    %s98 = sphi 0, %s97
    %s114 = sphi 0, %s98
    %s120 = sphi 0, %s122
    %s123 = sphi 0, %s120
    %s124 = sphi 0, %s123
    %s140 = sphi 0, %s124
    %s146 = sphi 0, %s148
    %s149 = sphi 0, %s146
    %s150 = sphi 0, %s149
    %s166 = sphi 0, %s150
    %s172 = sphi 0, %s174
    %s175 = sphi 0, %s172
    %s176 = sphi 0, %s175
    %s192 = sphi 0, %s176
    %s198 = sphi 0, %s200
    %s201 = sphi 0, %s198
    %s202 = sphi 0, %s201
    %s218 = sphi 0, %s202
    %s224 = sphi 0, %s226
    %s227 = sphi 0, %s224
    %s228 = sphi 0, %s227
    %s244 = sphi 0, %s228
    %s250 = sphi 0, %s252
    %s253 = sphi 0, %s250
    %s254 = sphi 0, %s253
    %s270 = sphi 0, %s254
    %s276 = sphi 0, %s278
    %s279 = sphi 0, %s276
    %s280 = sphi 0, %s279
    %s296 = sphi 0, %s280
    %s302 = sphi 0, %s304
    %s305 = sphi 0, %s302
    %s306 = sphi 0, %s305
    %s322 = sphi 0, %s306
    %s328 = sphi 0, %s330
    %s331 = sphi 0, %s328
    %s332 = sphi 0, %s331
    %s348 = sphi 0, %s332
    %s354 = sphi 0, %s356
    %s357 = sphi 0, %s354
    %s358 = sphi 0, %s357
    %s374 = sphi 0, %s358
    %s380 = sphi 0, %s382
    %s383 = sphi 0, %s380
    %s384 = sphi 0, %s383
    %s400 = sphi 0, %s384
    %s406 = sphi 0, %s408
    %s409 = sphi 0, %s406
    %s410 = sphi 0, %s409
    %s426 = sphi 0, %s410
    %s432 = sphi 0, %s434
    %s435 = sphi 0, %s432
    %s436 = sphi 0, %s435
    %s452 = sphi 0, %s436
    %s458 = sphi 0, %s460
    %s461 = sphi 0, %s458
    %s462 = sphi 0, %s461
    %s478 = sphi 0, %s462
    %s482 = sphi 0, %s482
    %s484 = sphi 0, %s482
    %s485 = sphi 0, %s484
    %s499 = sphi 0, %s485
    %s503 = sphi 0, %s503
    %s505 = sphi 0, %s503
    %s506 = sphi 0, %s505
    %s520 = sphi 0, %s506
    %s524 = sphi 0, %s524
    %s526 = sphi 0, %s524
    %s527 = sphi 0, %s526
    %s541 = sphi 0, %s527
  $region4: #{tpu_custom_call.1} parent=0 // loop_header_branch
    %28 = sbr.rel (%p26) target = $region8
  $region5: #{tpu_custom_call.1} parent=0 // loop_body
    %s30 = ssub.s32 %s25, 1
    %s31 = ssub.s32 %s25, 2
    %s38 = sadd.s32 1, %s33
    %p39 = scmp.ge.s32.totalorder %s38, 2
    %s40 = scalar_select %p39, 0, %s38
    %s41 = sadd.s32 1, %s32
    %s42 = scalar_select %p39, %s41, %s32
    %p43 = scmp.ge.s32.totalorder %s42, 2
    %s44 = scalar_select %p43, 0, %s42
    %s46 = sadd.s32 %s45, 1
    %p49 = scmp.eq.s32.totalorder %s25, 3
    %p50 = scmp.ne.s32.totalorder %s45, %s47
    %p51 = scmp.eq.s32.totalorder %s25, 0
    %p52 = por %p50, %p51
    %p53 = scmp.ne.s32.totalorder %s45, %s47
    %p54 = scmp.eq.s32.totalorder %s30, 3
    %p55 = por %p53, %p54
    %p56 = scmp.ne.s32.totalorder %s47, %s48
    %p57 = scmp.eq.s32.totalorder %s30, 0
    %p58 = por %p56, %p57
    %p59 = scmp.ne.s32.totalorder %s47, %s48
    %p60 = scmp.eq.s32.totalorder %s31, 3
    %p61 = por %p59, %p60
    %p63 = scmp.ne.s32.totalorder %s48, %s62
    %p64 = scmp.eq.s32.totalorder %s31, 0
    %p65 = por %p63, %p64
    %s66 = ssub.s32 %s32, %s44
    %p67 = scmp.eq.s32.totalorder %s66, 0
    %s69 = sadd.s32 %s68, 1
    %s70 = scalar_select %p67, %s68, %s69
    %p73 = pneg %p67
    %p74 = scmp.eq.s32.totalorder %s25, 3
    %p75 = por %p73, %p74
    %p76 = scmp.ne.s32.totalorder %s68, %s71
    %p77 = scmp.eq.s32.totalorder %s25, 0
    %p78 = por %p76, %p77
    %p79 = scmp.ne.s32.totalorder %s68, %s71
    %p80 = scmp.eq.s32.totalorder %s30, 3
    %p81 = por %p79, %p80
    %p82 = scmp.ne.s32.totalorder %s71, %s72
    %p83 = scmp.eq.s32.totalorder %s30, 0
    %p84 = por %p82, %p83
    %p85 = scmp.ne.s32.totalorder %s71, %s72
    %p86 = scmp.eq.s32.totalorder %s31, 3
    %p87 = por %p85, %p86
    %p89 = scmp.ne.s32.totalorder %s72, %s88
    %p90 = scmp.eq.s32.totalorder %s31, 0
    %p91 = por %p89, %p90
    %s92 = ssub.s32 %s32, %s44
    %p93 = scmp.eq.s32.totalorder %s92, 0
    %s95 = sadd.s32 %s94, 1
    %s96 = scalar_select %p93, %s94, %s95
    %p99 = pneg %p93
    %p100 = scmp.eq.s32.totalorder %s25, 3
    %p101 = por %p99, %p100
    %p102 = scmp.ne.s32.totalorder %s94, %s97
    %p103 = scmp.eq.s32.totalorder %s25, 0
    %p104 = por %p102, %p103
    %p105 = scmp.ne.s32.totalorder %s94, %s97
    %p106 = scmp.eq.s32.totalorder %s30, 3
    %p107 = por %p105, %p106
    %p108 = scmp.ne.s32.totalorder %s97, %s98
    %p109 = scmp.eq.s32.totalorder %s30, 0
    %p110 = por %p108, %p109
    %p111 = scmp.ne.s32.totalorder %s97, %s98
    %p112 = scmp.eq.s32.totalorder %s31, 3
    %p113 = por %p111, %p112
    %p115 = scmp.ne.s32.totalorder %s98, %s114
    %p116 = scmp.eq.s32.totalorder %s31, 0
    %p117 = por %p115, %p116
    %s118 = ssub.s32 %s32, %s44
    %p119 = scmp.eq.s32.totalorder %s118, 0
    %s121 = sadd.s32 %s120, 1
    %s122 = scalar_select %p119, %s120, %s121
    %p125 = pneg %p119
    %p126 = scmp.eq.s32.totalorder %s25, 3
    %p127 = por %p125, %p126
    %p128 = scmp.ne.s32.totalorder %s120, %s123
    %p129 = scmp.eq.s32.totalorder %s25, 0
    %p130 = por %p128, %p129
    %p131 = scmp.ne.s32.totalorder %s120, %s123
    %p132 = scmp.eq.s32.totalorder %s30, 3
    %p133 = por %p131, %p132
    %p134 = scmp.ne.s32.totalorder %s123, %s124
    %p135 = scmp.eq.s32.totalorder %s30, 0
    %p136 = por %p134, %p135
    %p137 = scmp.ne.s32.totalorder %s123, %s124
    %p138 = scmp.eq.s32.totalorder %s31, 3
    %p139 = por %p137, %p138
    %p141 = scmp.ne.s32.totalorder %s124, %s140
    %p142 = scmp.eq.s32.totalorder %s31, 0
    %p143 = por %p141, %p142
    %s144 = ssub.s32 %s32, %s44
    %p145 = scmp.eq.s32.totalorder %s144, 0
    %s147 = sadd.s32 %s146, 1
    %s148 = scalar_select %p145, %s146, %s147
    %p151 = pneg %p145
    %p152 = scmp.eq.s32.totalorder %s25, 3
    %p153 = por %p151, %p152
    %p154 = scmp.ne.s32.totalorder %s146, %s149
    %p155 = scmp.eq.s32.totalorder %s25, 0
    %p156 = por %p154, %p155
    %p157 = scmp.ne.s32.totalorder %s146, %s149
    %p158 = scmp.eq.s32.totalorder %s30, 3
    %p159 = por %p157, %p158
    %p160 = scmp.ne.s32.totalorder %s149, %s150
    %p161 = scmp.eq.s32.totalorder %s30, 0
    %p162 = por %p160, %p161
    %p163 = scmp.ne.s32.totalorder %s149, %s150
    %p164 = scmp.eq.s32.totalorder %s31, 3
    %p165 = por %p163, %p164
    %p167 = scmp.ne.s32.totalorder %s150, %s166
    %p168 = scmp.eq.s32.totalorder %s31, 0
    %p169 = por %p167, %p168
    %s170 = ssub.s32 %s32, %s44
    %p171 = scmp.eq.s32.totalorder %s170, 0
    %s173 = sadd.s32 %s172, 1
    %s174 = scalar_select %p171, %s172, %s173
    %p177 = pneg %p171
    %p178 = scmp.eq.s32.totalorder %s25, 3
    %p179 = por %p177, %p178
    %p180 = scmp.ne.s32.totalorder %s172, %s175
    %p181 = scmp.eq.s32.totalorder %s25, 0
    %p182 = por %p180, %p181
    %p183 = scmp.ne.s32.totalorder %s172, %s175
    %p184 = scmp.eq.s32.totalorder %s30, 3
    %p185 = por %p183, %p184
    %p186 = scmp.ne.s32.totalorder %s175, %s176
    %p187 = scmp.eq.s32.totalorder %s30, 0
    %p188 = por %p186, %p187
    %p189 = scmp.ne.s32.totalorder %s175, %s176
    %p190 = scmp.eq.s32.totalorder %s31, 3
    %p191 = por %p189, %p190
    %p193 = scmp.ne.s32.totalorder %s176, %s192
    %p194 = scmp.eq.s32.totalorder %s31, 0
    %p195 = por %p193, %p194
    %s196 = ssub.s32 %s32, %s44
    %p197 = scmp.eq.s32.totalorder %s196, 0
    %s199 = sadd.s32 %s198, 1
    %s200 = scalar_select %p197, %s198, %s199
    %p203 = pneg %p197
    %p204 = scmp.eq.s32.totalorder %s25, 3
    %p205 = por %p203, %p204
    %p206 = scmp.ne.s32.totalorder %s198, %s201
    %p207 = scmp.eq.s32.totalorder %s25, 0
    %p208 = por %p206, %p207
    %p209 = scmp.ne.s32.totalorder %s198, %s201
    %p210 = scmp.eq.s32.totalorder %s30, 3
    %p211 = por %p209, %p210
    %p212 = scmp.ne.s32.totalorder %s201, %s202
    %p213 = scmp.eq.s32.totalorder %s30, 0
    %p214 = por %p212, %p213
    %p215 = scmp.ne.s32.totalorder %s201, %s202
    %p216 = scmp.eq.s32.totalorder %s31, 3
    %p217 = por %p215, %p216
    %p219 = scmp.ne.s32.totalorder %s202, %s218
    %p220 = scmp.eq.s32.totalorder %s31, 0
    %p221 = por %p219, %p220
    %s222 = ssub.s32 %s32, %s44
    %p223 = scmp.eq.s32.totalorder %s222, 0
    %s225 = sadd.s32 %s224, 1
    %s226 = scalar_select %p223, %s224, %s225
    %p229 = pneg %p223
    %p230 = scmp.eq.s32.totalorder %s25, 3
    %p231 = por %p229, %p230
    %p232 = scmp.ne.s32.totalorder %s224, %s227
    %p233 = scmp.eq.s32.totalorder %s25, 0
    %p234 = por %p232, %p233
    %p235 = scmp.ne.s32.totalorder %s224, %s227
    %p236 = scmp.eq.s32.totalorder %s30, 3
    %p237 = por %p235, %p236
    %p238 = scmp.ne.s32.totalorder %s227, %s228
    %p239 = scmp.eq.s32.totalorder %s30, 0
    %p240 = por %p238, %p239
    %p241 = scmp.ne.s32.totalorder %s227, %s228
    %p242 = scmp.eq.s32.totalorder %s31, 3
    %p243 = por %p241, %p242
    %p245 = scmp.ne.s32.totalorder %s228, %s244
    %p246 = scmp.eq.s32.totalorder %s31, 0
    %p247 = por %p245, %p246
    %s248 = ssub.s32 %s32, %s44
    %p249 = scmp.eq.s32.totalorder %s248, 0
    %s251 = sadd.s32 %s250, 1
    %s252 = scalar_select %p249, %s250, %s251
    %p255 = pneg %p249
    %p256 = scmp.eq.s32.totalorder %s25, 3
    %p257 = por %p255, %p256
    %p258 = scmp.ne.s32.totalorder %s250, %s253
    %p259 = scmp.eq.s32.totalorder %s25, 0
    %p260 = por %p258, %p259
    %p261 = scmp.ne.s32.totalorder %s250, %s253
    %p262 = scmp.eq.s32.totalorder %s30, 3
    %p263 = por %p261, %p262
    %p264 = scmp.ne.s32.totalorder %s253, %s254
    %p265 = scmp.eq.s32.totalorder %s30, 0
    %p266 = por %p264, %p265
    %p267 = scmp.ne.s32.totalorder %s253, %s254
    %p268 = scmp.eq.s32.totalorder %s31, 3
    %p269 = por %p267, %p268
    %p271 = scmp.ne.s32.totalorder %s254, %s270
    %p272 = scmp.eq.s32.totalorder %s31, 0
    %p273 = por %p271, %p272
    %s274 = ssub.s32 %s32, %s44
    %p275 = scmp.eq.s32.totalorder %s274, 0
    %s277 = sadd.s32 %s276, 1
    %s278 = scalar_select %p275, %s276, %s277
    %p281 = pneg %p275
    %p282 = scmp.eq.s32.totalorder %s25, 3
    %p283 = por %p281, %p282
    %p284 = scmp.ne.s32.totalorder %s276, %s279
    %p285 = scmp.eq.s32.totalorder %s25, 0
    %p286 = por %p284, %p285
    %p287 = scmp.ne.s32.totalorder %s276, %s279
    %p288 = scmp.eq.s32.totalorder %s30, 3
    %p289 = por %p287, %p288
    %p290 = scmp.ne.s32.totalorder %s279, %s280
    %p291 = scmp.eq.s32.totalorder %s30, 0
    %p292 = por %p290, %p291
    %p293 = scmp.ne.s32.totalorder %s279, %s280
    %p294 = scmp.eq.s32.totalorder %s31, 3
    %p295 = por %p293, %p294
    %p297 = scmp.ne.s32.totalorder %s280, %s296
    %p298 = scmp.eq.s32.totalorder %s31, 0
    %p299 = por %p297, %p298
    %s300 = ssub.s32 %s32, %s44
    %p301 = scmp.eq.s32.totalorder %s300, 0
    %s303 = sadd.s32 %s302, 1
    %s304 = scalar_select %p301, %s302, %s303
    %p307 = pneg %p301
    %p308 = scmp.eq.s32.totalorder %s25, 3
    %p309 = por %p307, %p308
    %p310 = scmp.ne.s32.totalorder %s302, %s305
    %p311 = scmp.eq.s32.totalorder %s25, 0
    %p312 = por %p310, %p311
    %p313 = scmp.ne.s32.totalorder %s302, %s305
    %p314 = scmp.eq.s32.totalorder %s30, 3
    %p315 = por %p313, %p314
    %p316 = scmp.ne.s32.totalorder %s305, %s306
    %p317 = scmp.eq.s32.totalorder %s30, 0
    %p318 = por %p316, %p317
    %p319 = scmp.ne.s32.totalorder %s305, %s306
    %p320 = scmp.eq.s32.totalorder %s31, 3
    %p321 = por %p319, %p320
    %p323 = scmp.ne.s32.totalorder %s306, %s322
    %p324 = scmp.eq.s32.totalorder %s31, 0
    %p325 = por %p323, %p324
    %s326 = ssub.s32 %s32, %s44
    %p327 = scmp.eq.s32.totalorder %s326, 0
    %s329 = sadd.s32 %s328, 1
    %s330 = scalar_select %p327, %s328, %s329
    %p333 = pneg %p327
    %p334 = scmp.eq.s32.totalorder %s25, 3
    %p335 = por %p333, %p334
    %p336 = scmp.ne.s32.totalorder %s328, %s331
    %p337 = scmp.eq.s32.totalorder %s25, 0
    %p338 = por %p336, %p337
    %p339 = scmp.ne.s32.totalorder %s328, %s331
    %p340 = scmp.eq.s32.totalorder %s30, 3
    %p341 = por %p339, %p340
    %p342 = scmp.ne.s32.totalorder %s331, %s332
    %p343 = scmp.eq.s32.totalorder %s30, 0
    %p344 = por %p342, %p343
    %p345 = scmp.ne.s32.totalorder %s331, %s332
    %p346 = scmp.eq.s32.totalorder %s31, 3
    %p347 = por %p345, %p346
    %p349 = scmp.ne.s32.totalorder %s332, %s348
    %p350 = scmp.eq.s32.totalorder %s31, 0
    %p351 = por %p349, %p350
    %s352 = ssub.s32 %s32, %s44
    %p353 = scmp.eq.s32.totalorder %s352, 0
    %s355 = sadd.s32 %s354, 1
    %s356 = scalar_select %p353, %s354, %s355
    %p359 = pneg %p353
    %p360 = scmp.eq.s32.totalorder %s25, 3
    %p361 = por %p359, %p360
    %p362 = scmp.ne.s32.totalorder %s354, %s357
    %p363 = scmp.eq.s32.totalorder %s25, 0
    %p364 = por %p362, %p363
    %p365 = scmp.ne.s32.totalorder %s354, %s357
    %p366 = scmp.eq.s32.totalorder %s30, 3
    %p367 = por %p365, %p366
    %p368 = scmp.ne.s32.totalorder %s357, %s358
    %p369 = scmp.eq.s32.totalorder %s30, 0
    %p370 = por %p368, %p369
    %p371 = scmp.ne.s32.totalorder %s357, %s358
    %p372 = scmp.eq.s32.totalorder %s31, 3
    %p373 = por %p371, %p372
    %p375 = scmp.ne.s32.totalorder %s358, %s374
    %p376 = scmp.eq.s32.totalorder %s31, 0
    %p377 = por %p375, %p376
    %s378 = ssub.s32 %s32, %s44
    %p379 = scmp.eq.s32.totalorder %s378, 0
    %s381 = sadd.s32 %s380, 1
    %s382 = scalar_select %p379, %s380, %s381
    %p385 = pneg %p379
    %p386 = scmp.eq.s32.totalorder %s25, 3
    %p387 = por %p385, %p386
    %p388 = scmp.ne.s32.totalorder %s380, %s383
    %p389 = scmp.eq.s32.totalorder %s25, 0
    %p390 = por %p388, %p389
    %p391 = scmp.ne.s32.totalorder %s380, %s383
    %p392 = scmp.eq.s32.totalorder %s30, 3
    %p393 = por %p391, %p392
    %p394 = scmp.ne.s32.totalorder %s383, %s384
    %p395 = scmp.eq.s32.totalorder %s30, 0
    %p396 = por %p394, %p395
    %p397 = scmp.ne.s32.totalorder %s383, %s384
    %p398 = scmp.eq.s32.totalorder %s31, 3
    %p399 = por %p397, %p398
    %p401 = scmp.ne.s32.totalorder %s384, %s400
    %p402 = scmp.eq.s32.totalorder %s31, 0
    %p403 = por %p401, %p402
    %s404 = ssub.s32 %s32, %s44
    %p405 = scmp.eq.s32.totalorder %s404, 0
    %s407 = sadd.s32 %s406, 1
    %s408 = scalar_select %p405, %s406, %s407
    %p411 = pneg %p405
    %p412 = scmp.eq.s32.totalorder %s25, 3
    %p413 = por %p411, %p412
    %p414 = scmp.ne.s32.totalorder %s406, %s409
    %p415 = scmp.eq.s32.totalorder %s25, 0
    %p416 = por %p414, %p415
    %p417 = scmp.ne.s32.totalorder %s406, %s409
    %p418 = scmp.eq.s32.totalorder %s30, 3
    %p419 = por %p417, %p418
    %p420 = scmp.ne.s32.totalorder %s409, %s410
    %p421 = scmp.eq.s32.totalorder %s30, 0
    %p422 = por %p420, %p421
    %p423 = scmp.ne.s32.totalorder %s409, %s410
    %p424 = scmp.eq.s32.totalorder %s31, 3
    %p425 = por %p423, %p424
    %p427 = scmp.ne.s32.totalorder %s410, %s426
    %p428 = scmp.eq.s32.totalorder %s31, 0
    %p429 = por %p427, %p428
    %s430 = ssub.s32 %s32, %s44
    %p431 = scmp.eq.s32.totalorder %s430, 0
    %s433 = sadd.s32 %s432, 1
    %s434 = scalar_select %p431, %s432, %s433
    %p437 = pneg %p431
    %p438 = scmp.eq.s32.totalorder %s25, 3
    %p439 = por %p437, %p438
    %p440 = scmp.ne.s32.totalorder %s432, %s435
    %p441 = scmp.eq.s32.totalorder %s25, 0
    %p442 = por %p440, %p441
    %p443 = scmp.ne.s32.totalorder %s432, %s435
    %p444 = scmp.eq.s32.totalorder %s30, 3
    %p445 = por %p443, %p444
    %p446 = scmp.ne.s32.totalorder %s435, %s436
    %p447 = scmp.eq.s32.totalorder %s30, 0
    %p448 = por %p446, %p447
    %p449 = scmp.ne.s32.totalorder %s435, %s436
    %p450 = scmp.eq.s32.totalorder %s31, 3
    %p451 = por %p449, %p450
    %p453 = scmp.ne.s32.totalorder %s436, %s452
    %p454 = scmp.eq.s32.totalorder %s31, 0
    %p455 = por %p453, %p454
    %s456 = ssub.s32 %s32, %s44
    %p457 = scmp.eq.s32.totalorder %s456, 0
    %s459 = sadd.s32 %s458, 1
    %s460 = scalar_select %p457, %s458, %s459
    %p463 = pneg %p457
    %p464 = scmp.eq.s32.totalorder %s25, 3
    %p465 = por %p463, %p464
    %p466 = scmp.ne.s32.totalorder %s458, %s461
    %p467 = scmp.eq.s32.totalorder %s25, 0
    %p468 = por %p466, %p467
    %p469 = scmp.ne.s32.totalorder %s458, %s461
    %p470 = scmp.eq.s32.totalorder %s30, 3
    %p471 = por %p469, %p470
    %p472 = scmp.ne.s32.totalorder %s461, %s462
    %p473 = scmp.eq.s32.totalorder %s30, 0
    %p474 = por %p472, %p473
    %p475 = scmp.ne.s32.totalorder %s461, %s462
    %p476 = scmp.eq.s32.totalorder %s31, 3
    %p477 = por %p475, %p476
    %p479 = scmp.ne.s32.totalorder %s462, %s478
    %p480 = scmp.eq.s32.totalorder %s31, 0
    %p481 = por %p479, %p480
    %s483 = sadd.s32 %s482, 1
    %p486 = scmp.eq.s32.totalorder %s25, 3
    %p487 = scmp.ne.s32.totalorder %s482, %s484
    %p488 = scmp.eq.s32.totalorder %s25, 0
    %p489 = por %p487, %p488
    %p490 = scmp.ne.s32.totalorder %s482, %s484
    %p491 = scmp.eq.s32.totalorder %s30, 3
    %p492 = por %p490, %p491
    %p493 = scmp.ne.s32.totalorder %s484, %s485
    %p494 = scmp.eq.s32.totalorder %s30, 0
    %p495 = por %p493, %p494
    %p496 = scmp.ne.s32.totalorder %s484, %s485
    %p497 = scmp.eq.s32.totalorder %s31, 3
    %p498 = por %p496, %p497
    %p500 = scmp.ne.s32.totalorder %s485, %s499
    %p501 = scmp.eq.s32.totalorder %s31, 0
    %p502 = por %p500, %p501
    %s504 = sadd.s32 %s503, 1
    %p507 = scmp.eq.s32.totalorder %s25, 3
    %p508 = scmp.ne.s32.totalorder %s503, %s505
    %p509 = scmp.eq.s32.totalorder %s25, 0
    %p510 = por %p508, %p509
    %p511 = scmp.ne.s32.totalorder %s503, %s505
    %p512 = scmp.eq.s32.totalorder %s30, 3
    %p513 = por %p511, %p512
    %p514 = scmp.ne.s32.totalorder %s505, %s506
    %p515 = scmp.eq.s32.totalorder %s30, 0
    %p516 = por %p514, %p515
    %p517 = scmp.ne.s32.totalorder %s505, %s506
    %p518 = scmp.eq.s32.totalorder %s31, 3
    %p519 = por %p517, %p518
    %p521 = scmp.ne.s32.totalorder %s506, %s520
    %p522 = scmp.eq.s32.totalorder %s31, 0
    %p523 = por %p521, %p522
    %s525 = sadd.s32 %s524, 1
    %p528 = scmp.eq.s32.totalorder %s25, 3
    %p529 = scmp.ne.s32.totalorder %s524, %s526
    %p530 = scmp.eq.s32.totalorder %s25, 0
    %p531 = por %p529, %p530
    %p532 = scmp.ne.s32.totalorder %s524, %s526
    %p533 = scmp.eq.s32.totalorder %s30, 3
    %p534 = por %p532, %p533
    %p535 = scmp.ne.s32.totalorder %s526, %s527
    %p536 = scmp.eq.s32.totalorder %s30, 0
    %p537 = por %p535, %p536
    %p538 = scmp.ne.s32.totalorder %s526, %s527
    %p539 = scmp.eq.s32.totalorder %s31, 3
    %p540 = por %p538, %p539
    %p542 = scmp.ne.s32.totalorder %s527, %s541
    %p543 = scmp.eq.s32.totalorder %s31, 0
    %p544 = por %p542, %p543
    %p545 = scmp.le.s32.totalorder 1, %s25
    %p546 = scmp.lt.s32.totalorder %s25, 5
    %p547 = pnand %p545, %p546
    %p548 = pneg %p547
    // Predicated region
    $region9: #{tpu_custom_call.1} parent=5 // pred_check
      _
    $region10: #{tpu_custom_call.1} parent=5 // pred_check_branch
      %550 = sbr.rel (%p547) target = $region12
    $region11: #{tpu_custom_call.1} parent=5 // pred_region
      %s551 = ssub.s32 %s25, 1
      // Predicated region
      $region13: #{tpu_custom_call.1} parent=11 // pred_check
        %p552 = pneg %p58
      $region14: #{tpu_custom_call.1} parent=11 // pred_check_branch
        %554 = sbr.rel (%p552) target = $region16
      $region15: #{tpu_custom_call.1} parent=11 // pred_region
        _
      $region16: #{tpu_custom_call.1} parent=11 // pred_fallthru
        _
      // Predicated region
      $region17: #{tpu_custom_call.1} parent=11 // pred_check
        %p555 = pneg %p495
      $region18: #{tpu_custom_call.1} parent=11 // pred_check_branch
        %557 = sbr.rel (%p555) target = $region20
      $region19: #{tpu_custom_call.1} parent=11 // pred_region
        _
      $region20: #{tpu_custom_call.1} parent=11 // pred_fallthru
        _
      // Predicated region
      $region21: #{tpu_custom_call.1} parent=11 // pred_check
        %p558 = pneg %p516
      $region22: #{tpu_custom_call.1} parent=11 // pred_check_branch
        %560 = sbr.rel (%p558) target = $region24
      $region23: #{tpu_custom_call.1} parent=11 // pred_region
        _
      $region24: #{tpu_custom_call.1} parent=11 // pred_fallthru
        _
    $region12: #{tpu_custom_call.1} parent=5 // pred_fallthru
      _
    %p561 = scmp.lt.s32.totalorder %s25, 4
    // Predicated region
    $region25: #{tpu_custom_call.1} parent=5 // pred_check
      %p562 = pneg %p561
    $region26: #{tpu_custom_call.1} parent=5 // pred_check_branch
      %564 = sbr.rel (%p562) target = $region28
    $region27: #{tpu_custom_call.1} parent=5 // pred_region
      // Predicated region
      $region29: #{tpu_custom_call.1} parent=27 // pred_check
        %p565 = pneg %p78
      $region30: #{tpu_custom_call.1} parent=27 // pred_check_branch
        %567 = sbr.rel (%p565) target = $region32
      $region31: #{tpu_custom_call.1} parent=27 // pred_region
        %p568 = scmp.lt.s32.totalorder %s32, 1
        %s569 = scalar_select %p568, %s32, 1
        %s570 = scalar_lea.vmem %s1, %s569
      $region32: #{tpu_custom_call.1} parent=27 // pred_fallthru
        _
      // Predicated region
      $region33: #{tpu_custom_call.1} parent=27 // pred_check
        %p571 = pneg %p104
      $region34: #{tpu_custom_call.1} parent=27 // pred_check_branch
        %573 = sbr.rel (%p571) target = $region36
      $region35: #{tpu_custom_call.1} parent=27 // pred_region
        %p574 = scmp.lt.s32.totalorder %s32, 1
        %s575 = scalar_select %p574, %s32, 1
        %s576 = scalar_lea.vmem %s2, %s575
      $region36: #{tpu_custom_call.1} parent=27 // pred_fallthru
        _
      // Predicated region
      $region37: #{tpu_custom_call.1} parent=27 // pred_check
        %p577 = pneg %p130
      $region38: #{tpu_custom_call.1} parent=27 // pred_check_branch
        %579 = sbr.rel (%p577) target = $region40
      $region39: #{tpu_custom_call.1} parent=27 // pred_region
        %p580 = scmp.lt.s32.totalorder %s32, 1
        %s581 = scalar_select %p580, %s32, 1
        %s582 = smul.addr %s581, 4
        %s583 = smul.addr %s582, 4
        %s584 = scalar_lea.vmem %s3, %s583
      $region40: #{tpu_custom_call.1} parent=27 // pred_fallthru
        _
      // Predicated region
      $region41: #{tpu_custom_call.1} parent=27 // pred_check
        %p585 = pneg %p156
      $region42: #{tpu_custom_call.1} parent=27 // pred_check_branch
        %587 = sbr.rel (%p585) target = $region44
      $region43: #{tpu_custom_call.1} parent=27 // pred_region
        %p588 = scmp.lt.s32.totalorder %s32, 1
        %s589 = scalar_select %p588, %s32, 1
        %s590 = smul.addr %s589, 4
        %s591 = smul.addr %s590, 8
        %s592 = scalar_lea.vmem %s4, %s591
      $region44: #{tpu_custom_call.1} parent=27 // pred_fallthru
        _
      // Predicated region
      $region45: #{tpu_custom_call.1} parent=27 // pred_check
        %p593 = pneg %p182
      $region46: #{tpu_custom_call.1} parent=27 // pred_check_branch
        %595 = sbr.rel (%p593) target = $region48
      $region47: #{tpu_custom_call.1} parent=27 // pred_region
        %p596 = scmp.lt.s32.totalorder %s32, 1
        %s597 = scalar_select %p596, %s32, 1
        %s598 = smul.addr %s597, 4
        %s599 = smul.addr %s598, 4
        %s600 = scalar_lea.vmem %s5, %s599
      $region48: #{tpu_custom_call.1} parent=27 // pred_fallthru
        _
      // Predicated region
      $region49: #{tpu_custom_call.1} parent=27 // pred_check
        %p601 = pneg %p208
      $region50: #{tpu_custom_call.1} parent=27 // pred_check_branch
        %603 = sbr.rel (%p601) target = $region52
      $region51: #{tpu_custom_call.1} parent=27 // pred_region
        %p604 = scmp.lt.s32.totalorder %s32, 1
        %s605 = scalar_select %p604, %s32, 1
        %s606 = smul.addr %s605, 4
        %s607 = smul.addr %s606, 8
        %s608 = scalar_lea.vmem %s6, %s607
      $region52: #{tpu_custom_call.1} parent=27 // pred_fallthru
        _
      // Predicated region
      $region53: #{tpu_custom_call.1} parent=27 // pred_check
        %p609 = pneg %p234
      $region54: #{tpu_custom_call.1} parent=27 // pred_check_branch
        %611 = sbr.rel (%p609) target = $region56
      $region55: #{tpu_custom_call.1} parent=27 // pred_region
        %p612 = scmp.lt.s32.totalorder %s32, 1
        %s613 = scalar_select %p612, %s32, 1
        %s614 = smul.addr %s613, 4
        %s615 = smul.addr %s614, 4
        %s616 = scalar_lea.vmem %s7, %s615
      $region56: #{tpu_custom_call.1} parent=27 // pred_fallthru
        _
      // Predicated region
      $region57: #{tpu_custom_call.1} parent=27 // pred_check
        %p617 = pneg %p260
      $region58: #{tpu_custom_call.1} parent=27 // pred_check_branch
        %619 = sbr.rel (%p617) target = $region60
      $region59: #{tpu_custom_call.1} parent=27 // pred_region
        %p620 = scmp.lt.s32.totalorder %s32, 1
        %s621 = scalar_select %p620, %s32, 1
        %s622 = smul.addr %s621, 4
        %s623 = smul.addr %s622, 8
        %s624 = scalar_lea.vmem %s8, %s623
      $region60: #{tpu_custom_call.1} parent=27 // pred_fallthru
        _
      // Predicated region
      $region61: #{tpu_custom_call.1} parent=27 // pred_check
        %p625 = pneg %p286
      $region62: #{tpu_custom_call.1} parent=27 // pred_check_branch
        %627 = sbr.rel (%p625) target = $region64
      $region63: #{tpu_custom_call.1} parent=27 // pred_region
        %p628 = scmp.lt.s32.totalorder %s32, 1
        %s629 = scalar_select %p628, %s32, 1
        %s630 = smul.addr %s629, 4
        %s631 = smul.addr %s630, 4
        %s632 = scalar_lea.vmem %s9, %s631
      $region64: #{tpu_custom_call.1} parent=27 // pred_fallthru
        _
      // Predicated region
      $region65: #{tpu_custom_call.1} parent=27 // pred_check
        %p633 = pneg %p312
      $region66: #{tpu_custom_call.1} parent=27 // pred_check_branch
        %635 = sbr.rel (%p633) target = $region68
      $region67: #{tpu_custom_call.1} parent=27 // pred_region
        %p636 = scmp.lt.s32.totalorder %s32, 1
        %s637 = scalar_select %p636, %s32, 1
        %s638 = smul.addr %s637, 4
        %s639 = smul.addr %s638, 8
        %s640 = scalar_lea.vmem %s10, %s639
      $region68: #{tpu_custom_call.1} parent=27 // pred_fallthru
        _
      // Predicated region
      $region69: #{tpu_custom_call.1} parent=27 // pred_check
        %p641 = pneg %p338
      $region70: #{tpu_custom_call.1} parent=27 // pred_check_branch
        %643 = sbr.rel (%p641) target = $region72
      $region71: #{tpu_custom_call.1} parent=27 // pred_region
        %p644 = scmp.lt.s32.totalorder %s32, 1
        %s645 = scalar_select %p644, %s32, 1
        %s646 = scalar_lea.vmem %s11, %s645
      $region72: #{tpu_custom_call.1} parent=27 // pred_fallthru
        _
      // Predicated region
      $region73: #{tpu_custom_call.1} parent=27 // pred_check
        %p647 = pneg %p364
      $region74: #{tpu_custom_call.1} parent=27 // pred_check_branch
        %649 = sbr.rel (%p647) target = $region76
      $region75: #{tpu_custom_call.1} parent=27 // pred_region
        %p650 = scmp.lt.s32.totalorder %s32, 1
        %s651 = scalar_select %p650, %s32, 1
        %s652 = scalar_lea.vmem %s12, %s651
      $region76: #{tpu_custom_call.1} parent=27 // pred_fallthru
        _
      // Predicated region
      $region77: #{tpu_custom_call.1} parent=27 // pred_check
        %p653 = pneg %p390
      $region78: #{tpu_custom_call.1} parent=27 // pred_check_branch
        %655 = sbr.rel (%p653) target = $region80
      $region79: #{tpu_custom_call.1} parent=27 // pred_region
        %p656 = scmp.lt.s32.totalorder %s32, 1
        %s657 = scalar_select %p656, %s32, 1
        %s658 = smul.addr %s657, 4
        %s659 = smul.addr %s658, 4
        %s660 = scalar_lea.vmem %s13, %s659
      $region80: #{tpu_custom_call.1} parent=27 // pred_fallthru
        _
      // Predicated region
      $region81: #{tpu_custom_call.1} parent=27 // pred_check
        %p661 = pneg %p416
      $region82: #{tpu_custom_call.1} parent=27 // pred_check_branch
        %663 = sbr.rel (%p661) target = $region84
      $region83: #{tpu_custom_call.1} parent=27 // pred_region
        %p664 = scmp.lt.s32.totalorder %s32, 1
        %s665 = scalar_select %p664, %s32, 1
        %s666 = scalar_lea.vmem %s14, %s665
      $region84: #{tpu_custom_call.1} parent=27 // pred_fallthru
        _
      // Predicated region
      $region85: #{tpu_custom_call.1} parent=27 // pred_check
        %p667 = pneg %p442
      $region86: #{tpu_custom_call.1} parent=27 // pred_check_branch
        %669 = sbr.rel (%p667) target = $region88
      $region87: #{tpu_custom_call.1} parent=27 // pred_region
        %p670 = scmp.lt.s32.totalorder %s32, 1
        %s671 = scalar_select %p670, %s32, 1
        %s672 = smul.addr %s671, 16
        %s673 = smul.addr %s672, 4
        %s674 = scalar_lea.vmem %s15, %s673
      $region88: #{tpu_custom_call.1} parent=27 // pred_fallthru
        _
      // Predicated region
      $region89: #{tpu_custom_call.1} parent=27 // pred_check
        %p675 = pneg %p468
      $region90: #{tpu_custom_call.1} parent=27 // pred_check_branch
        %677 = sbr.rel (%p675) target = $region92
      $region91: #{tpu_custom_call.1} parent=27 // pred_region
        %p678 = scmp.lt.s32.totalorder %s32, 1
        %s679 = scalar_select %p678, %s32, 1
        %s680 = scalar_lea.vmem %s16, %s679
      $region92: #{tpu_custom_call.1} parent=27 // pred_fallthru
        _
    $region28: #{tpu_custom_call.1} parent=5 // pred_fallthru
      _
    %p681 = scmp.le.s32.totalorder 1, %s25
    %p682 = scmp.lt.s32.totalorder %s25, 5
    %p683 = pnand %p681, %p682
    %p684 = pneg %p683
    // Predicated region
    $region93: #{tpu_custom_call.1} parent=5 // pred_check
      _
    $region94: #{tpu_custom_call.1} parent=5 // pred_check_branch
      %686 = sbr.rel (%p683) target = $region96
    $region95: #{tpu_custom_call.1} parent=5 // pred_region
      %s687 = ssub.s32 %s25, 1
      %p688 = pneg %p58
      %p689 = pneg %p55
      %p690 = scmp.lt.s32.totalorder %s34, 1
      %s691 = scalar_select %p690, %s34, 1
      %s692 = scalar_lea.vmem %s1, %s691
      %p693 = pneg %p84
      %p694 = pneg %p81
      %p695 = scmp.lt.s32.totalorder %s34, 1
      %s696 = scalar_select %p695, %s34, 1
      %s697 = scalar_lea.vmem %s2, %s696
      %p698 = pneg %p110
      %p699 = pneg %p107
      %p700 = scmp.lt.s32.totalorder %s34, 1
      %s701 = scalar_select %p700, %s34, 1
      %s702 = smul.addr %s701, 4
      %s703 = smul.addr %s702, 4
      %s704 = scalar_lea.vmem %s3, %s703
      %p705 = pneg %p136
      %p706 = pneg %p133
      %p707 = scmp.lt.s32.totalorder %s34, 1
      %s708 = scalar_select %p707, %s34, 1
      %s709 = smul.addr %s708, 4
      %s710 = smul.addr %s709, 8
      %s711 = scalar_lea.vmem %s4, %s710
      %p712 = pneg %p162
      %p713 = pneg %p159
      %p714 = scmp.lt.s32.totalorder %s34, 1
      %s715 = scalar_select %p714, %s34, 1
      %s716 = smul.addr %s715, 4
      %s717 = smul.addr %s716, 4
      %s718 = scalar_lea.vmem %s5, %s717
      %p719 = pneg %p188
      %p720 = pneg %p185
      %p721 = scmp.lt.s32.totalorder %s34, 1
      %s722 = scalar_select %p721, %s34, 1
      %s723 = smul.addr %s722, 4
      %s724 = smul.addr %s723, 8
      %s725 = scalar_lea.vmem %s6, %s724
      %p726 = pneg %p214
      %p727 = pneg %p211
      %p728 = scmp.lt.s32.totalorder %s34, 1
      %s729 = scalar_select %p728, %s34, 1
      %s730 = smul.addr %s729, 4
      %s731 = smul.addr %s730, 4
      %s732 = scalar_lea.vmem %s7, %s731
      %p733 = pneg %p240
      %p734 = pneg %p237
      %p735 = scmp.lt.s32.totalorder %s34, 1
      %s736 = scalar_select %p735, %s34, 1
      %s737 = smul.addr %s736, 4
      %s738 = smul.addr %s737, 8
      %s739 = scalar_lea.vmem %s8, %s738
      %p740 = pneg %p266
      %p741 = pneg %p263
      %p742 = scmp.lt.s32.totalorder %s34, 1
      %s743 = scalar_select %p742, %s34, 1
      %s744 = smul.addr %s743, 4
      %s745 = smul.addr %s744, 4
      %s746 = scalar_lea.vmem %s9, %s745
      %p747 = pneg %p292
      %p748 = pneg %p289
      %p749 = scmp.lt.s32.totalorder %s34, 1
      %s750 = scalar_select %p749, %s34, 1
      %s751 = smul.addr %s750, 4
      %s752 = smul.addr %s751, 8
      %s753 = scalar_lea.vmem %s10, %s752
      %p754 = pneg %p318
      %p755 = pneg %p315
      %p756 = scmp.lt.s32.totalorder %s34, 1
      %s757 = scalar_select %p756, %s34, 1
      %s758 = scalar_lea.vmem %s11, %s757
      %p759 = pneg %p344
      %p760 = pneg %p341
      %p761 = scmp.lt.s32.totalorder %s34, 1
      %s762 = scalar_select %p761, %s34, 1
      %s763 = scalar_lea.vmem %s12, %s762
      %p764 = pneg %p370
      %p765 = pneg %p367
      %p766 = scmp.lt.s32.totalorder %s34, 1
      %s767 = scalar_select %p766, %s34, 1
      %s768 = smul.addr %s767, 4
      %s769 = smul.addr %s768, 4
      %s770 = scalar_lea.vmem %s13, %s769
      %p771 = pneg %p396
      %p772 = pneg %p393
      %p773 = scmp.lt.s32.totalorder %s34, 1
      %s774 = scalar_select %p773, %s34, 1
      %s775 = scalar_lea.vmem %s14, %s774
      %p776 = pneg %p422
      %p777 = pneg %p419
      %p778 = scmp.lt.s32.totalorder %s34, 1
      %s779 = scalar_select %p778, %s34, 1
      %s780 = smul.addr %s779, 16
      %s781 = smul.addr %s780, 4
      %s782 = scalar_lea.vmem %s15, %s781
      %p783 = pneg %p448
      %p784 = pneg %p445
      %p785 = scmp.lt.s32.totalorder %s34, 1
      %s786 = scalar_select %p785, %s34, 1
      %s787 = scalar_lea.vmem %s16, %s786
      %p788 = pneg %p474
      %p789 = pneg %p471
      %p790 = pneg %p495
      %p791 = pneg %p492
      %p792 = pneg %p516
      %p793 = pneg %p513
      %p794 = pneg %p537
      %p795 = pneg %p534
      %p796 = scmp.lt.s32.totalorder %s34, 1
      %s797 = scalar_select %p796, %s34, 1
      %s798 = scalar_lea.vmem %s1, %s797
      %p799 = scmp.lt.s32.totalorder %s34, 1
      %s800 = scalar_select %p799, %s34, 1
      %s801 = scalar_lea.vmem %s2, %s800
      %p802 = scmp.lt.s32.totalorder %s34, 1
      %s803 = scalar_select %p802, %s34, 1
      %s804 = smul.addr %s803, 4
      %s805 = smul.addr %s804, 4
      %s806 = scalar_lea.vmem %s3, %s805
      %p807 = scmp.lt.s32.totalorder %s34, 1
      %s808 = scalar_select %p807, %s34, 1
      %s809 = smul.addr %s808, 4
      %s810 = smul.addr %s809, 8
      %s811 = scalar_lea.vmem %s4, %s810
      %p812 = scmp.lt.s32.totalorder %s34, 1
      %s813 = scalar_select %p812, %s34, 1
      %s814 = smul.addr %s813, 4
      %s815 = smul.addr %s814, 4
      %s816 = scalar_lea.vmem %s5, %s815
      %p817 = scmp.lt.s32.totalorder %s34, 1
      %s818 = scalar_select %p817, %s34, 1
      %s819 = smul.addr %s818, 4
      %s820 = smul.addr %s819, 8
      %s821 = scalar_lea.vmem %s6, %s820
      %p822 = scmp.lt.s32.totalorder %s34, 1
      %s823 = scalar_select %p822, %s34, 1
      %s824 = smul.addr %s823, 4
      %s825 = smul.addr %s824, 4
      %s826 = scalar_lea.vmem %s7, %s825
      %p827 = scmp.lt.s32.totalorder %s34, 1
      %s828 = scalar_select %p827, %s34, 1
      %s829 = smul.addr %s828, 4
      %s830 = smul.addr %s829, 8
      %s831 = scalar_lea.vmem %s8, %s830
      %p832 = scmp.lt.s32.totalorder %s34, 1
      %s833 = scalar_select %p832, %s34, 1
      %s834 = smul.addr %s833, 4
      %s835 = smul.addr %s834, 4
      %s836 = scalar_lea.vmem %s9, %s835
      %p837 = scmp.lt.s32.totalorder %s34, 1
      %s838 = scalar_select %p837, %s34, 1
      %s839 = smul.addr %s838, 4
      %s840 = smul.addr %s839, 8
      %s841 = scalar_lea.vmem %s10, %s840
      %p842 = scmp.lt.s32.totalorder %s34, 1
      %s843 = scalar_select %p842, %s34, 1
      %s844 = scalar_lea.vmem %s11, %s843
      %p845 = scmp.lt.s32.totalorder %s34, 1
      %s846 = scalar_select %p845, %s34, 1
      %s847 = scalar_lea.vmem %s12, %s846
      %p848 = scmp.lt.s32.totalorder %s34, 1
      %s849 = scalar_select %p848, %s34, 1
      %s850 = smul.addr %s849, 4
      %s851 = smul.addr %s850, 4
      %s852 = scalar_lea.vmem %s13, %s851
      %p853 = scmp.lt.s32.totalorder %s34, 1
      %s854 = scalar_select %p853, %s34, 1
      %s855 = scalar_lea.vmem %s14, %s854
      %p856 = scmp.lt.s32.totalorder %s34, 1
      %s857 = scalar_select %p856, %s34, 1
      %s858 = smul.addr %s857, 16
      %s859 = smul.addr %s858, 4
      %s860 = scalar_lea.vmem %s15, %s859
      %p861 = scmp.lt.s32.totalorder %s34, 1
      %s862 = scalar_select %p861, %s34, 1
      %s863 = scalar_lea.vmem %s16, %s862
      %p865 = scmp.eq.s32.totalorder %s34, 0
      // Predicated region
      $region97: #{tpu_custom_call.1} parent=95 // pred_check
        %p866 = pneg %p865
      $region98: #{tpu_custom_call.1} parent=95 // pred_check_branch
        %868 = sbr.rel (%p866) target = $region100
      $region99: #{tpu_custom_call.1} parent=95 // pred_region
        %s869 = smul.u32 %s35, 128
        %s870 = scalar_lea.vmem %s0, %s869
        %v871 = vld [vmem:[%s870] sm:$0xff]
        %v872 = vld [vmem:[%s870 + $0x8] sm:$0xff]
        %v873 = vld [vmem:[%s870 + $0x10] sm:$0xff]
        %v874 = vld [vmem:[%s870 + $0x18] sm:$0xff]
        %v875 = vld [vmem:[%s870 + $0x20] sm:$0xff]
        %v876 = vld [vmem:[%s870 + $0x28] sm:$0xff]
        %v877 = vld [vmem:[%s870 + $0x30] sm:$0xff]
        %v878 = vld [vmem:[%s870 + $0x38] sm:$0xff]
        %v879 = vld [vmem:[%s870 + $0x40] sm:$0xff]
        %v880 = vld [vmem:[%s870 + $0x48] sm:$0xff]
        %v881 = vld [vmem:[%s870 + $0x50] sm:$0xff]
        %v882 = vld [vmem:[%s870 + $0x58] sm:$0xff]
        %v883 = vld [vmem:[%s870 + $0x60] sm:$0xff]
        %v884 = vld [vmem:[%s870 + $0x68] sm:$0xff]
        %v885 = vld [vmem:[%s870 + $0x70] sm:$0xff]
        %v886 = vld [vmem:[%s870 + $0x78] sm:$0xff]
        %s887 = scalar_lea.vmem [#allocation2], %s869
        %vm888 = vcmask 261120
        %889 = vst.msk [vmem:[%s887] sm:$0xff] %vm888, %v871
        %890 = vst.msk [vmem:[%s887 + $0x8] sm:$0xff] %vm888, %v872
        %891 = vst.msk [vmem:[%s887 + $0x10] sm:$0xff] %vm888, %v873
        %892 = vst.msk [vmem:[%s887 + $0x18] sm:$0xff] %vm888, %v874
        %893 = vst.msk [vmem:[%s887 + $0x20] sm:$0xff] %vm888, %v875
        %894 = vst.msk [vmem:[%s887 + $0x28] sm:$0xff] %vm888, %v876
        %895 = vst.msk [vmem:[%s887 + $0x30] sm:$0xff] %vm888, %v877
        %896 = vst.msk [vmem:[%s887 + $0x38] sm:$0xff] %vm888, %v878
        %897 = vst.msk [vmem:[%s887 + $0x40] sm:$0xff] %vm888, %v879
        %898 = vst.msk [vmem:[%s887 + $0x48] sm:$0xff] %vm888, %v880
        %899 = vst.msk [vmem:[%s887 + $0x50] sm:$0xff] %vm888, %v881
        %900 = vst.msk [vmem:[%s887 + $0x58] sm:$0xff] %vm888, %v882
        %901 = vst.msk [vmem:[%s887 + $0x60] sm:$0xff] %vm888, %v883
        %902 = vst.msk [vmem:[%s887 + $0x68] sm:$0xff] %vm888, %v884
        %903 = vst.msk [vmem:[%s887 + $0x70] sm:$0xff] %vm888, %v885
        %904 = vst.msk [vmem:[%s887 + $0x78] sm:$0xff] %vm888, %v886
      $region100: #{tpu_custom_call.1} parent=95 // pred_fallthru
        _
      %s905 = smul.u32 %s35, 128
      %s906 = scalar_lea.vmem [#allocation2], %s905
      %v907 = vld [vmem:[%s906] sm:$0xff]
      %v908 = vld [vmem:[%s906 + $0x8] sm:$0xff]
      %v909 = vld [vmem:[%s906 + $0x10] sm:$0xff]
      %v910 = vld [vmem:[%s906 + $0x18] sm:$0xff]
      %v911 = vld [vmem:[%s906 + $0x20] sm:$0xff]
      %v912 = vld [vmem:[%s906 + $0x28] sm:$0xff]
      %v913 = vld [vmem:[%s906 + $0x30] sm:$0xff]
      %v914 = vld [vmem:[%s906 + $0x38] sm:$0xff]
      %v915 = vld [vmem:[%s906 + $0x40] sm:$0xff]
      %v916 = vld [vmem:[%s906 + $0x48] sm:$0xff]
      %v917 = vld [vmem:[%s906 + $0x50] sm:$0xff]
      %v918 = vld [vmem:[%s906 + $0x58] sm:$0xff]
      %v919 = vld [vmem:[%s906 + $0x60] sm:$0xff]
      %v920 = vld [vmem:[%s906 + $0x68] sm:$0xff]
      %v921 = vld [vmem:[%s906 + $0x70] sm:$0xff]
      %v922 = vld [vmem:[%s906 + $0x78] sm:$0xff]
      %v923 = vld [vmem:[%s798] sm:$0x1]
      %v924 = vld [vmem:[%s801] sm:$0x1]
      %vm925 = vcmask 261120
      %v926 = vsel %vm925, %v907, 0.0
      %927 = vadd.xlane.f32.xlu0 %v926
      %v928 = vpop.xlane.xlu0 %927
      %v929 = vsel %vm925, %v908, 0.0
      %930 = vadd.xlane.f32.xlu0 %v929
      %v931 = vpop.xlane.xlu0 %930
      %v932 = vsel %vm925, %v909, 0.0
      %933 = vadd.xlane.f32.xlu0 %v932
      %v934 = vpop.xlane.xlu0 %933
      %v935 = vsel %vm925, %v910, 0.0
      %936 = vadd.xlane.f32.xlu0 %v935
      %v937 = vpop.xlane.xlu0 %936
      %v938 = vsel %vm925, %v911, 0.0
      %939 = vadd.xlane.f32.xlu0 %v938
      %v940 = vpop.xlane.xlu0 %939
      %v941 = vsel %vm925, %v912, 0.0
      %942 = vadd.xlane.f32.xlu0 %v941
      %v943 = vpop.xlane.xlu0 %942
      %v944 = vsel %vm925, %v913, 0.0
      %945 = vadd.xlane.f32.xlu0 %v944
      %v946 = vpop.xlane.xlu0 %945
      %v947 = vsel %vm925, %v914, 0.0
      %948 = vadd.xlane.f32.xlu0 %v947
      %v949 = vpop.xlane.xlu0 %948
      %v950 = vsel %vm925, %v915, 0.0
      %951 = vadd.xlane.f32.xlu0 %v950
      %v952 = vpop.xlane.xlu0 %951
      %v953 = vsel %vm925, %v916, 0.0
      %954 = vadd.xlane.f32.xlu0 %v953
      %v955 = vpop.xlane.xlu0 %954
      %v956 = vsel %vm925, %v917, 0.0
      %957 = vadd.xlane.f32.xlu0 %v956
      %v958 = vpop.xlane.xlu0 %957
      %v959 = vsel %vm925, %v918, 0.0
      %960 = vadd.xlane.f32.xlu0 %v959
      %v961 = vpop.xlane.xlu0 %960
      %v962 = vsel %vm925, %v919, 0.0
      %963 = vadd.xlane.f32.xlu0 %v962
      %v964 = vpop.xlane.xlu0 %963
      %v965 = vsel %vm925, %v920, 0.0
      %966 = vadd.xlane.f32.xlu0 %v965
      %v967 = vpop.xlane.xlu0 %966
      %v968 = vsel %vm925, %v921, 0.0
      %969 = vadd.xlane.f32.xlu0 %v968
      %v970 = vpop.xlane.xlu0 %969
      %v971 = vsel %vm925, %v922, 0.0
      %972 = vadd.xlane.f32.xlu0 %v971
      %v973 = vpop.xlane.xlu0 %972
      %v974 = vrcp.pop 32.0
      %v975 = vmul.f32 %v928, %v974
      %v976 = vmul.f32 %v931, %v974
      %v977 = vmul.f32 %v934, %v974
      %v978 = vmul.f32 %v937, %v974
      %v979 = vmul.f32 %v940, %v974
      %v980 = vmul.f32 %v943, %v974
      %v981 = vmul.f32 %v946, %v974
      %v982 = vmul.f32 %v949, %v974
      %v983 = vmul.f32 %v952, %v974
      %v984 = vmul.f32 %v955, %v974
      %v985 = vmul.f32 %v958, %v974
      %v986 = vmul.f32 %v961, %v974
      %v987 = vmul.f32 %v964, %v974
      %v988 = vmul.f32 %v967, %v974
      %v989 = vmul.f32 %v970, %v974
      %v990 = vmul.f32 %v973, %v974
      %v991 = vsub.f32 %v907, %v975
      %v992 = vsub.f32 %v908, %v976
      %v993 = vsub.f32 %v909, %v977
      %v994 = vsub.f32 %v910, %v978
      %v995 = vsub.f32 %v911, %v979
      %v996 = vsub.f32 %v912, %v980
      %v997 = vsub.f32 %v913, %v981
      %v998 = vsub.f32 %v914, %v982
      %v999 = vsub.f32 %v915, %v983
      %v1000 = vsub.f32 %v916, %v984
      %v1001 = vsub.f32 %v917, %v985
      %v1002 = vsub.f32 %v918, %v986
      %v1003 = vsub.f32 %v919, %v987
      %v1004 = vsub.f32 %v920, %v988
      %v1005 = vsub.f32 %v921, %v989
      %v1006 = vsub.f32 %v922, %v990
      %v1007 = vmul.f32 %v991, %v991
      %v1008 = vmul.f32 %v992, %v992
      %v1009 = vmul.f32 %v993, %v993
      %v1010 = vmul.f32 %v994, %v994
      %v1011 = vmul.f32 %v995, %v995
      %v1012 = vmul.f32 %v996, %v996
      %v1013 = vmul.f32 %v997, %v997
      %v1014 = vmul.f32 %v998, %v998
      %v1015 = vmul.f32 %v999, %v999
      %v1016 = vmul.f32 %v1000, %v1000
      %v1017 = vmul.f32 %v1001, %v1001
      %v1018 = vmul.f32 %v1002, %v1002
      %v1019 = vmul.f32 %v1003, %v1003
      %v1020 = vmul.f32 %v1004, %v1004
      %v1021 = vmul.f32 %v1005, %v1005
      %v1022 = vmul.f32 %v1006, %v1006
      %v1023 = vsel %vm925, %v1007, 0.0
      %1024 = vadd.xlane.f32.xlu0 %v1023
      %v1025 = vpop.xlane.xlu0 %1024
      %v1026 = vsel %vm925, %v1008, 0.0
      %1027 = vadd.xlane.f32.xlu0 %v1026
      %v1028 = vpop.xlane.xlu0 %1027
      %v1029 = vsel %vm925, %v1009, 0.0
      %1030 = vadd.xlane.f32.xlu0 %v1029
      %v1031 = vpop.xlane.xlu0 %1030
      %v1032 = vsel %vm925, %v1010, 0.0
      %1033 = vadd.xlane.f32.xlu0 %v1032
      %v1034 = vpop.xlane.xlu0 %1033
      %v1035 = vsel %vm925, %v1011, 0.0
      %1036 = vadd.xlane.f32.xlu0 %v1035
      %v1037 = vpop.xlane.xlu0 %1036
      %v1038 = vsel %vm925, %v1012, 0.0
      %1039 = vadd.xlane.f32.xlu0 %v1038
      %v1040 = vpop.xlane.xlu0 %1039
      %v1041 = vsel %vm925, %v1013, 0.0
      %1042 = vadd.xlane.f32.xlu0 %v1041
      %v1043 = vpop.xlane.xlu0 %1042
      %v1044 = vsel %vm925, %v1014, 0.0
      %1045 = vadd.xlane.f32.xlu0 %v1044
      %v1046 = vpop.xlane.xlu0 %1045
      %v1047 = vsel %vm925, %v1015, 0.0
      %1048 = vadd.xlane.f32.xlu0 %v1047
      %v1049 = vpop.xlane.xlu0 %1048
      %v1050 = vsel %vm925, %v1016, 0.0
      %1051 = vadd.xlane.f32.xlu0 %v1050
      %v1052 = vpop.xlane.xlu0 %1051
      %v1053 = vsel %vm925, %v1017, 0.0
      %1054 = vadd.xlane.f32.xlu0 %v1053
      %v1055 = vpop.xlane.xlu0 %1054
      %v1056 = vsel %vm925, %v1018, 0.0
      %1057 = vadd.xlane.f32.xlu0 %v1056
      %v1058 = vpop.xlane.xlu0 %1057
      %v1059 = vsel %vm925, %v1019, 0.0
      %1060 = vadd.xlane.f32.xlu0 %v1059
      %v1061 = vpop.xlane.xlu0 %1060
      %v1062 = vsel %vm925, %v1020, 0.0
      %1063 = vadd.xlane.f32.xlu0 %v1062
      %v1064 = vpop.xlane.xlu0 %1063
      %v1065 = vsel %vm925, %v1021, 0.0
      %1066 = vadd.xlane.f32.xlu0 %v1065
      %v1067 = vpop.xlane.xlu0 %1066
      %v1068 = vsel %vm925, %v1022, 0.0
      %1069 = vadd.xlane.f32.xlu0 %v1068
      %v1070 = vpop.xlane.xlu0 %1069
      %v1071 = vmul.f32 %v1025, %v974
      %v1072 = vmul.f32 %v1028, %v974
      %v1073 = vmul.f32 %v1031, %v974
      %v1074 = vmul.f32 %v1034, %v974
      %v1075 = vmul.f32 %v1037, %v974
      %v1076 = vmul.f32 %v1040, %v974
      %v1077 = vmul.f32 %v1043, %v974
      %v1078 = vmul.f32 %v1046, %v974
      %v1079 = vmul.f32 %v1049, %v974
      %v1080 = vmul.f32 %v1052, %v974
      %v1081 = vmul.f32 %v1055, %v974
      %v1082 = vmul.f32 %v1058, %v974
      %v1083 = vmul.f32 %v1061, %v974
      %v1084 = vmul.f32 %v1064, %v974
      %v1085 = vmul.f32 %v1067, %v974
      %v1086 = vmul.f32 %v1070, %v974
      %v1087 = vadd.f32 %v1071, 1e-06
      %v1088 = vadd.f32 %v1072, 1e-06
      %v1089 = vadd.f32 %v1073, 1e-06
      %v1090 = vadd.f32 %v1074, 1e-06
      %v1091 = vadd.f32 %v1075, 1e-06
      %v1092 = vadd.f32 %v1076, 1e-06
      %v1093 = vadd.f32 %v1077, 1e-06
      %v1094 = vadd.f32 %v1078, 1e-06
      %v1095 = vadd.f32 %v1079, 1e-06
      %v1096 = vadd.f32 %v1080, 1e-06
      %v1097 = vadd.f32 %v1081, 1e-06
      %v1098 = vadd.f32 %v1082, 1e-06
      %v1099 = vadd.f32 %v1083, 1e-06
      %v1100 = vadd.f32 %v1084, 1e-06
      %v1101 = vadd.f32 %v1085, 1e-06
      %v1102 = vadd.f32 %v1086, 1e-06
      %v1103 = vrsqrt.pop %v1087
      %v1104 = vrsqrt.pop %v1088
      %v1105 = vrsqrt.pop %v1089
      %v1106 = vrsqrt.pop %v1090
      %v1107 = vrsqrt.pop %v1091
      %v1108 = vrsqrt.pop %v1092
      %v1109 = vrsqrt.pop %v1093
      %v1110 = vrsqrt.pop %v1094
      %v1111 = vrsqrt.pop %v1095
      %v1112 = vrsqrt.pop %v1096
      %v1113 = vrsqrt.pop %v1097
      %v1114 = vrsqrt.pop %v1098
      %v1115 = vrsqrt.pop %v1099
      %v1116 = vrsqrt.pop %v1100
      %v1117 = vrsqrt.pop %v1101
      %v1118 = vrsqrt.pop %v1102
      %v1119 = vmul.f32 %v991, %v1103
      %v1120 = vmul.f32 %v992, %v1104
      %v1121 = vmul.f32 %v993, %v1105
      %v1122 = vmul.f32 %v994, %v1106
      %v1123 = vmul.f32 %v995, %v1107
      %v1124 = vmul.f32 %v996, %v1108
      %v1125 = vmul.f32 %v997, %v1109
      %v1126 = vmul.f32 %v998, %v1110
      %v1127 = vmul.f32 %v999, %v1111
      %v1128 = vmul.f32 %v1000, %v1112
      %v1129 = vmul.f32 %v1001, %v1113
      %v1130 = vmul.f32 %v1002, %v1114
      %v1131 = vmul.f32 %v1003, %v1115
      %v1132 = vmul.f32 %v1004, %v1116
      %v1133 = vmul.f32 %v1005, %v1117
      %v1134 = vmul.f32 %v1006, %v1118
      %v1136 = vlaneseq
      %v1137 = vshrl.u32 %v1136, 7
      %v1138 = vsub.s32 0, %v1137
      %v1139 = vrot.slane %v923, %v1138
      %v1141 = vmul.f32 %v1119, %v1139
      %v1142 = vmul.f32 %v1120, %v1139
      %v1143 = vmul.f32 %v1121, %v1139
      %v1144 = vmul.f32 %v1122, %v1139
      %v1145 = vmul.f32 %v1123, %v1139
      %v1146 = vmul.f32 %v1124, %v1139
      %v1147 = vmul.f32 %v1125, %v1139
      %v1148 = vmul.f32 %v1126, %v1139
      %v1149 = vmul.f32 %v1127, %v1139
      %v1150 = vmul.f32 %v1128, %v1139
      %v1151 = vmul.f32 %v1129, %v1139
      %v1152 = vmul.f32 %v1130, %v1139
      %v1153 = vmul.f32 %v1131, %v1139
      %v1154 = vmul.f32 %v1132, %v1139
      %v1155 = vmul.f32 %v1133, %v1139
      %v1156 = vmul.f32 %v1134, %v1139
      %v1158 = vlaneseq
      %v1159 = vshrl.u32 %v1158, 7
      %v1160 = vsub.s32 0, %v1159
      %v1161 = vrot.slane %v924, %v1160
      %v1163 = vadd.f32 %v1141, %v1161
      %v1164 = vadd.f32 %v1142, %v1161
      %v1165 = vadd.f32 %v1143, %v1161
      %v1166 = vadd.f32 %v1144, %v1161
      %v1167 = vadd.f32 %v1145, %v1161
      %v1168 = vadd.f32 %v1146, %v1161
      %v1169 = vadd.f32 %v1147, %v1161
      %v1170 = vadd.f32 %v1148, %v1161
      %v1171 = vadd.f32 %v1149, %v1161
      %v1172 = vadd.f32 %v1150, %v1161
      %v1173 = vadd.f32 %v1151, %v1161
      %v1174 = vadd.f32 %v1152, %v1161
      %v1175 = vadd.f32 %v1153, %v1161
      %v1176 = vadd.f32 %v1154, %v1161
      %v1177 = vadd.f32 %v1155, %v1161
      %v1178 = vadd.f32 %v1156, %v1161
      %1179 = vxpose.xlu0.b32.start [1/16] %v1163, 128
      %1180 = vxpose.xlu0.b32.cont [2/16] %v1164, 128
      %1181 = vxpose.xlu0.b32.cont [3/16] %v1165, 128
      %1182 = vxpose.xlu0.b32.cont [4/16] %v1166, 128
      %1183 = vxpose.xlu0.b32.cont [5/16] %v1167, 128
      %1184 = vxpose.xlu0.b32.cont [6/16] %v1168, 128
      %1185 = vxpose.xlu0.b32.cont [7/16] %v1169, 128
      %1186 = vxpose.xlu0.b32.cont [8/16] %v1170, 128
      %1187 = vxpose.xlu0.b32.cont [9/16] %v1171, 128
      %1188 = vxpose.xlu0.b32.cont [10/16] %v1172, 128
      %1189 = vxpose.xlu0.b32.cont [11/16] %v1173, 128
      %1190 = vxpose.xlu0.b32.cont [12/16] %v1174, 128
      %1191 = vxpose.xlu0.b32.cont [13/16] %v1175, 128
      %1192 = vxpose.xlu0.b32.cont [14/16] %v1176, 128
      %1193 = vxpose.xlu0.b32.cont [15/16] %v1177, 128
      %1194 = vxpose.xlu0.b32.end [16/16] %v1178, 128
      %v1195 = vpop.trf.xlu0
      %v1196 = vpop.trf.xlu0
      %v1197 = vpop.trf.xlu0
      %v1198 = vpop.trf.xlu0
      %v1199 = vpop.trf.xlu0
      %v1200 = vpop.trf.xlu0
      %v1201 = vpop.trf.xlu0
      %v1202 = vpop.trf.xlu0
      %v1203 = vpop.trf.xlu0
      %v1204 = vpop.trf.xlu0
      %v1205 = vpop.trf.xlu0
      %v1206 = vpop.trf.xlu0
      %v1207 = vpop.trf.xlu0
      %v1208 = vpop.trf.xlu0
      %v1209 = vpop.trf.xlu0
      %v1210 = vpop.trf.xlu0
      %v1211 = vpack.c.bf16 %v1196, %v1195
      %v1212 = vpack.c.bf16 %v1198, %v1197
      %v1213 = vld [vmem:[%s806] sm:$0xf]
      %v1214 = vld [vmem:[%s806 + $0x4] sm:$0xf]
      %v1215 = vld [vmem:[%s806 + $0x8] sm:$0xf]
      %v1216 = vld [vmem:[%s806 + $0xc] sm:$0xf]
      %v1217 = vld [vmem:[%s811] sm:$0xff]
      %v1218 = vld [vmem:[%s811 + $0x8] sm:$0xff]
      %v1219 = vld [vmem:[%s811 + $0x10] sm:$0xff]
      %v1220 = vld [vmem:[%s811 + $0x18] sm:$0xff]
      %1222 = vset.pattern.permute.xlu0 0
      %1223 = vperm.xlu0 %1222, %v1217
      %v1224 = vpop.permute.xlu0 %1223
      %1227 = vset.pattern.permute.xlu0 0
      %1228 = vperm.xlu0 %1227, %v1218
      %v1229 = vpop.permute.xlu0 %1228
      %1232 = vset.pattern.permute.xlu0 0
      %1233 = vperm.xlu0 %1232, %v1219
      %v1234 = vpop.permute.xlu0 %1233
      %1237 = vset.pattern.permute.xlu0 0
      %1238 = vperm.xlu0 %1237, %v1220
      %v1239 = vpop.permute.xlu0 %1238
      %v1245 = vunpack.c.l.b16 %v1213
      %v1246 = vunpack.c.l.b16 %v1214
      %v1247 = vunpack.c.l.b16 %v1215
      %v1248 = vunpack.c.l.b16 %v1216
      %v1249 = vpack.c.b16 %v1246, %v1245
      %v1250 = vpack.c.b16 %v1248, %v1247
      %v1252 = vsel %vm925, %v1249, 0
      %v1255 = vsel %vm925, %v1250, 0
      %1257 = vmatprep.subr.bf16.mxu0 0
      %1258 = vmatpush1.bf16.msra.mxu0 %v1211
      %1259 = vmatprep.subr.bf16.mxu0 0
      %1260 = vmatpush1.bf16.msra.mxu0 %v1212
      %1261 = vmatprep.subr.bf16.mxu0 0
      %1262 = vmatpush1.bf16.msra.mxu0 0
      %1263 = vmatprep.subr.bf16.mxu0 0
      %1264 = vmatpush1.bf16.msra.mxu0 0
      %1265 = vmatprep.subr.bf16.mxu0 0
      %1266 = vmatpush1.bf16.msra.mxu0 0
      %1267 = vmatprep.subr.bf16.mxu0 0
      %1268 = vmatpush1.bf16.msra.mxu0 0
      %1269 = vmatprep.subr.bf16.mxu0 0
      %1270 = vmatpush1.bf16.msra.mxu0 0
      %1271 = vmatprep.subr.bf16.mxu0 0
      %1272 = vmatpush1.bf16.msra.mxu0 0
      %1273 = vmatprep.subr.bf16.mxu0 0
      %1274 = vmatpush1.bf16.msra.mxu0 0
      %1275 = vmatprep.subr.bf16.mxu0 0
      %1276 = vmatpush1.bf16.msra.mxu0 0
      %1277 = vmatprep.subr.bf16.mxu0 0
      %1278 = vmatpush1.bf16.msra.mxu0 0
      %1279 = vmatprep.subr.bf16.mxu0 0
      %1280 = vmatpush1.bf16.msra.mxu0 0
      %1281 = vmatprep.subr.bf16.mxu0 0
      %1282 = vmatpush1.bf16.msra.mxu0 0
      %1283 = vmatprep.subr.bf16.mxu0 0
      %1284 = vmatpush1.bf16.msra.mxu0 0
      %1285 = vmatprep.subr.bf16.mxu0 0
      %1286 = vmatpush1.bf16.msra.mxu0 0
      %1287 = vmatprep.subr.bf16.mxu0 0
      %1288 = vmatpush1.bf16.msra.mxu0 0
      %1289 = vmatprep.mubr.bf16.mxu0 0
      %1290 = vmatmul.mubr.bf16.gmra.mrb[0].mxu0 %v1252
      %v1291 = vpop.f32.mrb[0].mxu0
      %v1292 = vadd.f32 %v1224, %v1291
      %v1293 = vpop.f32.mrb[0].mxu0
      %v1294 = vpop.f32.mrb[0].mxu0
      %v1295 = vadd.f32 %v1229, %v1294
      %v1296 = vpop.f32.mrb[0].mxu0
      %1297 = vmatprep.mubr.bf16.mxu0 0
      %1298 = vmatmul.mubr.bf16.gmra.mrb[0].mxu0 %v1255
      %v1299 = vpop.f32.mrb[0].mxu0
      %v1300 = vadd.f32 %v1234, %v1299
      %v1301 = vpop.f32.mrb[0].mxu0
      %v1302 = vpop.f32.mrb[0].mxu0
      %v1303 = vadd.f32 %v1239, %v1302
      %v1304 = vpop.f32.mrb[0].mxu0
      %1305 = vdwg.mxu0
      %v1306 = vld [vmem:[%s816] sm:$0xf]
      %v1307 = vld [vmem:[%s816 + $0x4] sm:$0xf]
      %v1308 = vld [vmem:[%s816 + $0x8] sm:$0xf]
      %v1309 = vld [vmem:[%s816 + $0xc] sm:$0xf]
      %v1310 = vld [vmem:[%s821] sm:$0xff]
      %v1311 = vld [vmem:[%s821 + $0x8] sm:$0xff]
      %v1312 = vld [vmem:[%s821 + $0x10] sm:$0xff]
      %v1313 = vld [vmem:[%s821 + $0x18] sm:$0xff]
      %1315 = vset.pattern.permute.xlu0 0
      %1316 = vperm.xlu0 %1315, %v1310
      %v1317 = vpop.permute.xlu0 %1316
      %1320 = vset.pattern.permute.xlu0 0
      %1321 = vperm.xlu0 %1320, %v1311
      %v1322 = vpop.permute.xlu0 %1321
      %1325 = vset.pattern.permute.xlu0 0
      %1326 = vperm.xlu0 %1325, %v1312
      %v1327 = vpop.permute.xlu0 %1326
      %1330 = vset.pattern.permute.xlu0 0
      %1331 = vperm.xlu0 %1330, %v1313
      %v1332 = vpop.permute.xlu0 %1331
      %v1338 = vunpack.c.l.b16 %v1306
      %v1339 = vunpack.c.l.b16 %v1307
      %v1340 = vunpack.c.l.b16 %v1308
      %v1341 = vunpack.c.l.b16 %v1309
      %v1342 = vpack.c.b16 %v1339, %v1338
      %v1343 = vpack.c.b16 %v1341, %v1340
      %v1345 = vsel %vm925, %v1342, 0
      %v1348 = vsel %vm925, %v1343, 0
      %1350 = vmatprep.subr.bf16.mxu0 0
      %1351 = vmatpush1.bf16.msra.mxu0 %v1211
      %1352 = vmatprep.subr.bf16.mxu0 0
      %1353 = vmatpush1.bf16.msra.mxu0 %v1212
      %1354 = vmatprep.subr.bf16.mxu0 0
      %1355 = vmatpush1.bf16.msra.mxu0 0
      %1356 = vmatprep.subr.bf16.mxu0 0
      %1357 = vmatpush1.bf16.msra.mxu0 0
      %1358 = vmatprep.subr.bf16.mxu0 0
      %1359 = vmatpush1.bf16.msra.mxu0 0
      %1360 = vmatprep.subr.bf16.mxu0 0
      %1361 = vmatpush1.bf16.msra.mxu0 0
      %1362 = vmatprep.subr.bf16.mxu0 0
      %1363 = vmatpush1.bf16.msra.mxu0 0
      %1364 = vmatprep.subr.bf16.mxu0 0
      %1365 = vmatpush1.bf16.msra.mxu0 0
      %1366 = vmatprep.subr.bf16.mxu0 0
      %1367 = vmatpush1.bf16.msra.mxu0 0
      %1368 = vmatprep.subr.bf16.mxu0 0
      %1369 = vmatpush1.bf16.msra.mxu0 0
      %1370 = vmatprep.subr.bf16.mxu0 0
      %1371 = vmatpush1.bf16.msra.mxu0 0
      %1372 = vmatprep.subr.bf16.mxu0 0
      %1373 = vmatpush1.bf16.msra.mxu0 0
      %1374 = vmatprep.subr.bf16.mxu0 0
      %1375 = vmatpush1.bf16.msra.mxu0 0
      %1376 = vmatprep.subr.bf16.mxu0 0
      %1377 = vmatpush1.bf16.msra.mxu0 0
      %1378 = vmatprep.subr.bf16.mxu0 0
      %1379 = vmatpush1.bf16.msra.mxu0 0
      %1380 = vmatprep.subr.bf16.mxu0 0
      %1381 = vmatpush1.bf16.msra.mxu0 0
      %1382 = vmatprep.mubr.bf16.mxu0 0
      %1383 = vmatmul.mubr.bf16.gmra.mrb[0].mxu0 %v1345
      %v1384 = vpop.f32.mrb[0].mxu0
      %v1385 = vadd.f32 %v1317, %v1384
      %v1386 = vpop.f32.mrb[0].mxu0
      %v1387 = vpop.f32.mrb[0].mxu0
      %v1388 = vadd.f32 %v1322, %v1387
      %v1389 = vpop.f32.mrb[0].mxu0
      %1390 = vmatprep.mubr.bf16.mxu0 0
      %1391 = vmatmul.mubr.bf16.gmra.mrb[0].mxu0 %v1348
      %v1392 = vpop.f32.mrb[0].mxu0
      %v1393 = vadd.f32 %v1327, %v1392
      %v1394 = vpop.f32.mrb[0].mxu0
      %v1395 = vpop.f32.mrb[0].mxu0
      %v1396 = vadd.f32 %v1332, %v1395
      %v1397 = vpop.f32.mrb[0].mxu0
      %1398 = vdwg.mxu0
      %v1399 = vld [vmem:[%s826] sm:$0xf]
      %v1400 = vld [vmem:[%s826 + $0x4] sm:$0xf]
      %v1401 = vld [vmem:[%s826 + $0x8] sm:$0xf]
      %v1402 = vld [vmem:[%s826 + $0xc] sm:$0xf]
      %v1403 = vld [vmem:[%s831] sm:$0xff]
      %v1404 = vld [vmem:[%s831 + $0x8] sm:$0xff]
      %v1405 = vld [vmem:[%s831 + $0x10] sm:$0xff]
      %v1406 = vld [vmem:[%s831 + $0x18] sm:$0xff]
      %1408 = vset.pattern.permute.xlu0 0
      %1409 = vperm.xlu0 %1408, %v1403
      %v1410 = vpop.permute.xlu0 %1409
      %1413 = vset.pattern.permute.xlu0 0
      %1414 = vperm.xlu0 %1413, %v1404
      %v1415 = vpop.permute.xlu0 %1414
      %1418 = vset.pattern.permute.xlu0 0
      %1419 = vperm.xlu0 %1418, %v1405
      %v1420 = vpop.permute.xlu0 %1419
      %1423 = vset.pattern.permute.xlu0 0
      %1424 = vperm.xlu0 %1423, %v1406
      %v1425 = vpop.permute.xlu0 %1424
      %v1431 = vunpack.c.l.b16 %v1399
      %v1432 = vunpack.c.l.b16 %v1400
      %v1433 = vunpack.c.l.b16 %v1401
      %v1434 = vunpack.c.l.b16 %v1402
      %v1435 = vpack.c.b16 %v1432, %v1431
      %v1436 = vpack.c.b16 %v1434, %v1433
      %v1438 = vsel %vm925, %v1435, 0
      %v1441 = vsel %vm925, %v1436, 0
      %1443 = vmatprep.subr.bf16.mxu0 0
      %1444 = vmatpush1.bf16.msra.mxu0 %v1211
      %1445 = vmatprep.subr.bf16.mxu0 0
      %1446 = vmatpush1.bf16.msra.mxu0 %v1212
      %1447 = vmatprep.subr.bf16.mxu0 0
      %1448 = vmatpush1.bf16.msra.mxu0 0
      %1449 = vmatprep.subr.bf16.mxu0 0
      %1450 = vmatpush1.bf16.msra.mxu0 0
      %1451 = vmatprep.subr.bf16.mxu0 0
      %1452 = vmatpush1.bf16.msra.mxu0 0
      %1453 = vmatprep.subr.bf16.mxu0 0
      %1454 = vmatpush1.bf16.msra.mxu0 0
      %1455 = vmatprep.subr.bf16.mxu0 0
      %1456 = vmatpush1.bf16.msra.mxu0 0
      %1457 = vmatprep.subr.bf16.mxu0 0
      %1458 = vmatpush1.bf16.msra.mxu0 0
      %1459 = vmatprep.subr.bf16.mxu0 0
      %1460 = vmatpush1.bf16.msra.mxu0 0
      %1461 = vmatprep.subr.bf16.mxu0 0
      %1462 = vmatpush1.bf16.msra.mxu0 0
      %1463 = vmatprep.subr.bf16.mxu0 0
      %1464 = vmatpush1.bf16.msra.mxu0 0
      %1465 = vmatprep.subr.bf16.mxu0 0
      %1466 = vmatpush1.bf16.msra.mxu0 0
      %1467 = vmatprep.subr.bf16.mxu0 0
      %1468 = vmatpush1.bf16.msra.mxu0 0
      %1469 = vmatprep.subr.bf16.mxu0 0
      %1470 = vmatpush1.bf16.msra.mxu0 0
      %1471 = vmatprep.subr.bf16.mxu0 0
      %1472 = vmatpush1.bf16.msra.mxu0 0
      %1473 = vmatprep.subr.bf16.mxu0 0
      %1474 = vmatpush1.bf16.msra.mxu0 0
      %1475 = vmatprep.mubr.bf16.mxu0 0
      %1476 = vmatmul.mubr.bf16.gmra.mrb[0].mxu0 %v1438
      %v1477 = vpop.f32.mrb[0].mxu0
      %v1478 = vadd.f32 %v1410, %v1477
      %v1479 = vpop.f32.mrb[0].mxu0
      %v1480 = vpop.f32.mrb[0].mxu0
      %v1481 = vadd.f32 %v1415, %v1480
      %v1482 = vpop.f32.mrb[0].mxu0
      %1483 = vmatprep.mubr.bf16.mxu0 0
      %1484 = vmatmul.mubr.bf16.gmra.mrb[0].mxu0 %v1441
      %v1485 = vpop.f32.mrb[0].mxu0
      %v1486 = vadd.f32 %v1420, %v1485
      %v1487 = vpop.f32.mrb[0].mxu0
      %v1488 = vpop.f32.mrb[0].mxu0
      %v1489 = vadd.f32 %v1425, %v1488
      %v1490 = vpop.f32.mrb[0].mxu0
      %1491 = vdwg.mxu0
      %v1492 = vpack.c.bf16 %v1292, %v1292
      %v1493 = vpack.c.bf16 %v1295, %v1295
      %v1494 = vpack.c.bf16 %v1300, %v1300
      %v1495 = vpack.c.bf16 %v1303, %v1303
      %v1496 = vpack.c.bf16 %v1385, %v1385
      %v1497 = vpack.c.bf16 %v1388, %v1388
      %v1498 = vpack.c.bf16 %v1393, %v1393
      %v1499 = vpack.c.bf16 %v1396, %v1396
      %v1500 = vpack.c.bf16 %v1478, %v1478
      %v1501 = vpack.c.bf16 %v1481, %v1481
      %v1502 = vpack.c.bf16 %v1486, %v1486
      %v1503 = vpack.c.bf16 %v1489, %v1489
      %1504 = vxpose.xlu0.c.b16.start [1/8] %v1492, 128
      %1505 = vxpose.xlu0.c.b16.cont [2/8] 0, 128
      %1506 = vxpose.xlu0.c.b16.cont [3/8] 0, 128
      %1507 = vxpose.xlu0.c.b16.cont [4/8] 0, 128
      %1508 = vxpose.xlu0.c.b16.cont [5/8] 0, 128
      %1509 = vxpose.xlu0.c.b16.cont [6/8] 0, 128
      %1510 = vxpose.xlu0.c.b16.cont [7/8] 0, 128
      %1511 = vxpose.xlu0.c.b16.end [8/8] 0, 128
      %v1512 = vpop.trf.xlu0
      %v1513 = vpop.trf.xlu0
      %v1514 = vpop.trf.xlu0
      %v1515 = vpop.trf.xlu0
      %v1516 = vpop.trf.xlu0
      %v1517 = vpop.trf.xlu0
      %v1518 = vpop.trf.xlu0
      %v1519 = vpop.trf.xlu0
      %vm1520 = vcmask 64512
      %v1522 = vsel %vm1520, %v1512, 0
      %v1525 = vsel %vm1520, %v1513, 0
      %v1528 = vsel %vm1520, %v1514, 0
      %v1531 = vsel %vm1520, %v1515, 0
      %v1534 = vsel %vm1520, %v1516, 0
      %v1537 = vsel %vm1520, %v1517, 0
      %v1540 = vsel %vm1520, %v1518, 0
      %v1543 = vsel %vm1520, %v1519, 0
      %vm1545 = vcmask 1043456
      %v1547 = vsel %vm1545, %v1496, 0
      %1549 = vmatprep.subr.bf16.mxu0 0
      %1550 = vmatpush1.bf16.msra.mxu0 %v1547
      %1551 = vmatprep.subr.bf16.mxu0 0
      %1552 = vmatpush1.bf16.msra.mxu0 0
      %1553 = vmatprep.subr.bf16.mxu0 0
      %1554 = vmatpush1.bf16.msra.mxu0 0
      %1555 = vmatprep.subr.bf16.mxu0 0
      %1556 = vmatpush1.bf16.msra.mxu0 0
      %1557 = vmatprep.subr.bf16.mxu0 0
      %1558 = vmatpush1.bf16.msra.mxu0 0
      %1559 = vmatprep.subr.bf16.mxu0 0
      %1560 = vmatpush1.bf16.msra.mxu0 0
      %1561 = vmatprep.subr.bf16.mxu0 0
      %1562 = vmatpush1.bf16.msra.mxu0 0
      %1563 = vmatprep.subr.bf16.mxu0 0
      %1564 = vmatpush1.bf16.msra.mxu0 0
      %1565 = vmatprep.subr.bf16.mxu0 0
      %1566 = vmatpush1.bf16.msra.mxu0 0
      %1567 = vmatprep.subr.bf16.mxu0 0
      %1568 = vmatpush1.bf16.msra.mxu0 0
      %1569 = vmatprep.subr.bf16.mxu0 0
      %1570 = vmatpush1.bf16.msra.mxu0 0
      %1571 = vmatprep.subr.bf16.mxu0 0
      %1572 = vmatpush1.bf16.msra.mxu0 0
      %1573 = vmatprep.subr.bf16.mxu0 0
      %1574 = vmatpush1.bf16.msra.mxu0 0
      %1575 = vmatprep.subr.bf16.mxu0 0
      %1576 = vmatpush1.bf16.msra.mxu0 0
      %1577 = vmatprep.subr.bf16.mxu0 0
      %1578 = vmatpush1.bf16.msra.mxu0 0
      %1579 = vmatprep.subr.bf16.mxu0 0
      %1580 = vmatpush1.bf16.msra.mxu0 0
      %1581 = vmatprep.mubr.bf16.mxu0 0
      %1582 = vmatmul.mubr.bf16.gmra.mrb[0].mxu0 %v1522
      %v1583 = vpop.f32.mrb[0].mxu0
      %v1584 = vadd.f32 0.0, %v1583
      %v1585 = vpop.f32.mrb[0].mxu0
      %v1586 = vpop.f32.mrb[0].mxu0
      %v1587 = vadd.f32 0.0, %v1586
      %v1588 = vpop.f32.mrb[0].mxu0
      %1589 = vmatprep.mubr.bf16.mxu0 0
      %1590 = vmatmul.mubr.bf16.gmra.mrb[0].mxu0 %v1525
      %v1591 = vpop.f32.mrb[0].mxu0
      %v1592 = vadd.f32 0.0, %v1591
      %v1593 = vpop.f32.mrb[0].mxu0
      %v1594 = vpop.f32.mrb[0].mxu0
      %v1595 = vadd.f32 0.0, %v1594
      %v1596 = vpop.f32.mrb[0].mxu0
      %1597 = vmatprep.mubr.bf16.mxu0 0
      %1598 = vmatmul.mubr.bf16.gmra.mrb[0].mxu0 %v1528
      %v1599 = vpop.f32.mrb[0].mxu0
      %v1600 = vadd.f32 0.0, %v1599
      %v1601 = vpop.f32.mrb[0].mxu0
      %v1602 = vpop.f32.mrb[0].mxu0
      %v1603 = vadd.f32 0.0, %v1602
      %v1604 = vpop.f32.mrb[0].mxu0
      %1605 = vmatprep.mubr.bf16.mxu0 0
      %1606 = vmatmul.mubr.bf16.gmra.mrb[0].mxu0 %v1531
      %v1607 = vpop.f32.mrb[0].mxu0
      %v1608 = vadd.f32 0.0, %v1607
      %v1609 = vpop.f32.mrb[0].mxu0
      %v1610 = vpop.f32.mrb[0].mxu0
      %v1611 = vadd.f32 0.0, %v1610
      %v1612 = vpop.f32.mrb[0].mxu0
      %1613 = vmatprep.mubr.bf16.mxu0 0
      %1614 = vmatmul.mubr.bf16.gmra.mrb[0].mxu0 %v1534
      %v1615 = vpop.f32.mrb[0].mxu0
      %v1616 = vadd.f32 0.0, %v1615
      %v1617 = vpop.f32.mrb[0].mxu0
      %v1618 = vpop.f32.mrb[0].mxu0
      %v1619 = vadd.f32 0.0, %v1618
      %v1620 = vpop.f32.mrb[0].mxu0
      %1621 = vmatprep.mubr.bf16.mxu0 0
      %1622 = vmatmul.mubr.bf16.gmra.mrb[0].mxu0 %v1537
      %v1623 = vpop.f32.mrb[0].mxu0
      %v1624 = vadd.f32 0.0, %v1623
      %v1625 = vpop.f32.mrb[0].mxu0
      %v1626 = vpop.f32.mrb[0].mxu0
      %v1627 = vadd.f32 0.0, %v1626
      %v1628 = vpop.f32.mrb[0].mxu0
      %1629 = vmatprep.mubr.bf16.mxu0 0
      %1630 = vmatmul.mubr.bf16.gmra.mrb[0].mxu0 %v1540
      %v1631 = vpop.f32.mrb[0].mxu0
      %v1632 = vadd.f32 0.0, %v1631
      %v1633 = vpop.f32.mrb[0].mxu0
      %v1634 = vpop.f32.mrb[0].mxu0
      %v1635 = vadd.f32 0.0, %v1634
      %v1636 = vpop.f32.mrb[0].mxu0
      %1637 = vmatprep.mubr.bf16.mxu0 0
      %1638 = vmatmul.mubr.bf16.gmra.mrb[0].mxu0 %v1543
      %v1639 = vpop.f32.mrb[0].mxu0
      %v1640 = vadd.f32 0.0, %v1639
      %v1641 = vpop.f32.mrb[0].mxu0
      %v1642 = vpop.f32.mrb[0].mxu0
      %v1643 = vadd.f32 0.0, %v1642
      %v1644 = vpop.f32.mrb[0].mxu0
      %1645 = vdwg.mxu0
      %1646 = vxpose.xlu0.c.b16.start [1/8] %v1493, 128
      %1647 = vxpose.xlu0.c.b16.cont [2/8] 0, 128
      %1648 = vxpose.xlu0.c.b16.cont [3/8] 0, 128
      %1649 = vxpose.xlu0.c.b16.cont [4/8] 0, 128
      %1650 = vxpose.xlu0.c.b16.cont [5/8] 0, 128
      %1651 = vxpose.xlu0.c.b16.cont [6/8] 0, 128
      %1652 = vxpose.xlu0.c.b16.cont [7/8] 0, 128
      %1653 = vxpose.xlu0.c.b16.end [8/8] 0, 128
      %v1654 = vpop.trf.xlu0
      %v1655 = vpop.trf.xlu0
      %v1656 = vpop.trf.xlu0
      %v1657 = vpop.trf.xlu0
      %v1658 = vpop.trf.xlu0
      %v1659 = vpop.trf.xlu0
      %v1660 = vpop.trf.xlu0
      %v1661 = vpop.trf.xlu0
      %v1663 = vsel %vm1520, %v1654, 0
      %v1666 = vsel %vm1520, %v1655, 0
      %v1669 = vsel %vm1520, %v1656, 0
      %v1672 = vsel %vm1520, %v1657, 0
      %v1675 = vsel %vm1520, %v1658, 0
      %v1678 = vsel %vm1520, %v1659, 0
      %v1681 = vsel %vm1520, %v1660, 0
      %v1684 = vsel %vm1520, %v1661, 0
      %v1687 = vsel %vm1545, %v1497, 0
      %1689 = vmatprep.subr.bf16.mxu0 0
      %1690 = vmatpush1.bf16.msra.mxu0 %v1687
      %1691 = vmatprep.subr.bf16.mxu0 0
      %1692 = vmatpush1.bf16.msra.mxu0 0
      %1693 = vmatprep.subr.bf16.mxu0 0
      %1694 = vmatpush1.bf16.msra.mxu0 0
      %1695 = vmatprep.subr.bf16.mxu0 0
      %1696 = vmatpush1.bf16.msra.mxu0 0
      %1697 = vmatprep.subr.bf16.mxu0 0
      %1698 = vmatpush1.bf16.msra.mxu0 0
      %1699 = vmatprep.subr.bf16.mxu0 0
      %1700 = vmatpush1.bf16.msra.mxu0 0
      %1701 = vmatprep.subr.bf16.mxu0 0
      %1702 = vmatpush1.bf16.msra.mxu0 0
      %1703 = vmatprep.subr.bf16.mxu0 0
      %1704 = vmatpush1.bf16.msra.mxu0 0
      %1705 = vmatprep.subr.bf16.mxu0 0
      %1706 = vmatpush1.bf16.msra.mxu0 0
      %1707 = vmatprep.subr.bf16.mxu0 0
      %1708 = vmatpush1.bf16.msra.mxu0 0
      %1709 = vmatprep.subr.bf16.mxu0 0
      %1710 = vmatpush1.bf16.msra.mxu0 0
      %1711 = vmatprep.subr.bf16.mxu0 0
      %1712 = vmatpush1.bf16.msra.mxu0 0
      %1713 = vmatprep.subr.bf16.mxu0 0
      %1714 = vmatpush1.bf16.msra.mxu0 0
      %1715 = vmatprep.subr.bf16.mxu0 0
      %1716 = vmatpush1.bf16.msra.mxu0 0
      %1717 = vmatprep.subr.bf16.mxu0 0
      %1718 = vmatpush1.bf16.msra.mxu0 0
      %1719 = vmatprep.subr.bf16.mxu0 0
      %1720 = vmatpush1.bf16.msra.mxu0 0
      %1721 = vmatprep.mubr.bf16.mxu0 0
      %1722 = vmatmul.mubr.bf16.gmra.mrb[0].mxu0 %v1663
      %v1723 = vpop.f32.mrb[0].mxu0
      %v1724 = vadd.f32 0.0, %v1723
      %v1725 = vpop.f32.mrb[0].mxu0
      %v1726 = vpop.f32.mrb[0].mxu0
      %v1727 = vadd.f32 0.0, %v1726
      %v1728 = vpop.f32.mrb[0].mxu0
      %1729 = vmatprep.mubr.bf16.mxu0 0
      %1730 = vmatmul.mubr.bf16.gmra.mrb[0].mxu0 %v1666
      %v1731 = vpop.f32.mrb[0].mxu0
      %v1732 = vadd.f32 0.0, %v1731
      %v1733 = vpop.f32.mrb[0].mxu0
      %v1734 = vpop.f32.mrb[0].mxu0
      %v1735 = vadd.f32 0.0, %v1734
      %v1736 = vpop.f32.mrb[0].mxu0
      %1737 = vmatprep.mubr.bf16.mxu0 0
      %1738 = vmatmul.mubr.bf16.gmra.mrb[0].mxu0 %v1669
      %v1739 = vpop.f32.mrb[0].mxu0
      %v1740 = vadd.f32 0.0, %v1739
      %v1741 = vpop.f32.mrb[0].mxu0
      %v1742 = vpop.f32.mrb[0].mxu0
      %v1743 = vadd.f32 0.0, %v1742
      %v1744 = vpop.f32.mrb[0].mxu0
      %1745 = vmatprep.mubr.bf16.mxu0 0
      %1746 = vmatmul.mubr.bf16.gmra.mrb[0].mxu0 %v1672
      %v1747 = vpop.f32.mrb[0].mxu0
      %v1748 = vadd.f32 0.0, %v1747
      %v1749 = vpop.f32.mrb[0].mxu0
      %v1750 = vpop.f32.mrb[0].mxu0
      %v1751 = vadd.f32 0.0, %v1750
      %v1752 = vpop.f32.mrb[0].mxu0
      %1753 = vmatprep.mubr.bf16.mxu0 0
      %1754 = vmatmul.mubr.bf16.gmra.mrb[0].mxu0 %v1675
      %v1755 = vpop.f32.mrb[0].mxu0
      %v1756 = vadd.f32 0.0, %v1755
      %v1757 = vpop.f32.mrb[0].mxu0
      %v1758 = vpop.f32.mrb[0].mxu0
      %v1759 = vadd.f32 0.0, %v1758
      %v1760 = vpop.f32.mrb[0].mxu0
      %1761 = vmatprep.mubr.bf16.mxu0 0
      %1762 = vmatmul.mubr.bf16.gmra.mrb[0].mxu0 %v1678
      %v1763 = vpop.f32.mrb[0].mxu0
      %v1764 = vadd.f32 0.0, %v1763
      %v1765 = vpop.f32.mrb[0].mxu0
      %v1766 = vpop.f32.mrb[0].mxu0
      %v1767 = vadd.f32 0.0, %v1766
      %v1768 = vpop.f32.mrb[0].mxu0
      %1769 = vmatprep.mubr.bf16.mxu0 0
      %1770 = vmatmul.mubr.bf16.gmra.mrb[0].mxu0 %v1681
      %v1771 = vpop.f32.mrb[0].mxu0
      %v1772 = vadd.f32 0.0, %v1771
      %v1773 = vpop.f32.mrb[0].mxu0
      %v1774 = vpop.f32.mrb[0].mxu0
      %v1775 = vadd.f32 0.0, %v1774
      %v1776 = vpop.f32.mrb[0].mxu0
      %1777 = vmatprep.mubr.bf16.mxu0 0
      %1778 = vmatmul.mubr.bf16.gmra.mrb[0].mxu0 %v1684
      %v1779 = vpop.f32.mrb[0].mxu0
      %v1780 = vadd.f32 0.0, %v1779
      %v1781 = vpop.f32.mrb[0].mxu0
      %v1782 = vpop.f32.mrb[0].mxu0
      %v1783 = vadd.f32 0.0, %v1782
      %v1784 = vpop.f32.mrb[0].mxu0
      %1785 = vdwg.mxu0
      %1786 = vxpose.xlu0.c.b16.start [1/8] %v1494, 128
      %1787 = vxpose.xlu0.c.b16.cont [2/8] 0, 128
      %1788 = vxpose.xlu0.c.b16.cont [3/8] 0, 128
      %1789 = vxpose.xlu0.c.b16.cont [4/8] 0, 128
      %1790 = vxpose.xlu0.c.b16.cont [5/8] 0, 128
      %1791 = vxpose.xlu0.c.b16.cont [6/8] 0, 128
      %1792 = vxpose.xlu0.c.b16.cont [7/8] 0, 128
      %1793 = vxpose.xlu0.c.b16.end [8/8] 0, 128
      %v1794 = vpop.trf.xlu0
      %v1795 = vpop.trf.xlu0
      %v1796 = vpop.trf.xlu0
      %v1797 = vpop.trf.xlu0
      %v1798 = vpop.trf.xlu0
      %v1799 = vpop.trf.xlu0
      %v1800 = vpop.trf.xlu0
      %v1801 = vpop.trf.xlu0
      %v1803 = vsel %vm1520, %v1794, 0
      %v1806 = vsel %vm1520, %v1795, 0
      %v1809 = vsel %vm1520, %v1796, 0
      %v1812 = vsel %vm1520, %v1797, 0
      %v1815 = vsel %vm1520, %v1798, 0
      %v1818 = vsel %vm1520, %v1799, 0
      %v1821 = vsel %vm1520, %v1800, 0
      %v1824 = vsel %vm1520, %v1801, 0
      %v1827 = vsel %vm1545, %v1498, 0
      %1829 = vmatprep.subr.bf16.mxu0 0
      %1830 = vmatpush1.bf16.msra.mxu0 %v1827
      %1831 = vmatprep.subr.bf16.mxu0 0
      %1832 = vmatpush1.bf16.msra.mxu0 0
      %1833 = vmatprep.subr.bf16.mxu0 0
      %1834 = vmatpush1.bf16.msra.mxu0 0
      %1835 = vmatprep.subr.bf16.mxu0 0
      %1836 = vmatpush1.bf16.msra.mxu0 0
      %1837 = vmatprep.subr.bf16.mxu0 0
      %1838 = vmatpush1.bf16.msra.mxu0 0
      %1839 = vmatprep.subr.bf16.mxu0 0
      %1840 = vmatpush1.bf16.msra.mxu0 0
      %1841 = vmatprep.subr.bf16.mxu0 0
      %1842 = vmatpush1.bf16.msra.mxu0 0
      %1843 = vmatprep.subr.bf16.mxu0 0
      %1844 = vmatpush1.bf16.msra.mxu0 0
      %1845 = vmatprep.subr.bf16.mxu0 0
      %1846 = vmatpush1.bf16.msra.mxu0 0
      %1847 = vmatprep.subr.bf16.mxu0 0
      %1848 = vmatpush1.bf16.msra.mxu0 0
      %1849 = vmatprep.subr.bf16.mxu0 0
      %1850 = vmatpush1.bf16.msra.mxu0 0
      %1851 = vmatprep.subr.bf16.mxu0 0
      %1852 = vmatpush1.bf16.msra.mxu0 0
      %1853 = vmatprep.subr.bf16.mxu0 0
      %1854 = vmatpush1.bf16.msra.mxu0 0
      %1855 = vmatprep.subr.bf16.mxu0 0
      %1856 = vmatpush1.bf16.msra.mxu0 0
      %1857 = vmatprep.subr.bf16.mxu0 0
      %1858 = vmatpush1.bf16.msra.mxu0 0
      %1859 = vmatprep.subr.bf16.mxu0 0
      %1860 = vmatpush1.bf16.msra.mxu0 0
      %1861 = vmatprep.mubr.bf16.mxu0 0
      %1862 = vmatmul.mubr.bf16.gmra.mrb[0].mxu0 %v1803
      %v1863 = vpop.f32.mrb[0].mxu0
      %v1864 = vadd.f32 0.0, %v1863
      %v1865 = vpop.f32.mrb[0].mxu0
      %v1866 = vpop.f32.mrb[0].mxu0
      %v1867 = vadd.f32 0.0, %v1866
      %v1868 = vpop.f32.mrb[0].mxu0
      %1869 = vmatprep.mubr.bf16.mxu0 0
      %1870 = vmatmul.mubr.bf16.gmra.mrb[0].mxu0 %v1806
      %v1871 = vpop.f32.mrb[0].mxu0
      %v1872 = vadd.f32 0.0, %v1871
      %v1873 = vpop.f32.mrb[0].mxu0
      %v1874 = vpop.f32.mrb[0].mxu0
      %v1875 = vadd.f32 0.0, %v1874
      %v1876 = vpop.f32.mrb[0].mxu0
      %1877 = vmatprep.mubr.bf16.mxu0 0
      %1878 = vmatmul.mubr.bf16.gmra.mrb[0].mxu0 %v1809
      %v1879 = vpop.f32.mrb[0].mxu0
      %v1880 = vadd.f32 0.0, %v1879
      %v1881 = vpop.f32.mrb[0].mxu0
      %v1882 = vpop.f32.mrb[0].mxu0
      %v1883 = vadd.f32 0.0, %v1882
      %v1884 = vpop.f32.mrb[0].mxu0
      %1885 = vmatprep.mubr.bf16.mxu0 0
      %1886 = vmatmul.mubr.bf16.gmra.mrb[0].mxu0 %v1812
      %v1887 = vpop.f32.mrb[0].mxu0
      %v1888 = vadd.f32 0.0, %v1887
      %v1889 = vpop.f32.mrb[0].mxu0
      %v1890 = vpop.f32.mrb[0].mxu0
      %v1891 = vadd.f32 0.0, %v1890
      %v1892 = vpop.f32.mrb[0].mxu0
      %1893 = vmatprep.mubr.bf16.mxu0 0
      %1894 = vmatmul.mubr.bf16.gmra.mrb[0].mxu0 %v1815
      %v1895 = vpop.f32.mrb[0].mxu0
      %v1896 = vadd.f32 0.0, %v1895
      %v1897 = vpop.f32.mrb[0].mxu0
      %v1898 = vpop.f32.mrb[0].mxu0
      %v1899 = vadd.f32 0.0, %v1898
      %v1900 = vpop.f32.mrb[0].mxu0
      %1901 = vmatprep.mubr.bf16.mxu0 0
      %1902 = vmatmul.mubr.bf16.gmra.mrb[0].mxu0 %v1818
      %v1903 = vpop.f32.mrb[0].mxu0
      %v1904 = vadd.f32 0.0, %v1903
      %v1905 = vpop.f32.mrb[0].mxu0
      %v1906 = vpop.f32.mrb[0].mxu0
      %v1907 = vadd.f32 0.0, %v1906
      %v1908 = vpop.f32.mrb[0].mxu0
      %1909 = vmatprep.mubr.bf16.mxu0 0
      %1910 = vmatmul.mubr.bf16.gmra.mrb[0].mxu0 %v1821
      %v1911 = vpop.f32.mrb[0].mxu0
      %v1912 = vadd.f32 0.0, %v1911
      %v1913 = vpop.f32.mrb[0].mxu0
      %v1914 = vpop.f32.mrb[0].mxu0
      %v1915 = vadd.f32 0.0, %v1914
      %v1916 = vpop.f32.mrb[0].mxu0
      %1917 = vmatprep.mubr.bf16.mxu0 0
      %1918 = vmatmul.mubr.bf16.gmra.mrb[0].mxu0 %v1824
      %v1919 = vpop.f32.mrb[0].mxu0
      %v1920 = vadd.f32 0.0, %v1919
      %v1921 = vpop.f32.mrb[0].mxu0
      %v1922 = vpop.f32.mrb[0].mxu0
      %v1923 = vadd.f32 0.0, %v1922
      %v1924 = vpop.f32.mrb[0].mxu0
      %1925 = vdwg.mxu0
      %1926 = vxpose.xlu0.c.b16.start [1/8] %v1495, 128
      %1927 = vxpose.xlu0.c.b16.cont [2/8] 0, 128
      %1928 = vxpose.xlu0.c.b16.cont [3/8] 0, 128
      %1929 = vxpose.xlu0.c.b16.cont [4/8] 0, 128
      %1930 = vxpose.xlu0.c.b16.cont [5/8] 0, 128
      %1931 = vxpose.xlu0.c.b16.cont [6/8] 0, 128
      %1932 = vxpose.xlu0.c.b16.cont [7/8] 0, 128
      %1933 = vxpose.xlu0.c.b16.end [8/8] 0, 128
      %v1934 = vpop.trf.xlu0
      %v1935 = vpop.trf.xlu0
      %v1936 = vpop.trf.xlu0
      %v1937 = vpop.trf.xlu0
      %v1938 = vpop.trf.xlu0
      %v1939 = vpop.trf.xlu0
      %v1940 = vpop.trf.xlu0
      %v1941 = vpop.trf.xlu0
      %v1943 = vsel %vm1520, %v1934, 0
      %v1946 = vsel %vm1520, %v1935, 0
      %v1949 = vsel %vm1520, %v1936, 0
      %v1952 = vsel %vm1520, %v1937, 0
      %v1955 = vsel %vm1520, %v1938, 0
      %v1958 = vsel %vm1520, %v1939, 0
      %v1961 = vsel %vm1520, %v1940, 0
      %v1964 = vsel %vm1520, %v1941, 0
      %v1967 = vsel %vm1545, %v1499, 0
      %1969 = vmatprep.subr.bf16.mxu0 0
      %1970 = vmatpush1.bf16.msra.mxu0 %v1967
      %1971 = vmatprep.subr.bf16.mxu0 0
      %1972 = vmatpush1.bf16.msra.mxu0 0
      %1973 = vmatprep.subr.bf16.mxu0 0
      %1974 = vmatpush1.bf16.msra.mxu0 0
      %1975 = vmatprep.subr.bf16.mxu0 0
      %1976 = vmatpush1.bf16.msra.mxu0 0
      %1977 = vmatprep.subr.bf16.mxu0 0
      %1978 = vmatpush1.bf16.msra.mxu0 0
      %1979 = vmatprep.subr.bf16.mxu0 0
      %1980 = vmatpush1.bf16.msra.mxu0 0
      %1981 = vmatprep.subr.bf16.mxu0 0
      %1982 = vmatpush1.bf16.msra.mxu0 0
      %1983 = vmatprep.subr.bf16.mxu0 0
      %1984 = vmatpush1.bf16.msra.mxu0 0
      %1985 = vmatprep.subr.bf16.mxu0 0
      %1986 = vmatpush1.bf16.msra.mxu0 0
      %1987 = vmatprep.subr.bf16.mxu0 0
      %1988 = vmatpush1.bf16.msra.mxu0 0
      %1989 = vmatprep.subr.bf16.mxu0 0
      %1990 = vmatpush1.bf16.msra.mxu0 0
      %1991 = vmatprep.subr.bf16.mxu0 0
      %1992 = vmatpush1.bf16.msra.mxu0 0
      %1993 = vmatprep.subr.bf16.mxu0 0
      %1994 = vmatpush1.bf16.msra.mxu0 0
      %1995 = vmatprep.subr.bf16.mxu0 0
      %1996 = vmatpush1.bf16.msra.mxu0 0
      %1997 = vmatprep.subr.bf16.mxu0 0
      %1998 = vmatpush1.bf16.msra.mxu0 0
      %1999 = vmatprep.subr.bf16.mxu0 0
      %2000 = vmatpush1.bf16.msra.mxu0 0
      %2001 = vmatprep.mubr.bf16.mxu0 0
      %2002 = vmatmul.mubr.bf16.gmra.mrb[0].mxu0 %v1943
      %v2003 = vpop.f32.mrb[0].mxu0
      %v2004 = vadd.f32 0.0, %v2003
      %v2005 = vpop.f32.mrb[0].mxu0
      %v2006 = vpop.f32.mrb[0].mxu0
      %v2007 = vadd.f32 0.0, %v2006
      %v2008 = vpop.f32.mrb[0].mxu0
      %2009 = vmatprep.mubr.bf16.mxu0 0
      %2010 = vmatmul.mubr.bf16.gmra.mrb[0].mxu0 %v1946
      %v2011 = vpop.f32.mrb[0].mxu0
      %v2012 = vadd.f32 0.0, %v2011
      %v2013 = vpop.f32.mrb[0].mxu0
      %v2014 = vpop.f32.mrb[0].mxu0
      %v2015 = vadd.f32 0.0, %v2014
      %v2016 = vpop.f32.mrb[0].mxu0
      %2017 = vmatprep.mubr.bf16.mxu0 0
      %2018 = vmatmul.mubr.bf16.gmra.mrb[0].mxu0 %v1949
      %v2019 = vpop.f32.mrb[0].mxu0
      %v2020 = vadd.f32 0.0, %v2019
      %v2021 = vpop.f32.mrb[0].mxu0
      %v2022 = vpop.f32.mrb[0].mxu0
      %v2023 = vadd.f32 0.0, %v2022
      %v2024 = vpop.f32.mrb[0].mxu0
      %2025 = vmatprep.mubr.bf16.mxu0 0
      %2026 = vmatmul.mubr.bf16.gmra.mrb[0].mxu0 %v1952
      %v2027 = vpop.f32.mrb[0].mxu0
      %v2028 = vadd.f32 0.0, %v2027
      %v2029 = vpop.f32.mrb[0].mxu0
      %v2030 = vpop.f32.mrb[0].mxu0
      %v2031 = vadd.f32 0.0, %v2030
      %v2032 = vpop.f32.mrb[0].mxu0
      %2033 = vmatprep.mubr.bf16.mxu0 0
      %2034 = vmatmul.mubr.bf16.gmra.mrb[0].mxu0 %v1955
      %v2035 = vpop.f32.mrb[0].mxu0
      %v2036 = vadd.f32 0.0, %v2035
      %v2037 = vpop.f32.mrb[0].mxu0
      %v2038 = vpop.f32.mrb[0].mxu0
      %v2039 = vadd.f32 0.0, %v2038
      %v2040 = vpop.f32.mrb[0].mxu0
      %2041 = vmatprep.mubr.bf16.mxu0 0
      %2042 = vmatmul.mubr.bf16.gmra.mrb[0].mxu0 %v1958
      %v2043 = vpop.f32.mrb[0].mxu0
      %v2044 = vadd.f32 0.0, %v2043
      %v2045 = vpop.f32.mrb[0].mxu0
      %v2046 = vpop.f32.mrb[0].mxu0
      %v2047 = vadd.f32 0.0, %v2046
      %v2048 = vpop.f32.mrb[0].mxu0
      %2049 = vmatprep.mubr.bf16.mxu0 0
      %2050 = vmatmul.mubr.bf16.gmra.mrb[0].mxu0 %v1961
      %v2051 = vpop.f32.mrb[0].mxu0
      %v2052 = vadd.f32 0.0, %v2051
      %v2053 = vpop.f32.mrb[0].mxu0
      %v2054 = vpop.f32.mrb[0].mxu0
      %v2055 = vadd.f32 0.0, %v2054
      %v2056 = vpop.f32.mrb[0].mxu0
      %2057 = vmatprep.mubr.bf16.mxu0 0
      %2058 = vmatmul.mubr.bf16.gmra.mrb[0].mxu0 %v1964
      %v2059 = vpop.f32.mrb[0].mxu0
      %v2060 = vadd.f32 0.0, %v2059
      %v2061 = vpop.f32.mrb[0].mxu0
      %v2062 = vpop.f32.mrb[0].mxu0
      %v2063 = vadd.f32 0.0, %v2062
      %v2064 = vpop.f32.mrb[0].mxu0
      %2065 = vdwg.mxu0
      %v2066 = vmul.f32 %v1584, 0.35355338
      %v2067 = vmul.f32 %v1587, 0.35355338
      %v2068 = vmul.f32 %v1592, 0.35355338
      %v2069 = vmul.f32 %v1595, 0.35355338
      %v2070 = vmul.f32 %v1600, 0.35355338
      %v2071 = vmul.f32 %v1603, 0.35355338
      %v2072 = vmul.f32 %v1608, 0.35355338
      %v2073 = vmul.f32 %v1611, 0.35355338
      %v2074 = vmul.f32 %v1616, 0.35355338
      %v2075 = vmul.f32 %v1619, 0.35355338
      %v2076 = vmul.f32 %v1624, 0.35355338
      %v2077 = vmul.f32 %v1627, 0.35355338
      %v2078 = vmul.f32 %v1632, 0.35355338
      %v2079 = vmul.f32 %v1635, 0.35355338
      %v2080 = vmul.f32 %v1640, 0.35355338
      %v2081 = vmul.f32 %v1643, 0.35355338
      %v2082 = vmul.f32 %v1724, 0.35355338
      %v2083 = vmul.f32 %v1727, 0.35355338
      %v2084 = vmul.f32 %v1732, 0.35355338
      %v2085 = vmul.f32 %v1735, 0.35355338
      %v2086 = vmul.f32 %v1740, 0.35355338
      %v2087 = vmul.f32 %v1743, 0.35355338
      %v2088 = vmul.f32 %v1748, 0.35355338
      %v2089 = vmul.f32 %v1751, 0.35355338
      %v2090 = vmul.f32 %v1756, 0.35355338
      %v2091 = vmul.f32 %v1759, 0.35355338
      %v2092 = vmul.f32 %v1764, 0.35355338
      %v2093 = vmul.f32 %v1767, 0.35355338
      %v2094 = vmul.f32 %v1772, 0.35355338
      %v2095 = vmul.f32 %v1775, 0.35355338
      %v2096 = vmul.f32 %v1780, 0.35355338
      %v2097 = vmul.f32 %v1783, 0.35355338
      %v2098 = vmul.f32 %v1864, 0.35355338
      %v2099 = vmul.f32 %v1867, 0.35355338
      %v2100 = vmul.f32 %v1872, 0.35355338
      %v2101 = vmul.f32 %v1875, 0.35355338
      %v2102 = vmul.f32 %v1880, 0.35355338
      %v2103 = vmul.f32 %v1883, 0.35355338
      %v2104 = vmul.f32 %v1888, 0.35355338
      %v2105 = vmul.f32 %v1891, 0.35355338
      %v2106 = vmul.f32 %v1896, 0.35355338
      %v2107 = vmul.f32 %v1899, 0.35355338
      %v2108 = vmul.f32 %v1904, 0.35355338
      %v2109 = vmul.f32 %v1907, 0.35355338
      %v2110 = vmul.f32 %v1912, 0.35355338
      %v2111 = vmul.f32 %v1915, 0.35355338
      %v2112 = vmul.f32 %v1920, 0.35355338
      %v2113 = vmul.f32 %v1923, 0.35355338
      %v2114 = vmul.f32 %v2004, 0.35355338
      %v2115 = vmul.f32 %v2007, 0.35355338
      %v2116 = vmul.f32 %v2012, 0.35355338
      %v2117 = vmul.f32 %v2015, 0.35355338
      %v2118 = vmul.f32 %v2020, 0.35355338
      %v2119 = vmul.f32 %v2023, 0.35355338
      %v2120 = vmul.f32 %v2028, 0.35355338
      %v2121 = vmul.f32 %v2031, 0.35355338
      %v2122 = vmul.f32 %v2036, 0.35355338
      %v2123 = vmul.f32 %v2039, 0.35355338
      %v2124 = vmul.f32 %v2044, 0.35355338
      %v2125 = vmul.f32 %v2047, 0.35355338
      %v2126 = vmul.f32 %v2052, 0.35355338
      %v2127 = vmul.f32 %v2055, 0.35355338
      %v2128 = vmul.f32 %v2060, 0.35355338
      %v2129 = vmul.f32 %v2063, 0.35355338
      %v2130 = vlaneseq
      %v2131 = vand.u32 %v2130, 127
      %vm2132 = vcmp.lt.s32.totalorder %v2131, 33
      %v2133 = vsel %vm2132, 0.0, -1e+30
      %v2134 = vadd.f32 %v2066, %v2133
      %v2135 = vadd.f32 %v2067, %v2133
      %v2136 = vadd.f32 %v2068, %v2133
      %v2137 = vadd.f32 %v2069, %v2133
      %v2138 = vadd.f32 %v2070, %v2133
      %v2139 = vadd.f32 %v2071, %v2133
      %v2140 = vadd.f32 %v2072, %v2133
      %v2141 = vadd.f32 %v2073, %v2133
      %v2142 = vadd.f32 %v2074, %v2133
      %v2143 = vadd.f32 %v2075, %v2133
      %v2144 = vadd.f32 %v2076, %v2133
      %v2145 = vadd.f32 %v2077, %v2133
      %v2146 = vadd.f32 %v2078, %v2133
      %v2147 = vadd.f32 %v2079, %v2133
      %v2148 = vadd.f32 %v2080, %v2133
      %v2149 = vadd.f32 %v2081, %v2133
      %v2150 = vadd.f32 %v2082, %v2133
      %v2151 = vadd.f32 %v2083, %v2133
      %v2152 = vadd.f32 %v2084, %v2133
      %v2153 = vadd.f32 %v2085, %v2133
      %v2154 = vadd.f32 %v2086, %v2133
      %v2155 = vadd.f32 %v2087, %v2133
      %v2156 = vadd.f32 %v2088, %v2133
      %v2157 = vadd.f32 %v2089, %v2133
      %v2158 = vadd.f32 %v2090, %v2133
      %v2159 = vadd.f32 %v2091, %v2133
      %v2160 = vadd.f32 %v2092, %v2133
      %v2161 = vadd.f32 %v2093, %v2133
      %v2162 = vadd.f32 %v2094, %v2133
      %v2163 = vadd.f32 %v2095, %v2133
      %v2164 = vadd.f32 %v2096, %v2133
      %v2165 = vadd.f32 %v2097, %v2133
      %v2166 = vadd.f32 %v2098, %v2133
      %v2167 = vadd.f32 %v2099, %v2133
      %v2168 = vadd.f32 %v2100, %v2133
      %v2169 = vadd.f32 %v2101, %v2133
      %v2170 = vadd.f32 %v2102, %v2133
      %v2171 = vadd.f32 %v2103, %v2133
      %v2172 = vadd.f32 %v2104, %v2133
      %v2173 = vadd.f32 %v2105, %v2133
      %v2174 = vadd.f32 %v2106, %v2133
      %v2175 = vadd.f32 %v2107, %v2133
      %v2176 = vadd.f32 %v2108, %v2133
      %v2177 = vadd.f32 %v2109, %v2133
      %v2178 = vadd.f32 %v2110, %v2133
      %v2179 = vadd.f32 %v2111, %v2133
      %v2180 = vadd.f32 %v2112, %v2133
      %v2181 = vadd.f32 %v2113, %v2133
      %v2182 = vadd.f32 %v2114, %v2133
      %v2183 = vadd.f32 %v2115, %v2133
      %v2184 = vadd.f32 %v2116, %v2133
      %v2185 = vadd.f32 %v2117, %v2133
      %v2186 = vadd.f32 %v2118, %v2133
      %v2187 = vadd.f32 %v2119, %v2133
      %v2188 = vadd.f32 %v2120, %v2133
      %v2189 = vadd.f32 %v2121, %v2133
      %v2190 = vadd.f32 %v2122, %v2133
      %v2191 = vadd.f32 %v2123, %v2133
      %v2192 = vadd.f32 %v2124, %v2133
      %v2193 = vadd.f32 %v2125, %v2133
      %v2194 = vadd.f32 %v2126, %v2133
      %v2195 = vadd.f32 %v2127, %v2133
      %v2196 = vadd.f32 %v2128, %v2133
      %v2197 = vadd.f32 %v2129, %v2133
      %2198 = vmax.xlane.f32.xlu0 %v2134
      %v2199 = vpop.xlane.xlu0 %2198
      %2200 = vmax.xlane.f32.xlu0 %v2135
      %v2201 = vpop.xlane.xlu0 %2200
      %2202 = vmax.xlane.f32.xlu0 %v2136
      %v2203 = vpop.xlane.xlu0 %2202
      %2204 = vmax.xlane.f32.xlu0 %v2137
      %v2205 = vpop.xlane.xlu0 %2204
      %2206 = vmax.xlane.f32.xlu0 %v2138
      %v2207 = vpop.xlane.xlu0 %2206
      %2208 = vmax.xlane.f32.xlu0 %v2139
      %v2209 = vpop.xlane.xlu0 %2208
      %2210 = vmax.xlane.f32.xlu0 %v2140
      %v2211 = vpop.xlane.xlu0 %2210
      %2212 = vmax.xlane.f32.xlu0 %v2141
      %v2213 = vpop.xlane.xlu0 %2212
      %2214 = vmax.xlane.f32.xlu0 %v2142
      %v2215 = vpop.xlane.xlu0 %2214
      %2216 = vmax.xlane.f32.xlu0 %v2143
      %v2217 = vpop.xlane.xlu0 %2216
      %2218 = vmax.xlane.f32.xlu0 %v2144
      %v2219 = vpop.xlane.xlu0 %2218
      %2220 = vmax.xlane.f32.xlu0 %v2145
      %v2221 = vpop.xlane.xlu0 %2220
      %2222 = vmax.xlane.f32.xlu0 %v2146
      %v2223 = vpop.xlane.xlu0 %2222
      %2224 = vmax.xlane.f32.xlu0 %v2147
      %v2225 = vpop.xlane.xlu0 %2224
      %2226 = vmax.xlane.f32.xlu0 %v2148
      %v2227 = vpop.xlane.xlu0 %2226
      %2228 = vmax.xlane.f32.xlu0 %v2149
      %v2229 = vpop.xlane.xlu0 %2228
      %2230 = vmax.xlane.f32.xlu0 %v2150
      %v2231 = vpop.xlane.xlu0 %2230
      %2232 = vmax.xlane.f32.xlu0 %v2151
      %v2233 = vpop.xlane.xlu0 %2232
      %2234 = vmax.xlane.f32.xlu0 %v2152
      %v2235 = vpop.xlane.xlu0 %2234
      %2236 = vmax.xlane.f32.xlu0 %v2153
      %v2237 = vpop.xlane.xlu0 %2236
      %2238 = vmax.xlane.f32.xlu0 %v2154
      %v2239 = vpop.xlane.xlu0 %2238
      %2240 = vmax.xlane.f32.xlu0 %v2155
      %v2241 = vpop.xlane.xlu0 %2240
      %2242 = vmax.xlane.f32.xlu0 %v2156
      %v2243 = vpop.xlane.xlu0 %2242
      %2244 = vmax.xlane.f32.xlu0 %v2157
      %v2245 = vpop.xlane.xlu0 %2244
      %2246 = vmax.xlane.f32.xlu0 %v2158
      %v2247 = vpop.xlane.xlu0 %2246
      %2248 = vmax.xlane.f32.xlu0 %v2159
      %v2249 = vpop.xlane.xlu0 %2248
      %2250 = vmax.xlane.f32.xlu0 %v2160
      %v2251 = vpop.xlane.xlu0 %2250
      %2252 = vmax.xlane.f32.xlu0 %v2161
      %v2253 = vpop.xlane.xlu0 %2252
      %2254 = vmax.xlane.f32.xlu0 %v2162
      %v2255 = vpop.xlane.xlu0 %2254
      %2256 = vmax.xlane.f32.xlu0 %v2163
      %v2257 = vpop.xlane.xlu0 %2256
      %2258 = vmax.xlane.f32.xlu0 %v2164
      %v2259 = vpop.xlane.xlu0 %2258
      %2260 = vmax.xlane.f32.xlu0 %v2165
      %v2261 = vpop.xlane.xlu0 %2260
      %2262 = vmax.xlane.f32.xlu0 %v2166
      %v2263 = vpop.xlane.xlu0 %2262
      %2264 = vmax.xlane.f32.xlu0 %v2167
      %v2265 = vpop.xlane.xlu0 %2264
      %2266 = vmax.xlane.f32.xlu0 %v2168
      %v2267 = vpop.xlane.xlu0 %2266
      %2268 = vmax.xlane.f32.xlu0 %v2169
      %v2269 = vpop.xlane.xlu0 %2268
      %2270 = vmax.xlane.f32.xlu0 %v2170
      %v2271 = vpop.xlane.xlu0 %2270
      %2272 = vmax.xlane.f32.xlu0 %v2171
      %v2273 = vpop.xlane.xlu0 %2272
      %2274 = vmax.xlane.f32.xlu0 %v2172
      %v2275 = vpop.xlane.xlu0 %2274
      %2276 = vmax.xlane.f32.xlu0 %v2173
      %v2277 = vpop.xlane.xlu0 %2276
      %2278 = vmax.xlane.f32.xlu0 %v2174
      %v2279 = vpop.xlane.xlu0 %2278
      %2280 = vmax.xlane.f32.xlu0 %v2175
      %v2281 = vpop.xlane.xlu0 %2280
      %2282 = vmax.xlane.f32.xlu0 %v2176
      %v2283 = vpop.xlane.xlu0 %2282
      %2284 = vmax.xlane.f32.xlu0 %v2177
      %v2285 = vpop.xlane.xlu0 %2284
      %2286 = vmax.xlane.f32.xlu0 %v2178
      %v2287 = vpop.xlane.xlu0 %2286
      %2288 = vmax.xlane.f32.xlu0 %v2179
      %v2289 = vpop.xlane.xlu0 %2288
      %2290 = vmax.xlane.f32.xlu0 %v2180
      %v2291 = vpop.xlane.xlu0 %2290
      %2292 = vmax.xlane.f32.xlu0 %v2181
      %v2293 = vpop.xlane.xlu0 %2292
      %2294 = vmax.xlane.f32.xlu0 %v2182
      %v2295 = vpop.xlane.xlu0 %2294
      %2296 = vmax.xlane.f32.xlu0 %v2183
      %v2297 = vpop.xlane.xlu0 %2296
      %2298 = vmax.xlane.f32.xlu0 %v2184
      %v2299 = vpop.xlane.xlu0 %2298
      %2300 = vmax.xlane.f32.xlu0 %v2185
      %v2301 = vpop.xlane.xlu0 %2300
      %2302 = vmax.xlane.f32.xlu0 %v2186
      %v2303 = vpop.xlane.xlu0 %2302
      %2304 = vmax.xlane.f32.xlu0 %v2187
      %v2305 = vpop.xlane.xlu0 %2304
      %2306 = vmax.xlane.f32.xlu0 %v2188
      %v2307 = vpop.xlane.xlu0 %2306
      %2308 = vmax.xlane.f32.xlu0 %v2189
      %v2309 = vpop.xlane.xlu0 %2308
      %2310 = vmax.xlane.f32.xlu0 %v2190
      %v2311 = vpop.xlane.xlu0 %2310
      %2312 = vmax.xlane.f32.xlu0 %v2191
      %v2313 = vpop.xlane.xlu0 %2312
      %2314 = vmax.xlane.f32.xlu0 %v2192
      %v2315 = vpop.xlane.xlu0 %2314
      %2316 = vmax.xlane.f32.xlu0 %v2193
      %v2317 = vpop.xlane.xlu0 %2316
      %2318 = vmax.xlane.f32.xlu0 %v2194
      %v2319 = vpop.xlane.xlu0 %2318
      %2320 = vmax.xlane.f32.xlu0 %v2195
      %v2321 = vpop.xlane.xlu0 %2320
      %2322 = vmax.xlane.f32.xlu0 %v2196
      %v2323 = vpop.xlane.xlu0 %2322
      %2324 = vmax.xlane.f32.xlu0 %v2197
      %v2325 = vpop.xlane.xlu0 %2324
      %v2326 = vsub.f32 %v2134, %v2199
      %v2327 = vsub.f32 %v2135, %v2201
      %v2328 = vsub.f32 %v2136, %v2203
      %v2329 = vsub.f32 %v2137, %v2205
      %v2330 = vsub.f32 %v2138, %v2207
      %v2331 = vsub.f32 %v2139, %v2209
      %v2332 = vsub.f32 %v2140, %v2211
      %v2333 = vsub.f32 %v2141, %v2213
      %v2334 = vsub.f32 %v2142, %v2215
      %v2335 = vsub.f32 %v2143, %v2217
      %v2336 = vsub.f32 %v2144, %v2219
      %v2337 = vsub.f32 %v2145, %v2221
      %v2338 = vsub.f32 %v2146, %v2223
      %v2339 = vsub.f32 %v2147, %v2225
      %v2340 = vsub.f32 %v2148, %v2227
      %v2341 = vsub.f32 %v2149, %v2229
      %v2342 = vsub.f32 %v2150, %v2231
      %v2343 = vsub.f32 %v2151, %v2233
      %v2344 = vsub.f32 %v2152, %v2235
      %v2345 = vsub.f32 %v2153, %v2237
      %v2346 = vsub.f32 %v2154, %v2239
      %v2347 = vsub.f32 %v2155, %v2241
      %v2348 = vsub.f32 %v2156, %v2243
      %v2349 = vsub.f32 %v2157, %v2245
      %v2350 = vsub.f32 %v2158, %v2247
      %v2351 = vsub.f32 %v2159, %v2249
      %v2352 = vsub.f32 %v2160, %v2251
      %v2353 = vsub.f32 %v2161, %v2253
      %v2354 = vsub.f32 %v2162, %v2255
      %v2355 = vsub.f32 %v2163, %v2257
      %v2356 = vsub.f32 %v2164, %v2259
      %v2357 = vsub.f32 %v2165, %v2261
      %v2358 = vsub.f32 %v2166, %v2263
      %v2359 = vsub.f32 %v2167, %v2265
      %v2360 = vsub.f32 %v2168, %v2267
      %v2361 = vsub.f32 %v2169, %v2269
      %v2362 = vsub.f32 %v2170, %v2271
      %v2363 = vsub.f32 %v2171, %v2273
      %v2364 = vsub.f32 %v2172, %v2275
      %v2365 = vsub.f32 %v2173, %v2277
      %v2366 = vsub.f32 %v2174, %v2279
      %v2367 = vsub.f32 %v2175, %v2281
      %v2368 = vsub.f32 %v2176, %v2283
      %v2369 = vsub.f32 %v2177, %v2285
      %v2370 = vsub.f32 %v2178, %v2287
      %v2371 = vsub.f32 %v2179, %v2289
      %v2372 = vsub.f32 %v2180, %v2291
      %v2373 = vsub.f32 %v2181, %v2293
      %v2374 = vsub.f32 %v2182, %v2295
      %v2375 = vsub.f32 %v2183, %v2297
      %v2376 = vsub.f32 %v2184, %v2299
      %v2377 = vsub.f32 %v2185, %v2301
      %v2378 = vsub.f32 %v2186, %v2303
      %v2379 = vsub.f32 %v2187, %v2305
      %v2380 = vsub.f32 %v2188, %v2307
      %v2381 = vsub.f32 %v2189, %v2309
      %v2382 = vsub.f32 %v2190, %v2311
      %v2383 = vsub.f32 %v2191, %v2313
      %v2384 = vsub.f32 %v2192, %v2315
      %v2385 = vsub.f32 %v2193, %v2317
      %v2386 = vsub.f32 %v2194, %v2319
      %v2387 = vsub.f32 %v2195, %v2321
      %v2388 = vsub.f32 %v2196, %v2323
      %v2389 = vsub.f32 %v2197, %v2325
      %v2390 = vmul.f32 %v2326, 1.442695
      %v2391 = vpow.pop %v2390
      %v2392 = vmul.f32 %v2327, 1.442695
      %v2393 = vpow.pop %v2392
      %v2394 = vmul.f32 %v2328, 1.442695
      %v2395 = vpow.pop %v2394
      %v2396 = vmul.f32 %v2329, 1.442695
      %v2397 = vpow.pop %v2396
      %v2398 = vmul.f32 %v2330, 1.442695
      %v2399 = vpow.pop %v2398
      %v2400 = vmul.f32 %v2331, 1.442695
      %v2401 = vpow.pop %v2400
      %v2402 = vmul.f32 %v2332, 1.442695
      %v2403 = vpow.pop %v2402
      %v2404 = vmul.f32 %v2333, 1.442695
      %v2405 = vpow.pop %v2404
      %v2406 = vmul.f32 %v2334, 1.442695
      %v2407 = vpow.pop %v2406
      %v2408 = vmul.f32 %v2335, 1.442695
      %v2409 = vpow.pop %v2408
      %v2410 = vmul.f32 %v2336, 1.442695
      %v2411 = vpow.pop %v2410
      %v2412 = vmul.f32 %v2337, 1.442695
      %v2413 = vpow.pop %v2412
      %v2414 = vmul.f32 %v2338, 1.442695
      %v2415 = vpow.pop %v2414
      %v2416 = vmul.f32 %v2339, 1.442695
      %v2417 = vpow.pop %v2416
      %v2418 = vmul.f32 %v2340, 1.442695
      %v2419 = vpow.pop %v2418
      %v2420 = vmul.f32 %v2341, 1.442695
      %v2421 = vpow.pop %v2420
      %v2422 = vmul.f32 %v2342, 1.442695
      %v2423 = vpow.pop %v2422
      %v2424 = vmul.f32 %v2343, 1.442695
      %v2425 = vpow.pop %v2424
      %v2426 = vmul.f32 %v2344, 1.442695
      %v2427 = vpow.pop %v2426
      %v2428 = vmul.f32 %v2345, 1.442695
      %v2429 = vpow.pop %v2428
      %v2430 = vmul.f32 %v2346, 1.442695
      %v2431 = vpow.pop %v2430
      %v2432 = vmul.f32 %v2347, 1.442695
      %v2433 = vpow.pop %v2432
      %v2434 = vmul.f32 %v2348, 1.442695
      %v2435 = vpow.pop %v2434
      %v2436 = vmul.f32 %v2349, 1.442695
      %v2437 = vpow.pop %v2436
      %v2438 = vmul.f32 %v2350, 1.442695
      %v2439 = vpow.pop %v2438
      %v2440 = vmul.f32 %v2351, 1.442695
      %v2441 = vpow.pop %v2440
      %v2442 = vmul.f32 %v2352, 1.442695
      %v2443 = vpow.pop %v2442
      %v2444 = vmul.f32 %v2353, 1.442695
      %v2445 = vpow.pop %v2444
      %v2446 = vmul.f32 %v2354, 1.442695
      %v2447 = vpow.pop %v2446
      %v2448 = vmul.f32 %v2355, 1.442695
      %v2449 = vpow.pop %v2448
      %v2450 = vmul.f32 %v2356, 1.442695
      %v2451 = vpow.pop %v2450
      %v2452 = vmul.f32 %v2357, 1.442695
      %v2453 = vpow.pop %v2452
      %v2454 = vmul.f32 %v2358, 1.442695
      %v2455 = vpow.pop %v2454
      %v2456 = vmul.f32 %v2359, 1.442695
      %v2457 = vpow.pop %v2456
      %v2458 = vmul.f32 %v2360, 1.442695
      %v2459 = vpow.pop %v2458
      %v2460 = vmul.f32 %v2361, 1.442695
      %v2461 = vpow.pop %v2460
      %v2462 = vmul.f32 %v2362, 1.442695
      %v2463 = vpow.pop %v2462
      %v2464 = vmul.f32 %v2363, 1.442695
      %v2465 = vpow.pop %v2464
      %v2466 = vmul.f32 %v2364, 1.442695
      %v2467 = vpow.pop %v2466
      %v2468 = vmul.f32 %v2365, 1.442695
      %v2469 = vpow.pop %v2468
      %v2470 = vmul.f32 %v2366, 1.442695
      %v2471 = vpow.pop %v2470
      %v2472 = vmul.f32 %v2367, 1.442695
      %v2473 = vpow.pop %v2472
      %v2474 = vmul.f32 %v2368, 1.442695
      %v2475 = vpow.pop %v2474
      %v2476 = vmul.f32 %v2369, 1.442695
      %v2477 = vpow.pop %v2476
      %v2478 = vmul.f32 %v2370, 1.442695
      %v2479 = vpow.pop %v2478
      %v2480 = vmul.f32 %v2371, 1.442695
      %v2481 = vpow.pop %v2480
      %v2482 = vmul.f32 %v2372, 1.442695
      %v2483 = vpow.pop %v2482
      %v2484 = vmul.f32 %v2373, 1.442695
      %v2485 = vpow.pop %v2484
      %v2486 = vmul.f32 %v2374, 1.442695
      %v2487 = vpow.pop %v2486
      %v2488 = vmul.f32 %v2375, 1.442695
      %v2489 = vpow.pop %v2488
      %v2490 = vmul.f32 %v2376, 1.442695
      %v2491 = vpow.pop %v2490
      %v2492 = vmul.f32 %v2377, 1.442695
      %v2493 = vpow.pop %v2492
      %v2494 = vmul.f32 %v2378, 1.442695
      %v2495 = vpow.pop %v2494
      %v2496 = vmul.f32 %v2379, 1.442695
      %v2497 = vpow.pop %v2496
      %v2498 = vmul.f32 %v2380, 1.442695
      %v2499 = vpow.pop %v2498
      %v2500 = vmul.f32 %v2381, 1.442695
      %v2501 = vpow.pop %v2500
      %v2502 = vmul.f32 %v2382, 1.442695
      %v2503 = vpow.pop %v2502
      %v2504 = vmul.f32 %v2383, 1.442695
      %v2505 = vpow.pop %v2504
      %v2506 = vmul.f32 %v2384, 1.442695
      %v2507 = vpow.pop %v2506
      %v2508 = vmul.f32 %v2385, 1.442695
      %v2509 = vpow.pop %v2508
      %v2510 = vmul.f32 %v2386, 1.442695
      %v2511 = vpow.pop %v2510
      %v2512 = vmul.f32 %v2387, 1.442695
      %v2513 = vpow.pop %v2512
      %v2514 = vmul.f32 %v2388, 1.442695
      %v2515 = vpow.pop %v2514
      %v2516 = vmul.f32 %v2389, 1.442695
      %v2517 = vpow.pop %v2516
      %2518 = vadd.xlane.f32.xlu0 %v2391
      %v2519 = vpop.xlane.xlu0 %2518
      %2520 = vadd.xlane.f32.xlu0 %v2393
      %v2521 = vpop.xlane.xlu0 %2520
      %2522 = vadd.xlane.f32.xlu0 %v2395
      %v2523 = vpop.xlane.xlu0 %2522
      %2524 = vadd.xlane.f32.xlu0 %v2397
      %v2525 = vpop.xlane.xlu0 %2524
      %2526 = vadd.xlane.f32.xlu0 %v2399
      %v2527 = vpop.xlane.xlu0 %2526
      %2528 = vadd.xlane.f32.xlu0 %v2401
      %v2529 = vpop.xlane.xlu0 %2528
      %2530 = vadd.xlane.f32.xlu0 %v2403
      %v2531 = vpop.xlane.xlu0 %2530
      %2532 = vadd.xlane.f32.xlu0 %v2405
      %v2533 = vpop.xlane.xlu0 %2532
      %2534 = vadd.xlane.f32.xlu0 %v2407
      %v2535 = vpop.xlane.xlu0 %2534
      %2536 = vadd.xlane.f32.xlu0 %v2409
      %v2537 = vpop.xlane.xlu0 %2536
      %2538 = vadd.xlane.f32.xlu0 %v2411
      %v2539 = vpop.xlane.xlu0 %2538
      %2540 = vadd.xlane.f32.xlu0 %v2413
      %v2541 = vpop.xlane.xlu0 %2540
      %2542 = vadd.xlane.f32.xlu0 %v2415
      %v2543 = vpop.xlane.xlu0 %2542
      %2544 = vadd.xlane.f32.xlu0 %v2417
      %v2545 = vpop.xlane.xlu0 %2544
      %2546 = vadd.xlane.f32.xlu0 %v2419
      %v2547 = vpop.xlane.xlu0 %2546
      %2548 = vadd.xlane.f32.xlu0 %v2421
      %v2549 = vpop.xlane.xlu0 %2548
      %2550 = vadd.xlane.f32.xlu0 %v2423
      %v2551 = vpop.xlane.xlu0 %2550
      %2552 = vadd.xlane.f32.xlu0 %v2425
      %v2553 = vpop.xlane.xlu0 %2552
      %2554 = vadd.xlane.f32.xlu0 %v2427
      %v2555 = vpop.xlane.xlu0 %2554
      %2556 = vadd.xlane.f32.xlu0 %v2429
      %v2557 = vpop.xlane.xlu0 %2556
      %2558 = vadd.xlane.f32.xlu0 %v2431
      %v2559 = vpop.xlane.xlu0 %2558
      %2560 = vadd.xlane.f32.xlu0 %v2433
      %v2561 = vpop.xlane.xlu0 %2560
      %2562 = vadd.xlane.f32.xlu0 %v2435
      %v2563 = vpop.xlane.xlu0 %2562
      %2564 = vadd.xlane.f32.xlu0 %v2437
      %v2565 = vpop.xlane.xlu0 %2564
      %2566 = vadd.xlane.f32.xlu0 %v2439
      %v2567 = vpop.xlane.xlu0 %2566
      %2568 = vadd.xlane.f32.xlu0 %v2441
      %v2569 = vpop.xlane.xlu0 %2568
      %2570 = vadd.xlane.f32.xlu0 %v2443
      %v2571 = vpop.xlane.xlu0 %2570
      %2572 = vadd.xlane.f32.xlu0 %v2445
      %v2573 = vpop.xlane.xlu0 %2572
      %2574 = vadd.xlane.f32.xlu0 %v2447
      %v2575 = vpop.xlane.xlu0 %2574
      %2576 = vadd.xlane.f32.xlu0 %v2449
      %v2577 = vpop.xlane.xlu0 %2576
      %2578 = vadd.xlane.f32.xlu0 %v2451
      %v2579 = vpop.xlane.xlu0 %2578
      %2580 = vadd.xlane.f32.xlu0 %v2453
      %v2581 = vpop.xlane.xlu0 %2580
      %2582 = vadd.xlane.f32.xlu0 %v2455
      %v2583 = vpop.xlane.xlu0 %2582
      %2584 = vadd.xlane.f32.xlu0 %v2457
      %v2585 = vpop.xlane.xlu0 %2584
      %2586 = vadd.xlane.f32.xlu0 %v2459
      %v2587 = vpop.xlane.xlu0 %2586
      %2588 = vadd.xlane.f32.xlu0 %v2461
      %v2589 = vpop.xlane.xlu0 %2588
      %2590 = vadd.xlane.f32.xlu0 %v2463
      %v2591 = vpop.xlane.xlu0 %2590
      %2592 = vadd.xlane.f32.xlu0 %v2465
      %v2593 = vpop.xlane.xlu0 %2592
      %2594 = vadd.xlane.f32.xlu0 %v2467
      %v2595 = vpop.xlane.xlu0 %2594
      %2596 = vadd.xlane.f32.xlu0 %v2469
      %v2597 = vpop.xlane.xlu0 %2596
      %2598 = vadd.xlane.f32.xlu0 %v2471
      %v2599 = vpop.xlane.xlu0 %2598
      %2600 = vadd.xlane.f32.xlu0 %v2473
      %v2601 = vpop.xlane.xlu0 %2600
      %2602 = vadd.xlane.f32.xlu0 %v2475
      %v2603 = vpop.xlane.xlu0 %2602
      %2604 = vadd.xlane.f32.xlu0 %v2477
      %v2605 = vpop.xlane.xlu0 %2604
      %2606 = vadd.xlane.f32.xlu0 %v2479
      %v2607 = vpop.xlane.xlu0 %2606
      %2608 = vadd.xlane.f32.xlu0 %v2481
      %v2609 = vpop.xlane.xlu0 %2608
      %2610 = vadd.xlane.f32.xlu0 %v2483
      %v2611 = vpop.xlane.xlu0 %2610
      %2612 = vadd.xlane.f32.xlu0 %v2485
      %v2613 = vpop.xlane.xlu0 %2612
      %2614 = vadd.xlane.f32.xlu0 %v2487
      %v2615 = vpop.xlane.xlu0 %2614
      %2616 = vadd.xlane.f32.xlu0 %v2489
      %v2617 = vpop.xlane.xlu0 %2616
      %2618 = vadd.xlane.f32.xlu0 %v2491
      %v2619 = vpop.xlane.xlu0 %2618
      %2620 = vadd.xlane.f32.xlu0 %v2493
      %v2621 = vpop.xlane.xlu0 %2620
      %2622 = vadd.xlane.f32.xlu0 %v2495
      %v2623 = vpop.xlane.xlu0 %2622
      %2624 = vadd.xlane.f32.xlu0 %v2497
      %v2625 = vpop.xlane.xlu0 %2624
      %2626 = vadd.xlane.f32.xlu0 %v2499
      %v2627 = vpop.xlane.xlu0 %2626
      %2628 = vadd.xlane.f32.xlu0 %v2501
      %v2629 = vpop.xlane.xlu0 %2628
      %2630 = vadd.xlane.f32.xlu0 %v2503
      %v2631 = vpop.xlane.xlu0 %2630
      %2632 = vadd.xlane.f32.xlu0 %v2505
      %v2633 = vpop.xlane.xlu0 %2632
      %2634 = vadd.xlane.f32.xlu0 %v2507
      %v2635 = vpop.xlane.xlu0 %2634
      %2636 = vadd.xlane.f32.xlu0 %v2509
      %v2637 = vpop.xlane.xlu0 %2636
      %2638 = vadd.xlane.f32.xlu0 %v2511
      %v2639 = vpop.xlane.xlu0 %2638
      %2640 = vadd.xlane.f32.xlu0 %v2513
      %v2641 = vpop.xlane.xlu0 %2640
      %2642 = vadd.xlane.f32.xlu0 %v2515
      %v2643 = vpop.xlane.xlu0 %2642
      %2644 = vadd.xlane.f32.xlu0 %v2517
      %v2645 = vpop.xlane.xlu0 %2644
      %v2646 = vrcp.pop %v2519
      %v2647 = vrcp.pop %v2521
      %v2648 = vrcp.pop %v2523
      %v2649 = vrcp.pop %v2525
      %v2650 = vrcp.pop %v2527
      %v2651 = vrcp.pop %v2529
      %v2652 = vrcp.pop %v2531
      %v2653 = vrcp.pop %v2533
      %v2654 = vrcp.pop %v2535
      %v2655 = vrcp.pop %v2537
      %v2656 = vrcp.pop %v2539
      %v2657 = vrcp.pop %v2541
      %v2658 = vrcp.pop %v2543
      %v2659 = vrcp.pop %v2545
      %v2660 = vrcp.pop %v2547
      %v2661 = vrcp.pop %v2549
      %v2662 = vrcp.pop %v2551
      %v2663 = vrcp.pop %v2553
      %v2664 = vrcp.pop %v2555
      %v2665 = vrcp.pop %v2557
      %v2666 = vrcp.pop %v2559
      %v2667 = vrcp.pop %v2561
      %v2668 = vrcp.pop %v2563
      %v2669 = vrcp.pop %v2565
      %v2670 = vrcp.pop %v2567
      %v2671 = vrcp.pop %v2569
      %v2672 = vrcp.pop %v2571
      %v2673 = vrcp.pop %v2573
      %v2674 = vrcp.pop %v2575
      %v2675 = vrcp.pop %v2577
      %v2676 = vrcp.pop %v2579
      %v2677 = vrcp.pop %v2581
      %v2678 = vrcp.pop %v2583
      %v2679 = vrcp.pop %v2585
      %v2680 = vrcp.pop %v2587
      %v2681 = vrcp.pop %v2589
      %v2682 = vrcp.pop %v2591
      %v2683 = vrcp.pop %v2593
      %v2684 = vrcp.pop %v2595
      %v2685 = vrcp.pop %v2597
      %v2686 = vrcp.pop %v2599
      %v2687 = vrcp.pop %v2601
      %v2688 = vrcp.pop %v2603
      %v2689 = vrcp.pop %v2605
      %v2690 = vrcp.pop %v2607
      %v2691 = vrcp.pop %v2609
      %v2692 = vrcp.pop %v2611
      %v2693 = vrcp.pop %v2613
      %v2694 = vrcp.pop %v2615
      %v2695 = vrcp.pop %v2617
      %v2696 = vrcp.pop %v2619
      %v2697 = vrcp.pop %v2621
      %v2698 = vrcp.pop %v2623
      %v2699 = vrcp.pop %v2625
      %v2700 = vrcp.pop %v2627
      %v2701 = vrcp.pop %v2629
      %v2702 = vrcp.pop %v2631
      %v2703 = vrcp.pop %v2633
      %v2704 = vrcp.pop %v2635
      %v2705 = vrcp.pop %v2637
      %v2706 = vrcp.pop %v2639
      %v2707 = vrcp.pop %v2641
      %v2708 = vrcp.pop %v2643
      %v2709 = vrcp.pop %v2645
      %v2710 = vmul.f32 %v2391, %v2646
      %v2711 = vmul.f32 %v2393, %v2647
      %v2712 = vmul.f32 %v2395, %v2648
      %v2713 = vmul.f32 %v2397, %v2649
      %v2714 = vmul.f32 %v2399, %v2650
      %v2715 = vmul.f32 %v2401, %v2651
      %v2716 = vmul.f32 %v2403, %v2652
      %v2717 = vmul.f32 %v2405, %v2653
      %v2718 = vmul.f32 %v2407, %v2654
      %v2719 = vmul.f32 %v2409, %v2655
      %v2720 = vmul.f32 %v2411, %v2656
      %v2721 = vmul.f32 %v2413, %v2657
      %v2722 = vmul.f32 %v2415, %v2658
      %v2723 = vmul.f32 %v2417, %v2659
      %v2724 = vmul.f32 %v2419, %v2660
      %v2725 = vmul.f32 %v2421, %v2661
      %v2726 = vmul.f32 %v2423, %v2662
      %v2727 = vmul.f32 %v2425, %v2663
      %v2728 = vmul.f32 %v2427, %v2664
      %v2729 = vmul.f32 %v2429, %v2665
      %v2730 = vmul.f32 %v2431, %v2666
      %v2731 = vmul.f32 %v2433, %v2667
      %v2732 = vmul.f32 %v2435, %v2668
      %v2733 = vmul.f32 %v2437, %v2669
      %v2734 = vmul.f32 %v2439, %v2670
      %v2735 = vmul.f32 %v2441, %v2671
      %v2736 = vmul.f32 %v2443, %v2672
      %v2737 = vmul.f32 %v2445, %v2673
      %v2738 = vmul.f32 %v2447, %v2674
      %v2739 = vmul.f32 %v2449, %v2675
      %v2740 = vmul.f32 %v2451, %v2676
      %v2741 = vmul.f32 %v2453, %v2677
      %v2742 = vmul.f32 %v2455, %v2678
      %v2743 = vmul.f32 %v2457, %v2679
      %v2744 = vmul.f32 %v2459, %v2680
      %v2745 = vmul.f32 %v2461, %v2681
      %v2746 = vmul.f32 %v2463, %v2682
      %v2747 = vmul.f32 %v2465, %v2683
      %v2748 = vmul.f32 %v2467, %v2684
      %v2749 = vmul.f32 %v2469, %v2685
      %v2750 = vmul.f32 %v2471, %v2686
      %v2751 = vmul.f32 %v2473, %v2687
      %v2752 = vmul.f32 %v2475, %v2688
      %v2753 = vmul.f32 %v2477, %v2689
      %v2754 = vmul.f32 %v2479, %v2690
      %v2755 = vmul.f32 %v2481, %v2691
      %v2756 = vmul.f32 %v2483, %v2692
      %v2757 = vmul.f32 %v2485, %v2693
      %v2758 = vmul.f32 %v2487, %v2694
      %v2759 = vmul.f32 %v2489, %v2695
      %v2760 = vmul.f32 %v2491, %v2696
      %v2761 = vmul.f32 %v2493, %v2697
      %v2762 = vmul.f32 %v2495, %v2698
      %v2763 = vmul.f32 %v2497, %v2699
      %v2764 = vmul.f32 %v2499, %v2700
      %v2765 = vmul.f32 %v2501, %v2701
      %v2766 = vmul.f32 %v2503, %v2702
      %v2767 = vmul.f32 %v2505, %v2703
      %v2768 = vmul.f32 %v2507, %v2704
      %v2769 = vmul.f32 %v2509, %v2705
      %v2770 = vmul.f32 %v2511, %v2706
      %v2771 = vmul.f32 %v2513, %v2707
      %v2772 = vmul.f32 %v2515, %v2708
      %v2773 = vmul.f32 %v2517, %v2709
      %v2774 = vpack.c.bf16 %v2711, %v2710
      %v2775 = vpack.c.bf16 %v2713, %v2712
      %v2776 = vpack.c.bf16 %v2715, %v2714
      %v2777 = vpack.c.bf16 %v2717, %v2716
      %v2778 = vpack.c.bf16 %v2719, %v2718
      %v2779 = vpack.c.bf16 %v2721, %v2720
      %v2780 = vpack.c.bf16 %v2723, %v2722
      %v2781 = vpack.c.bf16 %v2725, %v2724
      %v2782 = vpack.c.bf16 %v2727, %v2726
      %v2783 = vpack.c.bf16 %v2729, %v2728
      %v2784 = vpack.c.bf16 %v2731, %v2730
      %v2785 = vpack.c.bf16 %v2733, %v2732
      %v2786 = vpack.c.bf16 %v2735, %v2734
      %v2787 = vpack.c.bf16 %v2737, %v2736
      %v2788 = vpack.c.bf16 %v2739, %v2738
      %v2789 = vpack.c.bf16 %v2741, %v2740
      %v2790 = vpack.c.bf16 %v2743, %v2742
      %v2791 = vpack.c.bf16 %v2745, %v2744
      %v2792 = vpack.c.bf16 %v2747, %v2746
      %v2793 = vpack.c.bf16 %v2749, %v2748
      %v2794 = vpack.c.bf16 %v2751, %v2750
      %v2795 = vpack.c.bf16 %v2753, %v2752
      %v2796 = vpack.c.bf16 %v2755, %v2754
      %v2797 = vpack.c.bf16 %v2757, %v2756
      %v2798 = vpack.c.bf16 %v2759, %v2758
      %v2799 = vpack.c.bf16 %v2761, %v2760
      %v2800 = vpack.c.bf16 %v2763, %v2762
      %v2801 = vpack.c.bf16 %v2765, %v2764
      %v2802 = vpack.c.bf16 %v2767, %v2766
      %v2803 = vpack.c.bf16 %v2769, %v2768
      %v2804 = vpack.c.bf16 %v2771, %v2770
      %v2805 = vpack.c.bf16 %v2773, %v2772
      %2806 = vmatprep.subr.bf16.mxu0 0
      %2807 = vmatpush1.bf16.xpose.msra.mxu0 %v2774
      %2808 = vmatprep.subr.bf16.mxu0 0
      %2809 = vmatpush1.bf16.xpose.msra.mxu0 %v2775
      %2810 = vmatprep.subr.bf16.mxu0 0
      %2811 = vmatpush1.bf16.xpose.msra.mxu0 %v2776
      %2812 = vmatprep.subr.bf16.mxu0 0
      %2813 = vmatpush1.bf16.xpose.msra.mxu0 %v2777
      %2814 = vmatprep.subr.bf16.mxu0 0
      %2815 = vmatpush1.bf16.xpose.msra.mxu0 %v2778
      %2816 = vmatprep.subr.bf16.mxu0 0
      %2817 = vmatpush1.bf16.xpose.msra.mxu0 %v2779
      %2818 = vmatprep.subr.bf16.mxu0 0
      %2819 = vmatpush1.bf16.xpose.msra.mxu0 %v2780
      %2820 = vmatprep.subr.bf16.mxu0 0
      %2821 = vmatpush1.bf16.xpose.msra.mxu0 %v2781
      %2822 = vmatprep.subr.bf16.mxu0 0
      %2823 = vmatpush1.bf16.xpose.msra.mxu0 0
      %2824 = vmatprep.subr.bf16.mxu0 0
      %2825 = vmatpush1.bf16.xpose.msra.mxu0 0
      %2826 = vmatprep.subr.bf16.mxu0 0
      %2827 = vmatpush1.bf16.xpose.msra.mxu0 0
      %2828 = vmatprep.subr.bf16.mxu0 0
      %2829 = vmatpush1.bf16.xpose.msra.mxu0 0
      %2830 = vmatprep.subr.bf16.mxu0 0
      %2831 = vmatpush1.bf16.xpose.msra.mxu0 0
      %2832 = vmatprep.subr.bf16.mxu0 0
      %2833 = vmatpush1.bf16.xpose.msra.mxu0 0
      %2834 = vmatprep.subr.bf16.mxu0 0
      %2835 = vmatpush1.bf16.xpose.msra.mxu0 0
      %2836 = vmatprep.subr.bf16.mxu0 0
      %2837 = vmatpush1.bf16.xpose.msra.mxu0 0
      %2838 = vmatprep.mubr.bf16.mxu0 0
      %2839 = vmatmul.mubr.bf16.gmra.mrb[0].mxu0 %v1500
      %v2840 = vpop.f32.mrb[0].mxu0
      %v2841 = vadd.f32 0.0, %v2840
      %v2842 = vpop.f32.mrb[0].mxu0
      %v2843 = vpop.f32.mrb[0].mxu0
      %v2844 = vpop.f32.mrb[0].mxu0
      %2845 = vdwg.mxu0
      %2846 = vmatprep.subr.bf16.mxu0 0
      %2847 = vmatpush1.bf16.xpose.msra.mxu0 %v2782
      %2848 = vmatprep.subr.bf16.mxu0 0
      %2849 = vmatpush1.bf16.xpose.msra.mxu0 %v2783
      %2850 = vmatprep.subr.bf16.mxu0 0
      %2851 = vmatpush1.bf16.xpose.msra.mxu0 %v2784
      %2852 = vmatprep.subr.bf16.mxu0 0
      %2853 = vmatpush1.bf16.xpose.msra.mxu0 %v2785
      %2854 = vmatprep.subr.bf16.mxu0 0
      %2855 = vmatpush1.bf16.xpose.msra.mxu0 %v2786
      %2856 = vmatprep.subr.bf16.mxu0 0
      %2857 = vmatpush1.bf16.xpose.msra.mxu0 %v2787
      %2858 = vmatprep.subr.bf16.mxu0 0
      %2859 = vmatpush1.bf16.xpose.msra.mxu0 %v2788
      %2860 = vmatprep.subr.bf16.mxu0 0
      %2861 = vmatpush1.bf16.xpose.msra.mxu0 %v2789
      %2862 = vmatprep.subr.bf16.mxu0 0
      %2863 = vmatpush1.bf16.xpose.msra.mxu0 0
      %2864 = vmatprep.subr.bf16.mxu0 0
      %2865 = vmatpush1.bf16.xpose.msra.mxu0 0
      %2866 = vmatprep.subr.bf16.mxu0 0
      %2867 = vmatpush1.bf16.xpose.msra.mxu0 0
      %2868 = vmatprep.subr.bf16.mxu0 0
      %2869 = vmatpush1.bf16.xpose.msra.mxu0 0
      %2870 = vmatprep.subr.bf16.mxu0 0
      %2871 = vmatpush1.bf16.xpose.msra.mxu0 0
      %2872 = vmatprep.subr.bf16.mxu0 0
      %2873 = vmatpush1.bf16.xpose.msra.mxu0 0
      %2874 = vmatprep.subr.bf16.mxu0 0
      %2875 = vmatpush1.bf16.xpose.msra.mxu0 0
      %2876 = vmatprep.subr.bf16.mxu0 0
      %2877 = vmatpush1.bf16.xpose.msra.mxu0 0
      %2878 = vmatprep.mubr.bf16.mxu0 0
      %2879 = vmatmul.mubr.bf16.gmra.mrb[0].mxu0 %v1501
      %v2880 = vpop.f32.mrb[0].mxu0
      %v2881 = vadd.f32 0.0, %v2880
      %v2882 = vpop.f32.mrb[0].mxu0
      %v2883 = vpop.f32.mrb[0].mxu0
      %v2884 = vpop.f32.mrb[0].mxu0
      %2885 = vdwg.mxu0
      %2886 = vmatprep.subr.bf16.mxu0 0
      %2887 = vmatpush1.bf16.xpose.msra.mxu0 %v2790
      %2888 = vmatprep.subr.bf16.mxu0 0
      %2889 = vmatpush1.bf16.xpose.msra.mxu0 %v2791
      %2890 = vmatprep.subr.bf16.mxu0 0
      %2891 = vmatpush1.bf16.xpose.msra.mxu0 %v2792
      %2892 = vmatprep.subr.bf16.mxu0 0
      %2893 = vmatpush1.bf16.xpose.msra.mxu0 %v2793
      %2894 = vmatprep.subr.bf16.mxu0 0
      %2895 = vmatpush1.bf16.xpose.msra.mxu0 %v2794
      %2896 = vmatprep.subr.bf16.mxu0 0
      %2897 = vmatpush1.bf16.xpose.msra.mxu0 %v2795
      %2898 = vmatprep.subr.bf16.mxu0 0
      %2899 = vmatpush1.bf16.xpose.msra.mxu0 %v2796
      %2900 = vmatprep.subr.bf16.mxu0 0
      %2901 = vmatpush1.bf16.xpose.msra.mxu0 %v2797
      %2902 = vmatprep.subr.bf16.mxu0 0
      %2903 = vmatpush1.bf16.xpose.msra.mxu0 0
      %2904 = vmatprep.subr.bf16.mxu0 0
      %2905 = vmatpush1.bf16.xpose.msra.mxu0 0
      %2906 = vmatprep.subr.bf16.mxu0 0
      %2907 = vmatpush1.bf16.xpose.msra.mxu0 0
      %2908 = vmatprep.subr.bf16.mxu0 0
      %2909 = vmatpush1.bf16.xpose.msra.mxu0 0
      %2910 = vmatprep.subr.bf16.mxu0 0
      %2911 = vmatpush1.bf16.xpose.msra.mxu0 0
      %2912 = vmatprep.subr.bf16.mxu0 0
      %2913 = vmatpush1.bf16.xpose.msra.mxu0 0
      %2914 = vmatprep.subr.bf16.mxu0 0
      %2915 = vmatpush1.bf16.xpose.msra.mxu0 0
      %2916 = vmatprep.subr.bf16.mxu0 0
      %2917 = vmatpush1.bf16.xpose.msra.mxu0 0
      %2918 = vmatprep.mubr.bf16.mxu0 0
      %2919 = vmatmul.mubr.bf16.gmra.mrb[0].mxu0 %v1502
      %v2920 = vpop.f32.mrb[0].mxu0
      %v2921 = vadd.f32 0.0, %v2920
      %v2922 = vpop.f32.mrb[0].mxu0
      %v2923 = vpop.f32.mrb[0].mxu0
      %v2924 = vpop.f32.mrb[0].mxu0
      %2925 = vdwg.mxu0
      %2926 = vmatprep.subr.bf16.mxu0 0
      %2927 = vmatpush1.bf16.xpose.msra.mxu0 %v2798
      %2928 = vmatprep.subr.bf16.mxu0 0
      %2929 = vmatpush1.bf16.xpose.msra.mxu0 %v2799
      %2930 = vmatprep.subr.bf16.mxu0 0
      %2931 = vmatpush1.bf16.xpose.msra.mxu0 %v2800
      %2932 = vmatprep.subr.bf16.mxu0 0
      %2933 = vmatpush1.bf16.xpose.msra.mxu0 %v2801
      %2934 = vmatprep.subr.bf16.mxu0 0
      %2935 = vmatpush1.bf16.xpose.msra.mxu0 %v2802
      %2936 = vmatprep.subr.bf16.mxu0 0
      %2937 = vmatpush1.bf16.xpose.msra.mxu0 %v2803
      %2938 = vmatprep.subr.bf16.mxu0 0
      %2939 = vmatpush1.bf16.xpose.msra.mxu0 %v2804
      %2940 = vmatprep.subr.bf16.mxu0 0
      %2941 = vmatpush1.bf16.xpose.msra.mxu0 %v2805
      %2942 = vmatprep.subr.bf16.mxu0 0
      %2943 = vmatpush1.bf16.xpose.msra.mxu0 0
      %2944 = vmatprep.subr.bf16.mxu0 0
      %2945 = vmatpush1.bf16.xpose.msra.mxu0 0
      %2946 = vmatprep.subr.bf16.mxu0 0
      %2947 = vmatpush1.bf16.xpose.msra.mxu0 0
      %2948 = vmatprep.subr.bf16.mxu0 0
      %2949 = vmatpush1.bf16.xpose.msra.mxu0 0
      %2950 = vmatprep.subr.bf16.mxu0 0
      %2951 = vmatpush1.bf16.xpose.msra.mxu0 0
      %2952 = vmatprep.subr.bf16.mxu0 0
      %2953 = vmatpush1.bf16.xpose.msra.mxu0 0
      %2954 = vmatprep.subr.bf16.mxu0 0
      %2955 = vmatpush1.bf16.xpose.msra.mxu0 0
      %2956 = vmatprep.subr.bf16.mxu0 0
      %2957 = vmatpush1.bf16.xpose.msra.mxu0 0
      %2958 = vmatprep.mubr.bf16.mxu0 0
      %2959 = vmatmul.mubr.bf16.gmra.mrb[0].mxu0 %v1503
      %v2960 = vpop.f32.mrb[0].mxu0
      %v2961 = vadd.f32 0.0, %v2960
      %v2962 = vpop.f32.mrb[0].mxu0
      %v2963 = vpop.f32.mrb[0].mxu0
      %v2964 = vpop.f32.mrb[0].mxu0
      %2965 = vdwg.mxu0
      %v2966 = vpack.c.bf16 %v2881, %v2841
      %v2967 = vpack.c.bf16 %v2961, %v2921
      %v2968 = vld [vmem:[%s836] sm:$0xf]
      %v2969 = vld [vmem:[%s836 + $0x4] sm:$0xf]
      %v2970 = vld [vmem:[%s836 + $0x8] sm:$0xf]
      %v2971 = vld [vmem:[%s836 + $0xc] sm:$0xf]
      %v2972 = vld [vmem:[%s841] sm:$0xff]
      %v2973 = vld [vmem:[%s841 + $0x8] sm:$0xff]
      %v2974 = vld [vmem:[%s841 + $0x10] sm:$0xff]
      %v2975 = vld [vmem:[%s841 + $0x18] sm:$0xff]
      %2977 = vset.pattern.permute.xlu0 0
      %2978 = vperm.xlu0 %2977, %v2972
      %v2979 = vpop.permute.xlu0 %2978
      %2982 = vset.pattern.permute.xlu0 0
      %2983 = vperm.xlu0 %2982, %v2973
      %v2984 = vpop.permute.xlu0 %2983
      %2987 = vset.pattern.permute.xlu0 0
      %2988 = vperm.xlu0 %2987, %v2974
      %v2989 = vpop.permute.xlu0 %2988
      %2992 = vset.pattern.permute.xlu0 0
      %2993 = vperm.xlu0 %2992, %v2975
      %v2994 = vpop.permute.xlu0 %2993
      %v3000 = vunpack.c.l.b16 %v2968
      %v3001 = vunpack.c.l.b16 %v2969
      %v3002 = vunpack.c.l.b16 %v2970
      %v3003 = vunpack.c.l.b16 %v2971
      %v3004 = vpack.c.b16 %v3001, %v3000
      %v3005 = vpack.c.b16 %v3003, %v3002
      %v3007 = vsel %vm925, %v3004, 0
      %v3010 = vsel %vm925, %v3005, 0
      %3012 = vmatprep.subr.bf16.mxu0 0
      %3013 = vmatpush1.bf16.msra.mxu0 %v2966
      %3014 = vmatprep.subr.bf16.mxu0 0
      %3015 = vmatpush1.bf16.msra.mxu0 %v2967
      %3016 = vmatprep.subr.bf16.mxu0 0
      %3017 = vmatpush1.bf16.msra.mxu0 0
      %3018 = vmatprep.subr.bf16.mxu0 0
      %3019 = vmatpush1.bf16.msra.mxu0 0
      %3020 = vmatprep.subr.bf16.mxu0 0
      %3021 = vmatpush1.bf16.msra.mxu0 0
      %3022 = vmatprep.subr.bf16.mxu0 0
      %3023 = vmatpush1.bf16.msra.mxu0 0
      %3024 = vmatprep.subr.bf16.mxu0 0
      %3025 = vmatpush1.bf16.msra.mxu0 0
      %3026 = vmatprep.subr.bf16.mxu0 0
      %3027 = vmatpush1.bf16.msra.mxu0 0
      %3028 = vmatprep.subr.bf16.mxu0 0
      %3029 = vmatpush1.bf16.msra.mxu0 0
      %3030 = vmatprep.subr.bf16.mxu0 0
      %3031 = vmatpush1.bf16.msra.mxu0 0
      %3032 = vmatprep.subr.bf16.mxu0 0
      %3033 = vmatpush1.bf16.msra.mxu0 0
      %3034 = vmatprep.subr.bf16.mxu0 0
      %3035 = vmatpush1.bf16.msra.mxu0 0
      %3036 = vmatprep.subr.bf16.mxu0 0
      %3037 = vmatpush1.bf16.msra.mxu0 0
      %3038 = vmatprep.subr.bf16.mxu0 0
      %3039 = vmatpush1.bf16.msra.mxu0 0
      %3040 = vmatprep.subr.bf16.mxu0 0
      %3041 = vmatpush1.bf16.msra.mxu0 0
      %3042 = vmatprep.subr.bf16.mxu0 0
      %3043 = vmatpush1.bf16.msra.mxu0 0
      %3044 = vmatprep.mubr.bf16.mxu0 0
      %3045 = vmatmul.mubr.bf16.gmra.mrb[0].mxu0 %v3007
      %v3046 = vpop.f32.mrb[0].mxu0
      %v3047 = vadd.f32 %v2979, %v3046
      %v3048 = vpop.f32.mrb[0].mxu0
      %v3049 = vpop.f32.mrb[0].mxu0
      %v3050 = vadd.f32 %v2984, %v3049
      %v3051 = vpop.f32.mrb[0].mxu0
      %3052 = vmatprep.mubr.bf16.mxu0 0
      %3053 = vmatmul.mubr.bf16.gmra.mrb[0].mxu0 %v3010
      %v3054 = vpop.f32.mrb[0].mxu0
      %v3055 = vadd.f32 %v2989, %v3054
      %v3056 = vpop.f32.mrb[0].mxu0
      %v3057 = vpop.f32.mrb[0].mxu0
      %v3058 = vadd.f32 %v2994, %v3057
      %v3059 = vpop.f32.mrb[0].mxu0
      %3060 = vdwg.mxu0
      %3061 = vxpose.xlu0.b32.start [1/16] %v3047, 128
      %3062 = vxpose.xlu0.b32.cont [2/16] %v3050, 128
      %3063 = vxpose.xlu0.b32.cont [3/16] %v3055, 128
      %3064 = vxpose.xlu0.b32.cont [4/16] %v3058, 128
      %3065 = vxpose.xlu0.b32.cont [5/16] 0.0, 128
      %3066 = vxpose.xlu0.b32.cont [6/16] 0.0, 128
      %3067 = vxpose.xlu0.b32.cont [7/16] 0.0, 128
      %3068 = vxpose.xlu0.b32.cont [8/16] 0.0, 128
      %3069 = vxpose.xlu0.b32.cont [9/16] 0.0, 128
      %3070 = vxpose.xlu0.b32.cont [10/16] 0.0, 128
      %3071 = vxpose.xlu0.b32.cont [11/16] 0.0, 128
      %3072 = vxpose.xlu0.b32.cont [12/16] 0.0, 128
      %3073 = vxpose.xlu0.b32.cont [13/16] 0.0, 128
      %3074 = vxpose.xlu0.b32.cont [14/16] 0.0, 128
      %3075 = vxpose.xlu0.b32.cont [15/16] 0.0, 128
      %3076 = vxpose.xlu0.b32.end [16/16] 0.0, 128
      %v3077 = vpop.trf.xlu0
      %v3078 = vpop.trf.xlu0
      %v3079 = vpop.trf.xlu0
      %v3080 = vpop.trf.xlu0
      %v3081 = vpop.trf.xlu0
      %v3082 = vpop.trf.xlu0
      %v3083 = vpop.trf.xlu0
      %v3084 = vpop.trf.xlu0
      %v3085 = vpop.trf.xlu0
      %v3086 = vpop.trf.xlu0
      %v3087 = vpop.trf.xlu0
      %v3088 = vpop.trf.xlu0
      %v3089 = vpop.trf.xlu0
      %v3090 = vpop.trf.xlu0
      %v3091 = vpop.trf.xlu0
      %v3092 = vpop.trf.xlu0
      %v3093 = vadd.f32 %v907, %v3077
      %v3094 = vadd.f32 %v908, %v3078
      %v3095 = vadd.f32 %v909, %v3079
      %v3096 = vadd.f32 %v910, %v3080
      %v3097 = vadd.f32 %v911, %v3081
      %v3098 = vadd.f32 %v912, %v3082
      %v3099 = vadd.f32 %v913, %v3083
      %v3100 = vadd.f32 %v914, %v3084
      %v3101 = vadd.f32 %v915, %v3085
      %v3102 = vadd.f32 %v916, %v3086
      %v3103 = vadd.f32 %v917, %v3087
      %v3104 = vadd.f32 %v918, %v3088
      %v3105 = vadd.f32 %v919, %v3089
      %v3106 = vadd.f32 %v920, %v3090
      %v3107 = vadd.f32 %v921, %v3091
      %v3108 = vadd.f32 %v922, %v3092
      %v3109 = vld [vmem:[%s844] sm:$0x1]
      %v3110 = vld [vmem:[%s847] sm:$0x1]
      %v3111 = vsel %vm925, %v3093, 0.0
      %3112 = vadd.xlane.f32.xlu0 %v3111
      %v3113 = vpop.xlane.xlu0 %3112
      %v3114 = vsel %vm925, %v3094, 0.0
      %3115 = vadd.xlane.f32.xlu0 %v3114
      %v3116 = vpop.xlane.xlu0 %3115
      %v3117 = vsel %vm925, %v3095, 0.0
      %3118 = vadd.xlane.f32.xlu0 %v3117
      %v3119 = vpop.xlane.xlu0 %3118
      %v3120 = vsel %vm925, %v3096, 0.0
      %3121 = vadd.xlane.f32.xlu0 %v3120
      %v3122 = vpop.xlane.xlu0 %3121
      %v3123 = vsel %vm925, %v3097, 0.0
      %3124 = vadd.xlane.f32.xlu0 %v3123
      %v3125 = vpop.xlane.xlu0 %3124
      %v3126 = vsel %vm925, %v3098, 0.0
      %3127 = vadd.xlane.f32.xlu0 %v3126
      %v3128 = vpop.xlane.xlu0 %3127
      %v3129 = vsel %vm925, %v3099, 0.0
      %3130 = vadd.xlane.f32.xlu0 %v3129
      %v3131 = vpop.xlane.xlu0 %3130
      %v3132 = vsel %vm925, %v3100, 0.0
      %3133 = vadd.xlane.f32.xlu0 %v3132
      %v3134 = vpop.xlane.xlu0 %3133
      %v3135 = vsel %vm925, %v3101, 0.0
      %3136 = vadd.xlane.f32.xlu0 %v3135
      %v3137 = vpop.xlane.xlu0 %3136
      %v3138 = vsel %vm925, %v3102, 0.0
      %3139 = vadd.xlane.f32.xlu0 %v3138
      %v3140 = vpop.xlane.xlu0 %3139
      %v3141 = vsel %vm925, %v3103, 0.0
      %3142 = vadd.xlane.f32.xlu0 %v3141
      %v3143 = vpop.xlane.xlu0 %3142
      %v3144 = vsel %vm925, %v3104, 0.0
      %3145 = vadd.xlane.f32.xlu0 %v3144
      %v3146 = vpop.xlane.xlu0 %3145
      %v3147 = vsel %vm925, %v3105, 0.0
      %3148 = vadd.xlane.f32.xlu0 %v3147
      %v3149 = vpop.xlane.xlu0 %3148
      %v3150 = vsel %vm925, %v3106, 0.0
      %3151 = vadd.xlane.f32.xlu0 %v3150
      %v3152 = vpop.xlane.xlu0 %3151
      %v3153 = vsel %vm925, %v3107, 0.0
      %3154 = vadd.xlane.f32.xlu0 %v3153
      %v3155 = vpop.xlane.xlu0 %3154
      %v3156 = vsel %vm925, %v3108, 0.0
      %3157 = vadd.xlane.f32.xlu0 %v3156
      %v3158 = vpop.xlane.xlu0 %3157
      %v3159 = vmul.f32 %v3113, %v974
      %v3160 = vmul.f32 %v3116, %v974
      %v3161 = vmul.f32 %v3119, %v974
      %v3162 = vmul.f32 %v3122, %v974
      %v3163 = vmul.f32 %v3125, %v974
      %v3164 = vmul.f32 %v3128, %v974
      %v3165 = vmul.f32 %v3131, %v974
      %v3166 = vmul.f32 %v3134, %v974
      %v3167 = vmul.f32 %v3137, %v974
      %v3168 = vmul.f32 %v3140, %v974
      %v3169 = vmul.f32 %v3143, %v974
      %v3170 = vmul.f32 %v3146, %v974
      %v3171 = vmul.f32 %v3149, %v974
      %v3172 = vmul.f32 %v3152, %v974
      %v3173 = vmul.f32 %v3155, %v974
      %v3174 = vmul.f32 %v3158, %v974
      %v3175 = vsub.f32 %v3093, %v3159
      %v3176 = vsub.f32 %v3094, %v3160
      %v3177 = vsub.f32 %v3095, %v3161
      %v3178 = vsub.f32 %v3096, %v3162
      %v3179 = vsub.f32 %v3097, %v3163
      %v3180 = vsub.f32 %v3098, %v3164
      %v3181 = vsub.f32 %v3099, %v3165
      %v3182 = vsub.f32 %v3100, %v3166
      %v3183 = vsub.f32 %v3101, %v3167
      %v3184 = vsub.f32 %v3102, %v3168
      %v3185 = vsub.f32 %v3103, %v3169
      %v3186 = vsub.f32 %v3104, %v3170
      %v3187 = vsub.f32 %v3105, %v3171
      %v3188 = vsub.f32 %v3106, %v3172
      %v3189 = vsub.f32 %v3107, %v3173
      %v3190 = vsub.f32 %v3108, %v3174
      %v3191 = vmul.f32 %v3175, %v3175
      %v3192 = vmul.f32 %v3176, %v3176
      %v3193 = vmul.f32 %v3177, %v3177
      %v3194 = vmul.f32 %v3178, %v3178
      %v3195 = vmul.f32 %v3179, %v3179
      %v3196 = vmul.f32 %v3180, %v3180
      %v3197 = vmul.f32 %v3181, %v3181
      %v3198 = vmul.f32 %v3182, %v3182
      %v3199 = vmul.f32 %v3183, %v3183
      %v3200 = vmul.f32 %v3184, %v3184
      %v3201 = vmul.f32 %v3185, %v3185
      %v3202 = vmul.f32 %v3186, %v3186
      %v3203 = vmul.f32 %v3187, %v3187
      %v3204 = vmul.f32 %v3188, %v3188
      %v3205 = vmul.f32 %v3189, %v3189
      %v3206 = vmul.f32 %v3190, %v3190
      %v3207 = vsel %vm925, %v3191, 0.0
      %3208 = vadd.xlane.f32.xlu0 %v3207
      %v3209 = vpop.xlane.xlu0 %3208
      %v3210 = vsel %vm925, %v3192, 0.0
      %3211 = vadd.xlane.f32.xlu0 %v3210
      %v3212 = vpop.xlane.xlu0 %3211
      %v3213 = vsel %vm925, %v3193, 0.0
      %3214 = vadd.xlane.f32.xlu0 %v3213
      %v3215 = vpop.xlane.xlu0 %3214
      %v3216 = vsel %vm925, %v3194, 0.0
      %3217 = vadd.xlane.f32.xlu0 %v3216
      %v3218 = vpop.xlane.xlu0 %3217
      %v3219 = vsel %vm925, %v3195, 0.0
      %3220 = vadd.xlane.f32.xlu0 %v3219
      %v3221 = vpop.xlane.xlu0 %3220
      %v3222 = vsel %vm925, %v3196, 0.0
      %3223 = vadd.xlane.f32.xlu0 %v3222
      %v3224 = vpop.xlane.xlu0 %3223
      %v3225 = vsel %vm925, %v3197, 0.0
      %3226 = vadd.xlane.f32.xlu0 %v3225
      %v3227 = vpop.xlane.xlu0 %3226
      %v3228 = vsel %vm925, %v3198, 0.0
      %3229 = vadd.xlane.f32.xlu0 %v3228
      %v3230 = vpop.xlane.xlu0 %3229
      %v3231 = vsel %vm925, %v3199, 0.0
      %3232 = vadd.xlane.f32.xlu0 %v3231
      %v3233 = vpop.xlane.xlu0 %3232
      %v3234 = vsel %vm925, %v3200, 0.0
      %3235 = vadd.xlane.f32.xlu0 %v3234
      %v3236 = vpop.xlane.xlu0 %3235
      %v3237 = vsel %vm925, %v3201, 0.0
      %3238 = vadd.xlane.f32.xlu0 %v3237
      %v3239 = vpop.xlane.xlu0 %3238
      %v3240 = vsel %vm925, %v3202, 0.0
      %3241 = vadd.xlane.f32.xlu0 %v3240
      %v3242 = vpop.xlane.xlu0 %3241
      %v3243 = vsel %vm925, %v3203, 0.0
      %3244 = vadd.xlane.f32.xlu0 %v3243
      %v3245 = vpop.xlane.xlu0 %3244
      %v3246 = vsel %vm925, %v3204, 0.0
      %3247 = vadd.xlane.f32.xlu0 %v3246
      %v3248 = vpop.xlane.xlu0 %3247
      %v3249 = vsel %vm925, %v3205, 0.0
      %3250 = vadd.xlane.f32.xlu0 %v3249
      %v3251 = vpop.xlane.xlu0 %3250
      %v3252 = vsel %vm925, %v3206, 0.0
      %3253 = vadd.xlane.f32.xlu0 %v3252
      %v3254 = vpop.xlane.xlu0 %3253
      %v3255 = vmul.f32 %v3209, %v974
      %v3256 = vmul.f32 %v3212, %v974
      %v3257 = vmul.f32 %v3215, %v974
      %v3258 = vmul.f32 %v3218, %v974
      %v3259 = vmul.f32 %v3221, %v974
      %v3260 = vmul.f32 %v3224, %v974
      %v3261 = vmul.f32 %v3227, %v974
      %v3262 = vmul.f32 %v3230, %v974
      %v3263 = vmul.f32 %v3233, %v974
      %v3264 = vmul.f32 %v3236, %v974
      %v3265 = vmul.f32 %v3239, %v974
      %v3266 = vmul.f32 %v3242, %v974
      %v3267 = vmul.f32 %v3245, %v974
      %v3268 = vmul.f32 %v3248, %v974
      %v3269 = vmul.f32 %v3251, %v974
      %v3270 = vmul.f32 %v3254, %v974
      %v3271 = vadd.f32 %v3255, 1e-06
      %v3272 = vadd.f32 %v3256, 1e-06
      %v3273 = vadd.f32 %v3257, 1e-06
      %v3274 = vadd.f32 %v3258, 1e-06
      %v3275 = vadd.f32 %v3259, 1e-06
      %v3276 = vadd.f32 %v3260, 1e-06
      %v3277 = vadd.f32 %v3261, 1e-06
      %v3278 = vadd.f32 %v3262, 1e-06
      %v3279 = vadd.f32 %v3263, 1e-06
      %v3280 = vadd.f32 %v3264, 1e-06
      %v3281 = vadd.f32 %v3265, 1e-06
      %v3282 = vadd.f32 %v3266, 1e-06
      %v3283 = vadd.f32 %v3267, 1e-06
      %v3284 = vadd.f32 %v3268, 1e-06
      %v3285 = vadd.f32 %v3269, 1e-06
      %v3286 = vadd.f32 %v3270, 1e-06
      %v3287 = vrsqrt.pop %v3271
      %v3288 = vrsqrt.pop %v3272
      %v3289 = vrsqrt.pop %v3273
      %v3290 = vrsqrt.pop %v3274
      %v3291 = vrsqrt.pop %v3275
      %v3292 = vrsqrt.pop %v3276
      %v3293 = vrsqrt.pop %v3277
      %v3294 = vrsqrt.pop %v3278
      %v3295 = vrsqrt.pop %v3279
      %v3296 = vrsqrt.pop %v3280
      %v3297 = vrsqrt.pop %v3281
      %v3298 = vrsqrt.pop %v3282
      %v3299 = vrsqrt.pop %v3283
      %v3300 = vrsqrt.pop %v3284
      %v3301 = vrsqrt.pop %v3285
      %v3302 = vrsqrt.pop %v3286
      %v3303 = vmul.f32 %v3175, %v3287
      %v3304 = vmul.f32 %v3176, %v3288
      %v3305 = vmul.f32 %v3177, %v3289
      %v3306 = vmul.f32 %v3178, %v3290
      %v3307 = vmul.f32 %v3179, %v3291
      %v3308 = vmul.f32 %v3180, %v3292
      %v3309 = vmul.f32 %v3181, %v3293
      %v3310 = vmul.f32 %v3182, %v3294
      %v3311 = vmul.f32 %v3183, %v3295
      %v3312 = vmul.f32 %v3184, %v3296
      %v3313 = vmul.f32 %v3185, %v3297
      %v3314 = vmul.f32 %v3186, %v3298
      %v3315 = vmul.f32 %v3187, %v3299
      %v3316 = vmul.f32 %v3188, %v3300
      %v3317 = vmul.f32 %v3189, %v3301
      %v3318 = vmul.f32 %v3190, %v3302
      %v3320 = vlaneseq
      %v3321 = vshrl.u32 %v3320, 7
      %v3322 = vsub.s32 0, %v3321
      %v3323 = vrot.slane %v3109, %v3322
      %v3325 = vmul.f32 %v3303, %v3323
      %v3326 = vmul.f32 %v3304, %v3323
      %v3327 = vmul.f32 %v3305, %v3323
      %v3328 = vmul.f32 %v3306, %v3323
      %v3329 = vmul.f32 %v3307, %v3323
      %v3330 = vmul.f32 %v3308, %v3323
      %v3331 = vmul.f32 %v3309, %v3323
      %v3332 = vmul.f32 %v3310, %v3323
      %v3333 = vmul.f32 %v3311, %v3323
      %v3334 = vmul.f32 %v3312, %v3323
      %v3335 = vmul.f32 %v3313, %v3323
      %v3336 = vmul.f32 %v3314, %v3323
      %v3337 = vmul.f32 %v3315, %v3323
      %v3338 = vmul.f32 %v3316, %v3323
      %v3339 = vmul.f32 %v3317, %v3323
      %v3340 = vmul.f32 %v3318, %v3323
      %v3342 = vlaneseq
      %v3343 = vshrl.u32 %v3342, 7
      %v3344 = vsub.s32 0, %v3343
      %v3345 = vrot.slane %v3110, %v3344
      %v3347 = vadd.f32 %v3325, %v3345
      %v3348 = vadd.f32 %v3326, %v3345
      %v3349 = vadd.f32 %v3327, %v3345
      %v3350 = vadd.f32 %v3328, %v3345
      %v3351 = vadd.f32 %v3329, %v3345
      %v3352 = vadd.f32 %v3330, %v3345
      %v3353 = vadd.f32 %v3331, %v3345
      %v3354 = vadd.f32 %v3332, %v3345
      %v3355 = vadd.f32 %v3333, %v3345
      %v3356 = vadd.f32 %v3334, %v3345
      %v3357 = vadd.f32 %v3335, %v3345
      %v3358 = vadd.f32 %v3336, %v3345
      %v3359 = vadd.f32 %v3337, %v3345
      %v3360 = vadd.f32 %v3338, %v3345
      %v3361 = vadd.f32 %v3339, %v3345
      %v3362 = vadd.f32 %v3340, %v3345
      %v3363 = vpack.c.bf16 %v3348, %v3347
      %v3364 = vpack.c.bf16 %v3350, %v3349
      %v3365 = vpack.c.bf16 %v3352, %v3351
      %v3366 = vpack.c.bf16 %v3354, %v3353
      %v3367 = vpack.c.bf16 %v3356, %v3355
      %v3368 = vpack.c.bf16 %v3358, %v3357
      %v3369 = vpack.c.bf16 %v3360, %v3359
      %v3370 = vpack.c.bf16 %v3362, %v3361
      %v3371 = vld [vmem:[%s852] sm:$0xf]
      %v3372 = vld [vmem:[%s852 + $0x4] sm:$0xf]
      %v3373 = vld [vmem:[%s852 + $0x8] sm:$0xf]
      %v3374 = vld [vmem:[%s852 + $0xc] sm:$0xf]
      %v3375 = vld [vmem:[%s855] sm:$0x1]
      %v3377 = vlaneseq
      %v3378 = vshrl.u32 %v3377, 7
      %v3379 = vsub.s32 0, %v3378
      %v3380 = vrot.slane %v3375, %v3379
      %v3386 = vunpack.c.l.b16 %v3371
      %v3387 = vunpack.c.l.b16 %v3372
      %v3388 = vunpack.c.l.b16 %v3373
      %v3389 = vunpack.c.l.b16 %v3374
      %v3390 = vpack.c.b16 %v3387, %v3386
      %v3391 = vpack.c.b16 %v3389, %v3388
      %v3395 = vsel %vm925, %v3363, 0
      %v3398 = vsel %vm925, %v3364, 0
      %v3401 = vsel %vm925, %v3365, 0
      %v3404 = vsel %vm925, %v3366, 0
      %v3407 = vsel %vm925, %v3367, 0
      %v3410 = vsel %vm925, %v3368, 0
      %v3413 = vsel %vm925, %v3369, 0
      %v3416 = vsel %vm925, %v3370, 0
      %3418 = vmatprep.subr.bf16.mxu0 0
      %3419 = vmatpush1.bf16.msra.mxu0 %v3390
      %3420 = vmatprep.subr.bf16.mxu0 0
      %3421 = vmatpush1.bf16.msra.mxu0 %v3391
      %3422 = vmatprep.subr.bf16.mxu0 0
      %3423 = vmatpush1.bf16.msra.mxu0 0
      %3424 = vmatprep.subr.bf16.mxu0 0
      %3425 = vmatpush1.bf16.msra.mxu0 0
      %3426 = vmatprep.subr.bf16.mxu0 0
      %3427 = vmatpush1.bf16.msra.mxu0 0
      %3428 = vmatprep.subr.bf16.mxu0 0
      %3429 = vmatpush1.bf16.msra.mxu0 0
      %3430 = vmatprep.subr.bf16.mxu0 0
      %3431 = vmatpush1.bf16.msra.mxu0 0
      %3432 = vmatprep.subr.bf16.mxu0 0
      %3433 = vmatpush1.bf16.msra.mxu0 0
      %3434 = vmatprep.subr.bf16.mxu0 0
      %3435 = vmatpush1.bf16.msra.mxu0 0
      %3436 = vmatprep.subr.bf16.mxu0 0
      %3437 = vmatpush1.bf16.msra.mxu0 0
      %3438 = vmatprep.subr.bf16.mxu0 0
      %3439 = vmatpush1.bf16.msra.mxu0 0
      %3440 = vmatprep.subr.bf16.mxu0 0
      %3441 = vmatpush1.bf16.msra.mxu0 0
      %3442 = vmatprep.subr.bf16.mxu0 0
      %3443 = vmatpush1.bf16.msra.mxu0 0
      %3444 = vmatprep.subr.bf16.mxu0 0
      %3445 = vmatpush1.bf16.msra.mxu0 0
      %3446 = vmatprep.subr.bf16.mxu0 0
      %3447 = vmatpush1.bf16.msra.mxu0 0
      %3448 = vmatprep.subr.bf16.mxu0 0
      %3449 = vmatpush1.bf16.msra.mxu0 0
      %3450 = vmatprep.mubr.bf16.mxu0 0
      %3451 = vmatmul.mubr.bf16.gmra.mrb[0].mxu0 %v3395
      %v3452 = vpop.f32.mrb[0].mxu0
      %v3453 = vadd.f32 %v3380, %v3452
      %v3454 = vpop.f32.mrb[0].mxu0
      %v3455 = vpop.f32.mrb[0].mxu0
      %v3456 = vadd.f32 %v3380, %v3455
      %v3457 = vpop.f32.mrb[0].mxu0
      %3458 = vmatprep.mubr.bf16.mxu0 0
      %3459 = vmatmul.mubr.bf16.gmra.mrb[0].mxu0 %v3398
      %v3460 = vpop.f32.mrb[0].mxu0
      %v3461 = vadd.f32 %v3380, %v3460
      %v3462 = vpop.f32.mrb[0].mxu0
      %v3463 = vpop.f32.mrb[0].mxu0
      %v3464 = vadd.f32 %v3380, %v3463
      %v3465 = vpop.f32.mrb[0].mxu0
      %3466 = vmatprep.mubr.bf16.mxu0 0
      %3467 = vmatmul.mubr.bf16.gmra.mrb[0].mxu0 %v3401
      %v3468 = vpop.f32.mrb[0].mxu0
      %v3469 = vadd.f32 %v3380, %v3468
      %v3470 = vpop.f32.mrb[0].mxu0
      %v3471 = vpop.f32.mrb[0].mxu0
      %v3472 = vadd.f32 %v3380, %v3471
      %v3473 = vpop.f32.mrb[0].mxu0
      %3474 = vmatprep.mubr.bf16.mxu0 0
      %3475 = vmatmul.mubr.bf16.gmra.mrb[0].mxu0 %v3404
      %v3476 = vpop.f32.mrb[0].mxu0
      %v3477 = vadd.f32 %v3380, %v3476
      %v3478 = vpop.f32.mrb[0].mxu0
      %v3479 = vpop.f32.mrb[0].mxu0
      %v3480 = vadd.f32 %v3380, %v3479
      %v3481 = vpop.f32.mrb[0].mxu0
      %3482 = vmatprep.mubr.bf16.mxu0 0
      %3483 = vmatmul.mubr.bf16.gmra.mrb[0].mxu0 %v3407
      %v3484 = vpop.f32.mrb[0].mxu0
      %v3485 = vadd.f32 %v3380, %v3484
      %v3486 = vpop.f32.mrb[0].mxu0
      %v3487 = vpop.f32.mrb[0].mxu0
      %v3488 = vadd.f32 %v3380, %v3487
      %v3489 = vpop.f32.mrb[0].mxu0
      %3490 = vmatprep.mubr.bf16.mxu0 0
      %3491 = vmatmul.mubr.bf16.gmra.mrb[0].mxu0 %v3410
      %v3492 = vpop.f32.mrb[0].mxu0
      %v3493 = vadd.f32 %v3380, %v3492
      %v3494 = vpop.f32.mrb[0].mxu0
      %v3495 = vpop.f32.mrb[0].mxu0
      %v3496 = vadd.f32 %v3380, %v3495
      %v3497 = vpop.f32.mrb[0].mxu0
      %3498 = vmatprep.mubr.bf16.mxu0 0
      %3499 = vmatmul.mubr.bf16.gmra.mrb[0].mxu0 %v3413
      %v3500 = vpop.f32.mrb[0].mxu0
      %v3501 = vadd.f32 %v3380, %v3500
      %v3502 = vpop.f32.mrb[0].mxu0
      %v3503 = vpop.f32.mrb[0].mxu0
      %v3504 = vadd.f32 %v3380, %v3503
      %v3505 = vpop.f32.mrb[0].mxu0
      %3506 = vmatprep.mubr.bf16.mxu0 0
      %3507 = vmatmul.mubr.bf16.gmra.mrb[0].mxu0 %v3416
      %v3508 = vpop.f32.mrb[0].mxu0
      %v3509 = vadd.f32 %v3380, %v3508
      %v3510 = vpop.f32.mrb[0].mxu0
      %v3511 = vpop.f32.mrb[0].mxu0
      %v3512 = vadd.f32 %v3380, %v3511
      %v3513 = vpop.f32.mrb[0].mxu0
      %3514 = vdwg.mxu0
      %v3515 = vmax.f32 %v3453, 0.0
      %v3516 = vmax.f32 %v3456, 0.0
      %v3517 = vmax.f32 %v3461, 0.0
      %v3518 = vmax.f32 %v3464, 0.0
      %v3519 = vmax.f32 %v3469, 0.0
      %v3520 = vmax.f32 %v3472, 0.0
      %v3521 = vmax.f32 %v3477, 0.0
      %v3522 = vmax.f32 %v3480, 0.0
      %v3523 = vmax.f32 %v3485, 0.0
      %v3524 = vmax.f32 %v3488, 0.0
      %v3525 = vmax.f32 %v3493, 0.0
      %v3526 = vmax.f32 %v3496, 0.0
      %v3527 = vmax.f32 %v3501, 0.0
      %v3528 = vmax.f32 %v3504, 0.0
      %v3529 = vmax.f32 %v3509, 0.0
      %v3530 = vmax.f32 %v3512, 0.0
      %v3531 = vpack.c.bf16 %v3516, %v3515
      %v3532 = vpack.c.bf16 %v3518, %v3517
      %v3533 = vpack.c.bf16 %v3520, %v3519
      %v3534 = vpack.c.bf16 %v3522, %v3521
      %v3535 = vpack.c.bf16 %v3524, %v3523
      %v3536 = vpack.c.bf16 %v3526, %v3525
      %v3537 = vpack.c.bf16 %v3528, %v3527
      %v3538 = vpack.c.bf16 %v3530, %v3529
      %v3539 = vld [vmem:[%s860] sm:$0xf]
      %v3540 = vld [vmem:[%s860 + $0x4] sm:$0xf]
      %v3541 = vld [vmem:[%s860 + $0x8] sm:$0xf]
      %v3542 = vld [vmem:[%s860 + $0xc] sm:$0xf]
      %v3543 = vld [vmem:[%s860 + $0x10] sm:$0xf]
      %v3544 = vld [vmem:[%s860 + $0x14] sm:$0xf]
      %v3545 = vld [vmem:[%s860 + $0x18] sm:$0xf]
      %v3546 = vld [vmem:[%s860 + $0x1c] sm:$0xf]
      %v3547 = vld [vmem:[%s860 + $0x20] sm:$0xf]
      %v3548 = vld [vmem:[%s860 + $0x24] sm:$0xf]
      %v3549 = vld [vmem:[%s860 + $0x28] sm:$0xf]
      %v3550 = vld [vmem:[%s860 + $0x2c] sm:$0xf]
      %v3551 = vld [vmem:[%s860 + $0x30] sm:$0xf]
      %v3552 = vld [vmem:[%s860 + $0x34] sm:$0xf]
      %v3553 = vld [vmem:[%s860 + $0x38] sm:$0xf]
      %v3554 = vld [vmem:[%s860 + $0x3c] sm:$0xf]
      %v3571 = vunpack.c.l.b16 %v3539
      %v3572 = vunpack.c.l.b16 %v3540
      %v3573 = vunpack.c.l.b16 %v3541
      %v3574 = vunpack.c.l.b16 %v3542
      %v3575 = vunpack.c.l.b16 %v3543
      %v3576 = vunpack.c.l.b16 %v3544
      %v3577 = vunpack.c.l.b16 %v3545
      %v3578 = vunpack.c.l.b16 %v3546
      %v3579 = vunpack.c.l.b16 %v3547
      %v3580 = vunpack.c.l.b16 %v3548
      %v3581 = vunpack.c.l.b16 %v3549
      %v3582 = vunpack.c.l.b16 %v3550
      %v3583 = vunpack.c.l.b16 %v3551
      %v3584 = vunpack.c.l.b16 %v3552
      %v3585 = vunpack.c.l.b16 %v3553
      %v3586 = vunpack.c.l.b16 %v3554
      %v3587 = vpack.c.b16 %v3572, %v3571
      %v3588 = vpack.c.b16 %v3574, %v3573
      %v3589 = vpack.c.b16 %v3576, %v3575
      %v3590 = vpack.c.b16 %v3578, %v3577
      %v3591 = vpack.c.b16 %v3580, %v3579
      %v3592 = vpack.c.b16 %v3582, %v3581
      %v3593 = vpack.c.b16 %v3584, %v3583
      %v3594 = vpack.c.b16 %v3586, %v3585
      %3603 = vmatprep.subr.bf16.mxu0 0
      %3604 = vmatpush1.bf16.msra.mxu0 %v3587
      %3605 = vmatprep.subr.bf16.mxu0 0
      %3606 = vmatpush1.bf16.msra.mxu0 %v3588
      %3607 = vmatprep.subr.bf16.mxu0 0
      %3608 = vmatpush1.bf16.msra.mxu0 %v3589
      %3609 = vmatprep.subr.bf16.mxu0 0
      %3610 = vmatpush1.bf16.msra.mxu0 %v3590
      %3611 = vmatprep.subr.bf16.mxu0 0
      %3612 = vmatpush1.bf16.msra.mxu0 %v3591
      %3613 = vmatprep.subr.bf16.mxu0 0
      %3614 = vmatpush1.bf16.msra.mxu0 %v3592
      %3615 = vmatprep.subr.bf16.mxu0 0
      %3616 = vmatpush1.bf16.msra.mxu0 %v3593
      %3617 = vmatprep.subr.bf16.mxu0 0
      %3618 = vmatpush1.bf16.msra.mxu0 %v3594
      %3619 = vmatprep.subr.bf16.mxu0 0
      %3620 = vmatpush1.bf16.msra.mxu0 0
      %3621 = vmatprep.subr.bf16.mxu0 0
      %3622 = vmatpush1.bf16.msra.mxu0 0
      %3623 = vmatprep.subr.bf16.mxu0 0
      %3624 = vmatpush1.bf16.msra.mxu0 0
      %3625 = vmatprep.subr.bf16.mxu0 0
      %3626 = vmatpush1.bf16.msra.mxu0 0
      %3627 = vmatprep.subr.bf16.mxu0 0
      %3628 = vmatpush1.bf16.msra.mxu0 0
      %3629 = vmatprep.subr.bf16.mxu0 0
      %3630 = vmatpush1.bf16.msra.mxu0 0
      %3631 = vmatprep.subr.bf16.mxu0 0
      %3632 = vmatpush1.bf16.msra.mxu0 0
      %3633 = vmatprep.subr.bf16.mxu0 0
      %3634 = vmatpush1.bf16.msra.mxu0 0
      %3635 = vmatprep.mubr.bf16.mxu0 0
      %3636 = vmatmul.mubr.bf16.gmra.mrb[0].mxu0 %v3531
      %v3637 = vpop.f32.mrb[0].mxu0
      %v3638 = vadd.f32 0.0, %v3637
      %v3639 = vpop.f32.mrb[0].mxu0
      %v3640 = vpop.f32.mrb[0].mxu0
      %v3641 = vadd.f32 0.0, %v3640
      %v3642 = vpop.f32.mrb[0].mxu0
      %3643 = vmatprep.mubr.bf16.mxu0 0
      %3644 = vmatmul.mubr.bf16.gmra.mrb[0].mxu0 %v3532
      %v3645 = vpop.f32.mrb[0].mxu0
      %v3646 = vadd.f32 0.0, %v3645
      %v3647 = vpop.f32.mrb[0].mxu0
      %v3648 = vpop.f32.mrb[0].mxu0
      %v3649 = vadd.f32 0.0, %v3648
      %v3650 = vpop.f32.mrb[0].mxu0
      %3651 = vmatprep.mubr.bf16.mxu0 0
      %3652 = vmatmul.mubr.bf16.gmra.mrb[0].mxu0 %v3533
      %v3653 = vpop.f32.mrb[0].mxu0
      %v3654 = vadd.f32 0.0, %v3653
      %v3655 = vpop.f32.mrb[0].mxu0
      %v3656 = vpop.f32.mrb[0].mxu0
      %v3657 = vadd.f32 0.0, %v3656
      %v3658 = vpop.f32.mrb[0].mxu0
      %3659 = vmatprep.mubr.bf16.mxu0 0
      %3660 = vmatmul.mubr.bf16.gmra.mrb[0].mxu0 %v3534
      %v3661 = vpop.f32.mrb[0].mxu0
      %v3662 = vadd.f32 0.0, %v3661
      %v3663 = vpop.f32.mrb[0].mxu0
      %v3664 = vpop.f32.mrb[0].mxu0
      %v3665 = vadd.f32 0.0, %v3664
      %v3666 = vpop.f32.mrb[0].mxu0
      %3667 = vmatprep.mubr.bf16.mxu0 0
      %3668 = vmatmul.mubr.bf16.gmra.mrb[0].mxu0 %v3535
      %v3669 = vpop.f32.mrb[0].mxu0
      %v3670 = vadd.f32 0.0, %v3669
      %v3671 = vpop.f32.mrb[0].mxu0
      %v3672 = vpop.f32.mrb[0].mxu0
      %v3673 = vadd.f32 0.0, %v3672
      %v3674 = vpop.f32.mrb[0].mxu0
      %3675 = vmatprep.mubr.bf16.mxu0 0
      %3676 = vmatmul.mubr.bf16.gmra.mrb[0].mxu0 %v3536
      %v3677 = vpop.f32.mrb[0].mxu0
      %v3678 = vadd.f32 0.0, %v3677
      %v3679 = vpop.f32.mrb[0].mxu0
      %v3680 = vpop.f32.mrb[0].mxu0
      %v3681 = vadd.f32 0.0, %v3680
      %v3682 = vpop.f32.mrb[0].mxu0
      %3683 = vmatprep.mubr.bf16.mxu0 0
      %3684 = vmatmul.mubr.bf16.gmra.mrb[0].mxu0 %v3537
      %v3685 = vpop.f32.mrb[0].mxu0
      %v3686 = vadd.f32 0.0, %v3685
      %v3687 = vpop.f32.mrb[0].mxu0
      %v3688 = vpop.f32.mrb[0].mxu0
      %v3689 = vadd.f32 0.0, %v3688
      %v3690 = vpop.f32.mrb[0].mxu0
      %3691 = vmatprep.mubr.bf16.mxu0 0
      %3692 = vmatmul.mubr.bf16.gmra.mrb[0].mxu0 %v3538
      %v3693 = vpop.f32.mrb[0].mxu0
      %v3694 = vadd.f32 0.0, %v3693
      %v3695 = vpop.f32.mrb[0].mxu0
      %v3696 = vpop.f32.mrb[0].mxu0
      %v3697 = vadd.f32 0.0, %v3696
      %v3698 = vpop.f32.mrb[0].mxu0
      %3699 = vdwg.mxu0
      %v3700 = vadd.f32 %v3093, %v3638
      %v3701 = vadd.f32 %v3094, %v3641
      %v3702 = vadd.f32 %v3095, %v3646
      %v3703 = vadd.f32 %v3096, %v3649
      %v3704 = vadd.f32 %v3097, %v3654
      %v3705 = vadd.f32 %v3098, %v3657
      %v3706 = vadd.f32 %v3099, %v3662
      %v3707 = vadd.f32 %v3100, %v3665
      %v3708 = vadd.f32 %v3101, %v3670
      %v3709 = vadd.f32 %v3102, %v3673
      %v3710 = vadd.f32 %v3103, %v3678
      %v3711 = vadd.f32 %v3104, %v3681
      %v3712 = vadd.f32 %v3105, %v3686
      %v3713 = vadd.f32 %v3106, %v3689
      %v3714 = vadd.f32 %v3107, %v3694
      %v3715 = vadd.f32 %v3108, %v3697
      %v3716 = vld [vmem:[%s863] sm:$0x1]
      %v3718 = vlaneseq
      %v3719 = vshrl.u32 %v3718, 7
      %v3720 = vsub.s32 0, %v3719
      %v3721 = vrot.slane %v3716, %v3720
      %v3723 = vadd.f32 %v3700, %v3721
      %v3724 = vadd.f32 %v3701, %v3721
      %v3725 = vadd.f32 %v3702, %v3721
      %v3726 = vadd.f32 %v3703, %v3721
      %v3727 = vadd.f32 %v3704, %v3721
      %v3728 = vadd.f32 %v3705, %v3721
      %v3729 = vadd.f32 %v3706, %v3721
      %v3730 = vadd.f32 %v3707, %v3721
      %v3731 = vadd.f32 %v3708, %v3721
      %v3732 = vadd.f32 %v3709, %v3721
      %v3733 = vadd.f32 %v3710, %v3721
      %v3734 = vadd.f32 %v3711, %v3721
      %v3735 = vadd.f32 %v3712, %v3721
      %v3736 = vadd.f32 %v3713, %v3721
      %v3737 = vadd.f32 %v3714, %v3721
      %v3738 = vadd.f32 %v3715, %v3721
      %3739 = vst.msk [vmem:[%s906] sm:$0xff] %vm925, %v3723
      %3740 = vst.msk [vmem:[%s906 + $0x8] sm:$0xff] %vm925, %v3724
      %3741 = vst.msk [vmem:[%s906 + $0x10] sm:$0xff] %vm925, %v3725
      %3742 = vst.msk [vmem:[%s906 + $0x18] sm:$0xff] %vm925, %v3726
      %3743 = vst.msk [vmem:[%s906 + $0x20] sm:$0xff] %vm925, %v3727
      %3744 = vst.msk [vmem:[%s906 + $0x28] sm:$0xff] %vm925, %v3728
      %3745 = vst.msk [vmem:[%s906 + $0x30] sm:$0xff] %vm925, %v3729
      %3746 = vst.msk [vmem:[%s906 + $0x38] sm:$0xff] %vm925, %v3730
      %3747 = vst.msk [vmem:[%s906 + $0x40] sm:$0xff] %vm925, %v3731
      %3748 = vst.msk [vmem:[%s906 + $0x48] sm:$0xff] %vm925, %v3732
      %3749 = vst.msk [vmem:[%s906 + $0x50] sm:$0xff] %vm925, %v3733
      %3750 = vst.msk [vmem:[%s906 + $0x58] sm:$0xff] %vm925, %v3734
      %3751 = vst.msk [vmem:[%s906 + $0x60] sm:$0xff] %vm925, %v3735
      %3752 = vst.msk [vmem:[%s906 + $0x68] sm:$0xff] %vm925, %v3736
      %3753 = vst.msk [vmem:[%s906 + $0x70] sm:$0xff] %vm925, %v3737
      %3754 = vst.msk [vmem:[%s906 + $0x78] sm:$0xff] %vm925, %v3738
      %p3755 = scmp.eq.s32.totalorder %s34, 1
      // Predicated region
      $region101: #{tpu_custom_call.1} parent=95 // pred_check
        %p3756 = pneg %p3755
      $region102: #{tpu_custom_call.1} parent=95 // pred_check_branch
        %3758 = sbr.rel (%p3756) target = $region104
      $region103: #{tpu_custom_call.1} parent=95 // pred_region
        %v3759 = vld [vmem:[%s17] sm:$0x1]
        %v3760 = vld [vmem:[%s18] sm:$0x1]
        %v3761 = vsel %vm925, %v3723, 0.0
        %3762 = vadd.xlane.f32.xlu0 %v3761
        %v3763 = vpop.xlane.xlu0 %3762
        %v3764 = vsel %vm925, %v3724, 0.0
        %3765 = vadd.xlane.f32.xlu0 %v3764
        %v3766 = vpop.xlane.xlu0 %3765
        %v3767 = vsel %vm925, %v3725, 0.0
        %3768 = vadd.xlane.f32.xlu0 %v3767
        %v3769 = vpop.xlane.xlu0 %3768
        %v3770 = vsel %vm925, %v3726, 0.0
        %3771 = vadd.xlane.f32.xlu0 %v3770
        %v3772 = vpop.xlane.xlu0 %3771
        %v3773 = vsel %vm925, %v3727, 0.0
        %3774 = vadd.xlane.f32.xlu0 %v3773
        %v3775 = vpop.xlane.xlu0 %3774
        %v3776 = vsel %vm925, %v3728, 0.0
        %3777 = vadd.xlane.f32.xlu0 %v3776
        %v3778 = vpop.xlane.xlu0 %3777
        %v3779 = vsel %vm925, %v3729, 0.0
        %3780 = vadd.xlane.f32.xlu0 %v3779
        %v3781 = vpop.xlane.xlu0 %3780
        %v3782 = vsel %vm925, %v3730, 0.0
        %3783 = vadd.xlane.f32.xlu0 %v3782
        %v3784 = vpop.xlane.xlu0 %3783
        %v3785 = vsel %vm925, %v3731, 0.0
        %3786 = vadd.xlane.f32.xlu0 %v3785
        %v3787 = vpop.xlane.xlu0 %3786
        %v3788 = vsel %vm925, %v3732, 0.0
        %3789 = vadd.xlane.f32.xlu0 %v3788
        %v3790 = vpop.xlane.xlu0 %3789
        %v3791 = vsel %vm925, %v3733, 0.0
        %3792 = vadd.xlane.f32.xlu0 %v3791
        %v3793 = vpop.xlane.xlu0 %3792
        %v3794 = vsel %vm925, %v3734, 0.0
        %3795 = vadd.xlane.f32.xlu0 %v3794
        %v3796 = vpop.xlane.xlu0 %3795
        %v3797 = vsel %vm925, %v3735, 0.0
        %3798 = vadd.xlane.f32.xlu0 %v3797
        %v3799 = vpop.xlane.xlu0 %3798
        %v3800 = vsel %vm925, %v3736, 0.0
        %3801 = vadd.xlane.f32.xlu0 %v3800
        %v3802 = vpop.xlane.xlu0 %3801
        %v3803 = vsel %vm925, %v3737, 0.0
        %3804 = vadd.xlane.f32.xlu0 %v3803
        %v3805 = vpop.xlane.xlu0 %3804
        %v3806 = vsel %vm925, %v3738, 0.0
        %3807 = vadd.xlane.f32.xlu0 %v3806
        %v3808 = vpop.xlane.xlu0 %3807
        %v3809 = vmul.f32 %v3763, %v974
        %v3810 = vmul.f32 %v3766, %v974
        %v3811 = vmul.f32 %v3769, %v974
        %v3812 = vmul.f32 %v3772, %v974
        %v3813 = vmul.f32 %v3775, %v974
        %v3814 = vmul.f32 %v3778, %v974
        %v3815 = vmul.f32 %v3781, %v974
        %v3816 = vmul.f32 %v3784, %v974
        %v3817 = vmul.f32 %v3787, %v974
        %v3818 = vmul.f32 %v3790, %v974
        %v3819 = vmul.f32 %v3793, %v974
        %v3820 = vmul.f32 %v3796, %v974
        %v3821 = vmul.f32 %v3799, %v974
        %v3822 = vmul.f32 %v3802, %v974
        %v3823 = vmul.f32 %v3805, %v974
        %v3824 = vmul.f32 %v3808, %v974
        %v3825 = vsub.f32 %v3723, %v3809
        %v3826 = vsub.f32 %v3724, %v3810
        %v3827 = vsub.f32 %v3725, %v3811
        %v3828 = vsub.f32 %v3726, %v3812
        %v3829 = vsub.f32 %v3727, %v3813
        %v3830 = vsub.f32 %v3728, %v3814
        %v3831 = vsub.f32 %v3729, %v3815
        %v3832 = vsub.f32 %v3730, %v3816
        %v3833 = vsub.f32 %v3731, %v3817
        %v3834 = vsub.f32 %v3732, %v3818
        %v3835 = vsub.f32 %v3733, %v3819
        %v3836 = vsub.f32 %v3734, %v3820
        %v3837 = vsub.f32 %v3735, %v3821
        %v3838 = vsub.f32 %v3736, %v3822
        %v3839 = vsub.f32 %v3737, %v3823
        %v3840 = vsub.f32 %v3738, %v3824
        %v3841 = vmul.f32 %v3825, %v3825
        %v3842 = vmul.f32 %v3826, %v3826
        %v3843 = vmul.f32 %v3827, %v3827
        %v3844 = vmul.f32 %v3828, %v3828
        %v3845 = vmul.f32 %v3829, %v3829
        %v3846 = vmul.f32 %v3830, %v3830
        %v3847 = vmul.f32 %v3831, %v3831
        %v3848 = vmul.f32 %v3832, %v3832
        %v3849 = vmul.f32 %v3833, %v3833
        %v3850 = vmul.f32 %v3834, %v3834
        %v3851 = vmul.f32 %v3835, %v3835
        %v3852 = vmul.f32 %v3836, %v3836
        %v3853 = vmul.f32 %v3837, %v3837
        %v3854 = vmul.f32 %v3838, %v3838
        %v3855 = vmul.f32 %v3839, %v3839
        %v3856 = vmul.f32 %v3840, %v3840
        %v3857 = vsel %vm925, %v3841, 0.0
        %3858 = vadd.xlane.f32.xlu0 %v3857
        %v3859 = vpop.xlane.xlu0 %3858
        %v3860 = vsel %vm925, %v3842, 0.0
        %3861 = vadd.xlane.f32.xlu0 %v3860
        %v3862 = vpop.xlane.xlu0 %3861
        %v3863 = vsel %vm925, %v3843, 0.0
        %3864 = vadd.xlane.f32.xlu0 %v3863
        %v3865 = vpop.xlane.xlu0 %3864
        %v3866 = vsel %vm925, %v3844, 0.0
        %3867 = vadd.xlane.f32.xlu0 %v3866
        %v3868 = vpop.xlane.xlu0 %3867
        %v3869 = vsel %vm925, %v3845, 0.0
        %3870 = vadd.xlane.f32.xlu0 %v3869
        %v3871 = vpop.xlane.xlu0 %3870
        %v3872 = vsel %vm925, %v3846, 0.0
        %3873 = vadd.xlane.f32.xlu0 %v3872
        %v3874 = vpop.xlane.xlu0 %3873
        %v3875 = vsel %vm925, %v3847, 0.0
        %3876 = vadd.xlane.f32.xlu0 %v3875
        %v3877 = vpop.xlane.xlu0 %3876
        %v3878 = vsel %vm925, %v3848, 0.0
        %3879 = vadd.xlane.f32.xlu0 %v3878
        %v3880 = vpop.xlane.xlu0 %3879
        %v3881 = vsel %vm925, %v3849, 0.0
        %3882 = vadd.xlane.f32.xlu0 %v3881
        %v3883 = vpop.xlane.xlu0 %3882
        %v3884 = vsel %vm925, %v3850, 0.0
        %3885 = vadd.xlane.f32.xlu0 %v3884
        %v3886 = vpop.xlane.xlu0 %3885
        %v3887 = vsel %vm925, %v3851, 0.0
        %3888 = vadd.xlane.f32.xlu0 %v3887
        %v3889 = vpop.xlane.xlu0 %3888
        %v3890 = vsel %vm925, %v3852, 0.0
        %3891 = vadd.xlane.f32.xlu0 %v3890
        %v3892 = vpop.xlane.xlu0 %3891
        %v3893 = vsel %vm925, %v3853, 0.0
        %3894 = vadd.xlane.f32.xlu0 %v3893
        %v3895 = vpop.xlane.xlu0 %3894
        %v3896 = vsel %vm925, %v3854, 0.0
        %3897 = vadd.xlane.f32.xlu0 %v3896
        %v3898 = vpop.xlane.xlu0 %3897
        %v3899 = vsel %vm925, %v3855, 0.0
        %3900 = vadd.xlane.f32.xlu0 %v3899
        %v3901 = vpop.xlane.xlu0 %3900
        %v3902 = vsel %vm925, %v3856, 0.0
        %3903 = vadd.xlane.f32.xlu0 %v3902
        %v3904 = vpop.xlane.xlu0 %3903
        %v3905 = vmul.f32 %v3859, %v974
        %v3906 = vmul.f32 %v3862, %v974
        %v3907 = vmul.f32 %v3865, %v974
        %v3908 = vmul.f32 %v3868, %v974
        %v3909 = vmul.f32 %v3871, %v974
        %v3910 = vmul.f32 %v3874, %v974
        %v3911 = vmul.f32 %v3877, %v974
        %v3912 = vmul.f32 %v3880, %v974
        %v3913 = vmul.f32 %v3883, %v974
        %v3914 = vmul.f32 %v3886, %v974
        %v3915 = vmul.f32 %v3889, %v974
        %v3916 = vmul.f32 %v3892, %v974
        %v3917 = vmul.f32 %v3895, %v974
        %v3918 = vmul.f32 %v3898, %v974
        %v3919 = vmul.f32 %v3901, %v974
        %v3920 = vmul.f32 %v3904, %v974
        %v3921 = vadd.f32 %v3905, 1e-06
        %v3922 = vadd.f32 %v3906, 1e-06
        %v3923 = vadd.f32 %v3907, 1e-06
        %v3924 = vadd.f32 %v3908, 1e-06
        %v3925 = vadd.f32 %v3909, 1e-06
        %v3926 = vadd.f32 %v3910, 1e-06
        %v3927 = vadd.f32 %v3911, 1e-06
        %v3928 = vadd.f32 %v3912, 1e-06
        %v3929 = vadd.f32 %v3913, 1e-06
        %v3930 = vadd.f32 %v3914, 1e-06
        %v3931 = vadd.f32 %v3915, 1e-06
        %v3932 = vadd.f32 %v3916, 1e-06
        %v3933 = vadd.f32 %v3917, 1e-06
        %v3934 = vadd.f32 %v3918, 1e-06
        %v3935 = vadd.f32 %v3919, 1e-06
        %v3936 = vadd.f32 %v3920, 1e-06
        %v3937 = vrsqrt.pop %v3921
        %v3938 = vrsqrt.pop %v3922
        %v3939 = vrsqrt.pop %v3923
        %v3940 = vrsqrt.pop %v3924
        %v3941 = vrsqrt.pop %v3925
        %v3942 = vrsqrt.pop %v3926
        %v3943 = vrsqrt.pop %v3927
        %v3944 = vrsqrt.pop %v3928
        %v3945 = vrsqrt.pop %v3929
        %v3946 = vrsqrt.pop %v3930
        %v3947 = vrsqrt.pop %v3931
        %v3948 = vrsqrt.pop %v3932
        %v3949 = vrsqrt.pop %v3933
        %v3950 = vrsqrt.pop %v3934
        %v3951 = vrsqrt.pop %v3935
        %v3952 = vrsqrt.pop %v3936
        %v3953 = vmul.f32 %v3825, %v3937
        %v3954 = vmul.f32 %v3826, %v3938
        %v3955 = vmul.f32 %v3827, %v3939
        %v3956 = vmul.f32 %v3828, %v3940
        %v3957 = vmul.f32 %v3829, %v3941
        %v3958 = vmul.f32 %v3830, %v3942
        %v3959 = vmul.f32 %v3831, %v3943
        %v3960 = vmul.f32 %v3832, %v3944
        %v3961 = vmul.f32 %v3833, %v3945
        %v3962 = vmul.f32 %v3834, %v3946
        %v3963 = vmul.f32 %v3835, %v3947
        %v3964 = vmul.f32 %v3836, %v3948
        %v3965 = vmul.f32 %v3837, %v3949
        %v3966 = vmul.f32 %v3838, %v3950
        %v3967 = vmul.f32 %v3839, %v3951
        %v3968 = vmul.f32 %v3840, %v3952
        %v3970 = vlaneseq
        %v3971 = vshrl.u32 %v3970, 7
        %v3972 = vsub.s32 0, %v3971
        %v3973 = vrot.slane %v3759, %v3972
        %v3975 = vmul.f32 %v3953, %v3973
        %v3976 = vmul.f32 %v3954, %v3973
        %v3977 = vmul.f32 %v3955, %v3973
        %v3978 = vmul.f32 %v3956, %v3973
        %v3979 = vmul.f32 %v3957, %v3973
        %v3980 = vmul.f32 %v3958, %v3973
        %v3981 = vmul.f32 %v3959, %v3973
        %v3982 = vmul.f32 %v3960, %v3973
        %v3983 = vmul.f32 %v3961, %v3973
        %v3984 = vmul.f32 %v3962, %v3973
        %v3985 = vmul.f32 %v3963, %v3973
        %v3986 = vmul.f32 %v3964, %v3973
        %v3987 = vmul.f32 %v3965, %v3973
        %v3988 = vmul.f32 %v3966, %v3973
        %v3989 = vmul.f32 %v3967, %v3973
        %v3990 = vmul.f32 %v3968, %v3973
        %v3992 = vlaneseq
        %v3993 = vshrl.u32 %v3992, 7
        %v3994 = vsub.s32 0, %v3993
        %v3995 = vrot.slane %v3760, %v3994
        %v3997 = vadd.f32 %v3975, %v3995
        %v3998 = vadd.f32 %v3976, %v3995
        %v3999 = vadd.f32 %v3977, %v3995
        %v4000 = vadd.f32 %v3978, %v3995
        %v4001 = vadd.f32 %v3979, %v3995
        %v4002 = vadd.f32 %v3980, %v3995
        %v4003 = vadd.f32 %v3981, %v3995
        %v4004 = vadd.f32 %v3982, %v3995
        %v4005 = vadd.f32 %v3983, %v3995
        %v4006 = vadd.f32 %v3984, %v3995
        %v4007 = vadd.f32 %v3985, %v3995
        %v4008 = vadd.f32 %v3986, %v3995
        %v4009 = vadd.f32 %v3987, %v3995
        %v4010 = vadd.f32 %v3988, %v3995
        %v4011 = vadd.f32 %v3989, %v3995
        %v4012 = vadd.f32 %v3990, %v3995
        %s4013 = scalar_lea.vmem %s19, %s905
        %4014 = vst.msk [vmem:[%s4013] sm:$0xff] %vm925, %v3997
        %4015 = vst.msk [vmem:[%s4013 + $0x8] sm:$0xff] %vm925, %v3998
        %4016 = vst.msk [vmem:[%s4013 + $0x10] sm:$0xff] %vm925, %v3999
        %4017 = vst.msk [vmem:[%s4013 + $0x18] sm:$0xff] %vm925, %v4000
        %4018 = vst.msk [vmem:[%s4013 + $0x20] sm:$0xff] %vm925, %v4001
        %4019 = vst.msk [vmem:[%s4013 + $0x28] sm:$0xff] %vm925, %v4002
        %4020 = vst.msk [vmem:[%s4013 + $0x30] sm:$0xff] %vm925, %v4003
        %4021 = vst.msk [vmem:[%s4013 + $0x38] sm:$0xff] %vm925, %v4004
        %4022 = vst.msk [vmem:[%s4013 + $0x40] sm:$0xff] %vm925, %v4005
        %4023 = vst.msk [vmem:[%s4013 + $0x48] sm:$0xff] %vm925, %v4006
        %4024 = vst.msk [vmem:[%s4013 + $0x50] sm:$0xff] %vm925, %v4007
        %4025 = vst.msk [vmem:[%s4013 + $0x58] sm:$0xff] %vm925, %v4008
        %4026 = vst.msk [vmem:[%s4013 + $0x60] sm:$0xff] %vm925, %v4009
        %4027 = vst.msk [vmem:[%s4013 + $0x68] sm:$0xff] %vm925, %v4010
        %4028 = vst.msk [vmem:[%s4013 + $0x70] sm:$0xff] %vm925, %v4011
        %4029 = vst.msk [vmem:[%s4013 + $0x78] sm:$0xff] %vm925, %v4012
      $region104: #{tpu_custom_call.1} parent=95 // pred_fallthru
        _
      // Predicated region
      $region105: #{tpu_custom_call.1} parent=95 // pred_check
        %p4030 = pneg %p534
      $region106: #{tpu_custom_call.1} parent=95 // pred_check_branch
        %4032 = sbr.rel (%p4030) target = $region108
      $region107: #{tpu_custom_call.1} parent=95 // pred_region
        _
      $region108: #{tpu_custom_call.1} parent=95 // pred_fallthru
        _
      // Predicated region
      $region109: #{tpu_custom_call.1} parent=95 // pred_check
        %p4033 = pneg %p534
      $region110: #{tpu_custom_call.1} parent=95 // pred_check_branch
        %4035 = sbr.rel (%p4033) target = $region112
      $region111: #{tpu_custom_call.1} parent=95 // pred_region
        _
      $region112: #{tpu_custom_call.1} parent=95 // pred_fallthru
        _
    $region96: #{tpu_custom_call.1} parent=5 // pred_fallthru
      _
    %p4036 = scmp.le.s32.totalorder 2, %s25
    // Predicated region
    $region113: #{tpu_custom_call.1} parent=5 // pred_check
      %p4037 = pneg %p4036
    $region114: #{tpu_custom_call.1} parent=5 // pred_check_branch
      %4039 = sbr.rel (%p4037) target = $region116
    $region115: #{tpu_custom_call.1} parent=5 // pred_region
      %s4040 = ssub.s32 %s25, 2
    $region116: #{tpu_custom_call.1} parent=5 // pred_fallthru
      _
  $region6: #{tpu_custom_call.1} parent=0 // loop_footer
    %s29 = sadd.s32 1, %s25
  $region7: #{tpu_custom_call.1} parent=0 // loop_footer_branch
    %24 = sbr.rel target = $region3
  $region8: #{tpu_custom_call.1} parent=0 // loop_exit
    _

</llo_original>
